<compile_context>
chip_gen: v7x
topology: tpu7x:2x2x1
jax: 0.10.0
libtpu: 0.0.40
codegen_flags: <defaults>
</compile_context>

<pallas_src>
import functools

import jax
import jax.numpy as jnp
from jax.experimental import pallas as pl
from jax.experimental.pallas import tpu as pltpu


# ---------------------------------------------------------------------------
# Fused kernel: conv + LeakyReLU + pool + zf/zt proj + slot heads + GRU rollout
# (one grid step == one batch element)
# ---------------------------------------------------------------------------
def _ds2vae_fused_kernel(p_ref, wc_ref, bc_ref, pm_ref, wp_ref, bp_ref,
                         sw_ref, sb_ref, hw_ref, hb_ref, wg_ref, bg_ref,
                         enc_ref, proj_ref, mu_ref, std_ref, rnn_ref, hid_ref,
                         *, slope, d_zf, n_mu, hid, t_in, t_out):
    # ---- Conv3d(k=3x3x3, stride=(1,2,2), pad=1) as matmul over im2col + LeakyReLU(0.2)
    acc = jnp.dot(p_ref[...], wc_ref[...], preferred_element_type=jnp.float32)
    acc = acc + bc_ref[...]
    act = jnp.where(acc >= 0.0, acc, slope * acc)
    enc_ref[...] = act

    # ---- spatial mean pool per timestep via block-diagonal pooling matmul (MXU)
    pooled = jnp.dot(pm_ref[...], act, preferred_element_type=jnp.float32)       # (T, Cout)

    # ---- fused zf / zt per-timestep projections
    proj = jnp.dot(pooled.astype(jnp.bfloat16), wp_ref[...],
                   preferred_element_type=jnp.float32) + bp_ref[...]             # (T, d_zf + H)
    proj_ref[0] = proj

    # ---- slot stand-in (temporal mean) + slot projection + mu / std heads
    zf_mean = jnp.mean(proj[:, :d_zf], axis=0, keepdims=True)                    # (1, d_zf)
    slots = jnp.dot(zf_mean.astype(jnp.bfloat16), sw_ref[...],
                    preferred_element_type=jnp.float32) + sb_ref[...]            # (1, ns*ss)
    heads = jnp.dot(slots.astype(jnp.bfloat16), hw_ref[...],
                    preferred_element_type=jnp.float32) + hb_ref[...]            # (1, 2*ns*ss)
    mu_ref[0] = heads[:, :n_mu]
    # matches PyTorch: slot_post_std_zf = 0.5 * torch.exp(slot_post_logvar_zf)
    std_ref[0] = 0.5 * jnp.exp(heads[:, n_mu:])

    # ---- GRU recurrence (stand-in RIM_GRU): consume t_in inputs, roll out t_out
    z_in = proj[:, d_zf:]                                                        # (T, H)
    h = jnp.zeros((1, hid), jnp.float32)

    def cell(x, h):
        xh = jnp.concatenate([x, h], axis=-1).astype(jnp.bfloat16)               # (1, E+H)
        g = jnp.dot(xh, wg_ref[...], preferred_element_type=jnp.float32) + bg_ref[...]
        r = jax.nn.sigmoid(g[:, :hid])
        z = jax.nn.sigmoid(g[:, hid:2 * hid])
        n = jnp.tanh(g[:, 2 * hid:3 * hid] + r * g[:, 3 * hid:])
        return (1.0 - z) * n + z * h

    for i in range(t_in):                       # static unroll: tiny trip counts
        h = cell(z_in[i:i + 1, :], h)
    outs = []
    for _ in range(t_out):
        h = cell(h, h)                          # emsize == n_hid[0] (asserted in glue)
        outs.append(h)
    rnn_ref[0] = jnp.concatenate(outs, axis=0)                                   # (t_out, H)
    hid_ref[0] = h


def ds2vae_fused(patches, w_conv, b_conv, pool_mat, w_proj, b_proj,
                 slot_w, slot_b, head_w, head_b, w_gru, b_gru,
                 *, batch, t_in, t_out, d_zf, hid, slope=0.2):
    M, Kpad = patches.shape
    Cout = w_conv.shape[1]
    T, tile_m = pool_mat.shape
    Nproj = w_proj.shape[1]
    Ns = slot_w.shape[1]
    Nh = head_w.shape[1]
    EH, G4 = w_gru.shape
    assert M == batch * tile_m and tile_m % 8 == 0 and Kpad % 128 == 0
    assert T == t_in

    flops = (2 * M * Kpad * Cout
             + 2 * batch * T * tile_m * Cout
             + 2 * batch * T * Cout * Nproj
             + 2 * batch * d_zf * Ns
             + 2 * batch * Ns * Nh
             + 2 * batch * (t_in + t_out) * EH * G4)
    transcendentals = batch * ((t_in + t_out) * 3 * hid + Ns)
    bytes_accessed = (patches.size * 2 + w_conv.size * 2 + pool_mat.size * 4
                      + w_proj.size * 2 + slot_w.size * 2 + head_w.size * 2
                      + w_gru.size * 2
                      + M * Cout * 4 + batch * T * Nproj * 4
                      + batch * 2 * Ns * 4 + batch * (t_out + 1) * hid * 4)

    kern = functools.partial(_ds2vae_fused_kernel, slope=slope, d_zf=d_zf,
                             n_mu=Ns, hid=hid, t_in=t_in, t_out=t_out)
    return pl.pallas_call(
        kern,
        out_shape=(
            jax.ShapeDtypeStruct((M, Cout), jnp.float32),          # conv activations
            jax.ShapeDtypeStruct((batch, T, Nproj), jnp.float32),  # zf | zt projections
            jax.ShapeDtypeStruct((batch, 1, Ns), jnp.float32),     # slot mu
            jax.ShapeDtypeStruct((batch, 1, Ns), jnp.float32),     # slot std
            jax.ShapeDtypeStruct((batch, t_out, hid), jnp.float32),# GRU rollout
            jax.ShapeDtypeStruct((batch, 1, hid), jnp.float32),    # final hidden
        ),
        grid=(batch,),
        in_specs=[
            pl.BlockSpec((tile_m, Kpad), lambda i: (i, 0)),
            pl.BlockSpec((Kpad, Cout), lambda i: (0, 0)),
            pl.BlockSpec((1, Cout), lambda i: (0, 0)),
            pl.BlockSpec((T, tile_m), lambda i: (0, 0)),
            pl.BlockSpec((Cout, Nproj), lambda i: (0, 0)),
            pl.BlockSpec((1, Nproj), lambda i: (0, 0)),
            pl.BlockSpec((d_zf, Ns), lambda i: (0, 0)),
            pl.BlockSpec((1, Ns), lambda i: (0, 0)),
            pl.BlockSpec((Ns, Nh), lambda i: (0, 0)),
            pl.BlockSpec((1, Nh), lambda i: (0, 0)),
            pl.BlockSpec((EH, G4), lambda i: (0, 0)),
            pl.BlockSpec((1, G4), lambda i: (0, 0)),
        ],
        out_specs=[
            pl.BlockSpec((tile_m, Cout), lambda i: (i, 0)),
            pl.BlockSpec((1, T, Nproj), lambda i: (i, 0, 0)),
            pl.BlockSpec((1, 1, Ns), lambda i: (i, 0, 0)),
            pl.BlockSpec((1, 1, Ns), lambda i: (i, 0, 0)),
            pl.BlockSpec((1, t_out, hid), lambda i: (i, 0, 0)),
            pl.BlockSpec((1, 1, hid), lambda i: (i, 0, 0)),
        ],
        compiler_params=pltpu.CompilerParams(
            dimension_semantics=("parallel",)),
        cost_estimate=pl.CostEstimate(
            flops=flops, transcendentals=transcendentals,
            bytes_accessed=bytes_accessed),
    )(patches, w_conv, b_conv, pool_mat, w_proj, b_proj,
      slot_w, slot_b, head_w, head_b, w_gru, b_gru)


# ---------------------------------------------------------------------------
# Glue: im2col for Conv3d(k=3x3x3, stride=(1,2,2), pad=(1,1,1))
# ---------------------------------------------------------------------------
# TODO(synk): im2col is still formed glue-side (27 static slices in XLA); at
# larger H/W move patch formation into the kernel via pl.ANY + make_async_copy.
def _im2col_stride2(x_ncdhw):
    B, Cin, T, H, W = x_ncdhw.shape
    To, Ho, Wo = T, H // 2, W // 2
    xp = jnp.pad(x_ncdhw, ((0, 0), (0, 0), (1, 1), (1, 1), (1, 1)))
    slices = []
    for kt in range(3):
        for kh in range(3):
            for kw in range(3):
                slices.append(xp[:, :, kt:kt + To, kh:kh + 2 * Ho:2, kw:kw + 2 * Wo:2])
    patches = jnp.stack(slices, axis=-1)              # (B, Cin, To, Ho, Wo, 27)
    patches = patches.transpose(0, 2, 3, 4, 1, 5)     # (B, To, Ho, Wo, Cin, 27)
    patches = patches.reshape(B * To * Ho * Wo, Cin * 27)
    return patches, (B, To, Ho, Wo)


# ---------------------------------------------------------------------------
# Model: parameter init + forward
# ---------------------------------------------------------------------------
class Opt:
    in_channels = 4
    d_zf = 32
    n_hid = [32]
    num_slots = 4
    num_iterations = 3
    slot_size = 32
    emsize = 32
    phase = "train"
    train_in_seq = 8
    train_out_seq = 8


def init_params(opt, key):
    ks = jax.random.split(key, 16)
    s = 0.05
    p = {}
    channels = 32
    p["conv_w"] = s * jax.random.normal(ks[0], (channels, opt.in_channels, 3, 3, 3), jnp.float32)
    p["conv_b"] = s * jax.random.normal(ks[1], (channels,), jnp.float32)
    p["zf_w"] = s * jax.random.normal(ks[2], (channels, opt.d_zf), jnp.float32)
    p["zf_b"] = s * jax.random.normal(ks[3], (opt.d_zf,), jnp.float32)
    p["zt_w"] = s * jax.random.normal(ks[4], (channels, opt.n_hid[0]), jnp.float32)
    p["zt_b"] = s * jax.random.normal(ks[5], (opt.n_hid[0],), jnp.float32)
    p["slot_w"] = s * jax.random.normal(ks[6], (opt.d_zf, opt.num_slots * opt.slot_size), jnp.float32)
    p["slot_b"] = s * jax.random.normal(ks[7], (opt.num_slots * opt.slot_size,), jnp.float32)
    p["mu_w"] = s * jax.random.normal(ks[8], (opt.slot_size, opt.slot_size), jnp.float32)
    p["mu_b"] = s * jax.random.normal(ks[9], (opt.slot_size,), jnp.float32)
    p["lv_w"] = s * jax.random.normal(ks[10], (opt.slot_size, opt.slot_size), jnp.float32)
    p["lv_b"] = s * jax.random.normal(ks[11], (opt.slot_size,), jnp.float32)
    H = opt.n_hid[0]
    p["gru_wi"] = s * jax.random.normal(ks[12], (opt.emsize, 3 * H), jnp.float32)
    p["gru_wh"] = s * jax.random.normal(ks[13], (H, 3 * H), jnp.float32)
    p["gru_bi"] = s * jax.random.normal(ks[14], (3 * H,), jnp.float32)
    p["gru_bh"] = s * jax.random.normal(ks[15], (3 * H,), jnp.float32)
    return p


def ds2vae_forward(params, inputs, opt):
    # inputs: (b, t, c, h, w), matching the PyTorch forward signature
    b, t, c, h, w = inputs.shape
    assert t == opt.train_in_seq
    H = opt.n_hid[0]
    assert opt.emsize == H, "rollout feeds hidden back as GRU input (emsize must equal n_hid[0])"
    channels = 32

    # --- C3D_encoder: Conv3d(in_ch, 32, (3,3,3), (1,2,2), (1,1,1)) + LeakyReLU(0.2)
    x_ncdhw = inputs.transpose(0, 2, 1, 3, 4)             # permute(0,2,1,3,4)
    patches, (B, To, Ho, Wo) = _im2col_stride2(x_ncdhw)
    M, Kraw = patches.shape
    Kpad = 128                                            # pad K = Cin*27 -> lane aligned
    patches = jnp.pad(patches, ((0, 0), (0, Kpad - Kraw))).astype(jnp.bfloat16)
    w_conv = params["conv_w"].reshape(channels, Kraw).T   # (Cin*27, 32)
    w_conv = jnp.pad(w_conv, ((0, Kpad - Kraw), (0, 0))).astype(jnp.bfloat16)
    b_conv = params["conv_b"].reshape(1, channels).astype(jnp.float32)

    # fused zf/zt projections (stand-ins for undefined C3DEncoder static/dynamic)
    # TODO(synk): C3DEncoder is undefined upstream; stand-in = spatial mean pool
    #             + per-timestep linear, fused into the conv kernel epilogue.
    w_proj = jnp.concatenate([params["zf_w"], params["zt_w"]], axis=1).astype(jnp.bfloat16)
    b_proj = jnp.concatenate([params["zf_b"], params["zt_b"]]).reshape(1, -1).astype(jnp.float32)

    # block-diagonal mean-pool matrix; one grid step owns one batch's rows
    group = Ho * Wo
    tile_m = To * group
    assert M == B * tile_m and tile_m % 8 == 0
    pool_mat = jnp.kron(jnp.eye(To, dtype=jnp.float32),
                        jnp.ones((1, group), jnp.float32)) / float(group)    # (To, tile_m)

    # --- slot_zf + mu/std heads (block-diag kron head weights => no in-kernel reshape)
    # TODO(synk): SlotAttentionAutoEncoder is undefined upstream; stand-in =
    #             temporal mean + linear to (num_slots, slot_size).
    ns, ss = opt.num_slots, opt.slot_size
    slot_w = params["slot_w"].astype(jnp.bfloat16)        # (d_zf, ns*ss)
    slot_b = params["slot_b"].reshape(1, ns * ss).astype(jnp.float32)
    eye_ns = jnp.eye(ns, dtype=jnp.float32)
    head_w = jnp.concatenate([jnp.kron(eye_ns, params["mu_w"]),
                              jnp.kron(eye_ns, params["lv_w"])], axis=1).astype(jnp.bfloat16)
    head_b = jnp.concatenate([jnp.tile(params["mu_b"], ns),
                              jnp.tile(params["lv_b"], ns)]).reshape(1, -1).astype(jnp.float32)

    # --- dynamic_net (RIM_GRU stand-in): single GRU cell; weights pre-packed so
    #     each step is ONE (1, E+H) @ (E+H, 4H) matmul with exact GRUCell math.
    # TODO(synk): RIM_GRU is undefined upstream; stand-in = single GRU cell that
    #             consumes the in_seq inputs then rolls out out_seq prediction steps.
    wi, wh = params["gru_wi"], params["gru_wh"]
    bi, bh = params["gru_bi"], params["gru_bh"]
    E = opt.emsize
    w_top = jnp.concatenate([wi[:, :H], wi[:, H:2 * H], wi[:, 2 * H:],
                             jnp.zeros((E, H), jnp.float32)], axis=1)
    w_bot = jnp.concatenate([wh[:, :H], wh[:, H:2 * H],
                             jnp.zeros((H, H), jnp.float32), wh[:, 2 * H:]], axis=1)
    w_gru = jnp.concatenate([w_top, w_bot], axis=0).astype(jnp.bfloat16)     # (E+H, 4H)
    b_gru = jnp.concatenate([bi[:H] + bh[:H], bi[H:2 * H] + bh[H:2 * H],
                             bi[2 * H:], bh[2 * H:]]).reshape(1, 4 * H).astype(jnp.float32)

    enc_flat, proj, mu, std, rnn, hid = ds2vae_fused(
        patches, w_conv, b_conv, pool_mat, w_proj, b_proj,
        slot_w, slot_b, head_w, head_b, w_gru, b_gru,
        batch=B, t_in=To, t_out=opt.train_out_seq, d_zf=opt.d_zf, hid=H)

    encoded = enc_flat.reshape(B, To, Ho, Wo, channels).transpose(0, 4, 1, 2, 3)
    zf_enc = proj[:, :, :opt.d_zf]                        # (b, t, d_zf)
    z0_enc = proj[:, :, opt.d_zf:]                        # (b, t, n_hid)
    slot_post_mu_zf = mu.reshape(b, ns, ss)
    slot_post_std_zf = std.reshape(b, ns, ss)
    output = rnn.transpose(1, 0, 2)                       # (out_seq, b, n_hid)
    hidden = hid.reshape(b, H)

    # Original forward() returns None; return intermediates so caller can sync.
    return {
        "slot_post_mu_zf": slot_post_mu_zf,
        "slot_post_std_zf": slot_post_std_zf,
        "zf_enc": zf_enc,
        "z0_enc": z0_enc,
        "rnn_output": output,
        "rnn_hidden": hidden,
        "encoded_inputs": encoded,
    }


if __name__ == "__main__":
    opt = Opt()
    key = jax.random.PRNGKey(0)
    k_param, k_x = jax.random.split(key)

    params = init_params(opt, k_param)

    B, T, C, H, W = 2, opt.train_in_seq, opt.in_channels, 16, 16
    x = jax.random.normal(k_x, (B, T, C, H, W), jnp.float32)

    fwd = jax.jit(lambda p, xx: ds2vae_forward(p, xx, opt))
    outs = fwd(params, x)
    jax.block_until_ready(outs)

    # sanity on shapes
    assert outs["encoded_inputs"].shape == (B, 32, T, H // 2, W // 2)
    assert outs["slot_post_mu_zf"].shape == (B, opt.num_slots, opt.slot_size)
    assert outs["slot_post_std_zf"].shape == (B, opt.num_slots, opt.slot_size)
    assert outs["zf_enc"].shape == (B, T, opt.d_zf)
    assert outs["z0_enc"].shape == (B, T, opt.n_hid[0])
    assert outs["rnn_output"].shape == (opt.train_out_seq, B, opt.n_hid[0])
    assert outs["rnn_hidden"].shape == (B, opt.n_hid[0])

    print("KERNEL_OK")
</pallas_src>

<mosaic_0001>
module attributes {stable_mosaic.version = 11 : i64} {
  func.func @_ds2vae_fused_kernel(%arg0: i32, %arg1: memref<512x128xbf16, #tpu.memory_space<vmem>>, %arg2: memref<128x32xbf16, #tpu.memory_space<vmem>>, %arg3: memref<1x32xf32, #tpu.memory_space<vmem>>, %arg4: memref<8x512xf32, #tpu.memory_space<vmem>>, %arg5: memref<32x64xbf16, #tpu.memory_space<vmem>>, %arg6: memref<1x64xf32, #tpu.memory_space<vmem>>, %arg7: memref<32x128xbf16, #tpu.memory_space<vmem>>, %arg8: memref<1x128xf32, #tpu.memory_space<vmem>>, %arg9: memref<128x256xbf16, #tpu.memory_space<vmem>>, %arg10: memref<1x256xf32, #tpu.memory_space<vmem>>, %arg11: memref<64x128xbf16, #tpu.memory_space<vmem>>, %arg12: memref<1x128xf32, #tpu.memory_space<vmem>>, %arg13: memref<512x32xf32, #tpu.memory_space<vmem>>, %arg14: memref<1x8x64xf32, #tpu.memory_space<vmem>>, %arg15: memref<1x1x128xf32, #tpu.memory_space<vmem>>, %arg16: memref<1x1x128xf32, #tpu.memory_space<vmem>>, %arg17: memref<1x8x32xf32, #tpu.memory_space<vmem>>, %arg18: memref<1x1x32xf32, #tpu.memory_space<vmem>>) attributes {dimension_semantics = [#tpu.dimension_semantics<parallel>], iteration_bounds = array<i64: 2>, scalar_prefetch = 0 : i64, scratch_operands = 0 : i64, tpu.core_type = #tpu.core_type<tc>, window_params = [{transform_indices = @transform_0, window_bounds = array<i64: 512, 128>}, {pipeline_mode = #tpu.pipeline_mode<synchronous>, transform_indices = @transform_1, window_bounds = array<i64: 128, 32>}, {pipeline_mode = #tpu.pipeline_mode<synchronous>, transform_indices = @transform_2, window_bounds = array<i64: 1, 32>}, {pipeline_mode = #tpu.pipeline_mode<synchronous>, transform_indices = @transform_3, window_bounds = array<i64: 8, 512>}, {pipeline_mode = #tpu.pipeline_mode<synchronous>, transform_indices = @transform_4, window_bounds = array<i64: 32, 64>}, {pipeline_mode = #tpu.pipeline_mode<synchronous>, transform_indices = @transform_5, window_bounds = array<i64: 1, 64>}, {pipeline_mode = #tpu.pipeline_mode<synchronous>, transform_indices = @transform_6, window_bounds = array<i64: 32, 128>}, {pipeline_mode = #tpu.pipeline_mode<synchronous>, transform_indices = @transform_7, window_bounds = array<i64: 1, 128>}, {pipeline_mode = #tpu.pipeline_mode<synchronous>, transform_indices = @transform_8, window_bounds = array<i64: 128, 256>}, {pipeline_mode = #tpu.pipeline_mode<synchronous>, transform_indices = @transform_9, window_bounds = array<i64: 1, 256>}, {pipeline_mode = #tpu.pipeline_mode<synchronous>, transform_indices = @transform_10, window_bounds = array<i64: 64, 128>}, {pipeline_mode = #tpu.pipeline_mode<synchronous>, transform_indices = @transform_11, window_bounds = array<i64: 1, 128>}, {transform_indices = @transform_12, window_bounds = array<i64: 512, 32>}, {transform_indices = @transform_13, window_bounds = array<i64: 1, 8, 64>}, {transform_indices = @transform_14, window_bounds = array<i64: 1, 1, 128>}, {transform_indices = @transform_15, window_bounds = array<i64: 1, 1, 128>}, {transform_indices = @transform_16, window_bounds = array<i64: 1, 8, 32>}, {transform_indices = @transform_17, window_bounds = array<i64: 1, 1, 32>}]} {
    %c0 = arith.constant 0 : index
    %c0_0 = arith.constant 0 : index
    %0 = vector.load %arg1[%c0, %c0_0] : memref<512x128xbf16, #tpu.memory_space<vmem>>, vector<512x128xbf16>
    %c0_1 = arith.constant 0 : index
    %c0_2 = arith.constant 0 : index
    %1 = vector.load %arg2[%c0_1, %c0_2] : memref<128x32xbf16, #tpu.memory_space<vmem>>, vector<128x32xbf16>
    %cst = arith.constant dense<0.000000e+00> : vector<512x32xf32>
    %2 = tpu.matmul %0, %1, %cst {dimension_numbers = #tpu.dot_dimension_numbers<[1], [0], [0], [1], [0, 0, 1, 1], [], []>} : vector<512x128xbf16>, vector<128x32xbf16>, vector<512x32xf32> -> vector<512x32xf32>
    %c0_3 = arith.constant 0 : index
    %c0_4 = arith.constant 0 : index
    %3 = vector.load %arg3[%c0_3, %c0_4] : memref<1x32xf32, #tpu.memory_space<vmem>>, vector<1x32xf32>
    %4 = vector.broadcast %3 : vector<1x32xf32> to vector<512x32xf32>
    %5 = arith.addf %2, %4 : vector<512x32xf32>
    %cst_5 = arith.constant 0.000000e+00 : f32
    %6 = vector.broadcast %cst_5 : f32 to vector<512x32xf32>
    %7 = arith.cmpf oge, %5, %6 : vector<512x32xf32>
    %cst_6 = arith.constant 2.000000e-01 : f32
    %8 = vector.broadcast %cst_6 : f32 to vector<512x32xf32>
    %9 = arith.mulf %8, %5 : vector<512x32xf32>
    %10 = arith.select %7, %5, %9 : vector<512x32xi1>, vector<512x32xf32>
    %c0_7 = arith.constant 0 : index
    %c0_8 = arith.constant 0 : index
    %11 = vector.load %arg13[%c0_7, %c0_8] : memref<512x32xf32, #tpu.memory_space<vmem>>, vector<512x32xf32>
    tpu.vector_store %arg13[%c0_7, %c0_8], %10 {strides = array<i32>} : memref<512x32xf32, #tpu.memory_space<vmem>>, vector<512x32xf32>,
    %c0_9 = arith.constant 0 : index
    %c0_10 = arith.constant 0 : index
    %12 = vector.load %arg4[%c0_9, %c0_10] : memref<8x512xf32, #tpu.memory_space<vmem>>, vector<8x512xf32>
    %cst_11 = arith.constant dense<0.000000e+00> : vector<8x32xf32>
    %13 = tpu.matmul %12, %10, %cst_11 {dimension_numbers = #tpu.dot_dimension_numbers<[1], [0], [0], [1], [0, 0, 1, 1], [], []>} : vector<8x512xf32>, vector<512x32xf32>, vector<8x32xf32> -> vector<8x32xf32>
    %14 = arith.truncf %13 : vector<8x32xf32> to vector<8x32xbf16>
    %c0_12 = arith.constant 0 : index
    %c0_13 = arith.constant 0 : index
    %15 = vector.load %arg5[%c0_12, %c0_13] : memref<32x64xbf16, #tpu.memory_space<vmem>>, vector<32x64xbf16>
    %cst_14 = arith.constant dense<0.000000e+00> : vector<8x64xf32>
    %16 = tpu.matmul %14, %15, %cst_14 {dimension_numbers = #tpu.dot_dimension_numbers<[1], [0], [0], [1], [0, 0, 1, 1], [], []>} : vector<8x32xbf16>, vector<32x64xbf16>, vector<8x64xf32> -> vector<8x64xf32>
    %c0_15 = arith.constant 0 : index
    %c0_16 = arith.constant 0 : index
    %17 = vector.load %arg6[%c0_15, %c0_16] : memref<1x64xf32, #tpu.memory_space<vmem>>, vector<1x64xf32>
    %18 = vector.broadcast %17 : vector<1x64xf32> to vector<8x64xf32>
    %19 = arith.addf %16, %18 : vector<8x64xf32>
    %c0_17 = arith.constant 0 : index
    %c0_18 = arith.constant 0 : index
    %c0_19 = arith.constant 0 : index
    %20 = vector.load %arg14[%c0_17, %c0_18, %c0_19] : memref<1x8x64xf32, #tpu.memory_space<vmem>>, vector<1x8x64xf32>
    %21 = vector.shape_cast %20 : vector<1x8x64xf32> to vector<8x64xf32>
    %22 = vector.shape_cast %19 : vector<8x64xf32> to vector<1x8x64xf32>
    tpu.vector_store %arg14[%c0_17, %c0_18, %c0_19], %22 {strides = array<i32>} : memref<1x8x64xf32, #tpu.memory_space<vmem>>, vector<1x8x64xf32>,
    %23 = vector.extract_strided_slice %19 {offsets = [0, 0], sizes = [8, 32], strides = [1, 1]} : vector<8x64xf32> to vector<8x32xf32>
    %cst_20 = arith.constant dense<0.000000e+00> : vector<32xf32>
    %24 = vector.multi_reduction <add>, %23, %cst_20 [0] : vector<8x32xf32> to vector<32xf32>
    %25 = vector.shape_cast %24 : vector<32xf32> to vector<1x32xf32>
    %cst_21 = arith.constant 8.000000e+00 : f32
    %26 = vector.broadcast %cst_21 : f32 to vector<1x32xf32>
    %27 = arith.divf %25, %26 : vector<1x32xf32>
    %28 = arith.truncf %27 : vector<1x32xf32> to vector<1x32xbf16>
    %c0_22 = arith.constant 0 : index
    %c0_23 = arith.constant 0 : index
    %29 = vector.load %arg7[%c0_22, %c0_23] : memref<32x128xbf16, #tpu.memory_space<vmem>>, vector<32x128xbf16>
    %cst_24 = arith.constant dense<0.000000e+00> : vector<1x128xf32>
    %30 = tpu.matmul %28, %29, %cst_24 {dimension_numbers = #tpu.dot_dimension_numbers<[1], [0], [0], [1], [0, 0, 1, 1], [], []>} : vector<1x32xbf16>, vector<32x128xbf16>, vector<1x128xf32> -> vector<1x128xf32>
    %c0_25 = arith.constant 0 : index
    %c0_26 = arith.constant 0 : index
    %31 = vector.load %arg8[%c0_25, %c0_26] : memref<1x128xf32, #tpu.memory_space<vmem>>, vector<1x128xf32>
    %32 = arith.addf %30, %31 : vector<1x128xf32>
    %33 = arith.truncf %32 : vector<1x128xf32> to vector<1x128xbf16>
    %c0_27 = arith.constant 0 : index
    %c0_28 = arith.constant 0 : index
    %34 = vector.load %arg9[%c0_27, %c0_28] : memref<128x256xbf16, #tpu.memory_space<vmem>>, vector<128x256xbf16>
    %cst_29 = arith.constant dense<0.000000e+00> : vector<1x256xf32>
    %35 = tpu.matmul %33, %34, %cst_29 {dimension_numbers = #tpu.dot_dimension_numbers<[1], [0], [0], [1], [0, 0, 1, 1], [], []>} : vector<1x128xbf16>, vector<128x256xbf16>, vector<1x256xf32> -> vector<1x256xf32>
    %c0_30 = arith.constant 0 : index
    %c0_31 = arith.constant 0 : index
    %36 = vector.load %arg10[%c0_30, %c0_31] : memref<1x256xf32, #tpu.memory_space<vmem>>, vector<1x256xf32>
    %37 = arith.addf %35, %36 : vector<1x256xf32>
    %38 = vector.extract_strided_slice %37 {offsets = [0, 0], sizes = [1, 128], strides = [1, 1]} : vector<1x256xf32> to vector<1x128xf32>
    %c0_32 = arith.constant 0 : index
    %c0_33 = arith.constant 0 : index
    %c0_34 = arith.constant 0 : index
    %39 = vector.load %arg15[%c0_32, %c0_33, %c0_34] : memref<1x1x128xf32, #tpu.memory_space<vmem>>, vector<1x1x128xf32>
    %40 = vector.shape_cast %39 : vector<1x1x128xf32> to vector<1x128xf32>
    %41 = vector.shape_cast %38 : vector<1x128xf32> to vector<1x1x128xf32>
    tpu.vector_store %arg15[%c0_32, %c0_33, %c0_34], %41 {strides = array<i32>} : memref<1x1x128xf32, #tpu.memory_space<vmem>>, vector<1x1x128xf32>,
    %42 = vector.extract_strided_slice %37 {offsets = [0, 128], sizes = [1, 128], strides = [1, 1]} : vector<1x256xf32> to vector<1x128xf32>
    %43 = math.exp %42 : vector<1x128xf32>
    %cst_35 = arith.constant 5.000000e-01 : f32
    %44 = vector.broadcast %cst_35 : f32 to vector<1x128xf32>
    %45 = arith.mulf %44, %43 : vector<1x128xf32>
    %c0_36 = arith.constant 0 : index
    %c0_37 = arith.constant 0 : index
    %c0_38 = arith.constant 0 : index
    %46 = vector.load %arg16[%c0_36, %c0_37, %c0_38] : memref<1x1x128xf32, #tpu.memory_space<vmem>>, vector<1x1x128xf32>
    %47 = vector.shape_cast %46 : vector<1x1x128xf32> to vector<1x128xf32>
    %48 = vector.shape_cast %45 : vector<1x128xf32> to vector<1x1x128xf32>
    tpu.vector_store %arg16[%c0_36, %c0_37, %c0_38], %48 {strides = array<i32>} : memref<1x1x128xf32, #tpu.memory_space<vmem>>, vector<1x1x128xf32>,
    %49 = vector.extract_strided_slice %19 {offsets = [0, 32], sizes = [8, 32], strides = [1, 1]} : vector<8x64xf32> to vector<8x32xf32>
    %cst_39 = arith.constant 0.000000e+00 : f32
    %50 = vector.broadcast %cst_39 : f32 to vector<1x32xf32>
    %51 = vector.extract_strided_slice %49 {offsets = [0, 0], sizes = [1, 32], strides = [1, 1]} : vector<8x32xf32> to vector<1x32xf32>
    %52 = tpu.concatenate %51, %50 in 1 : vector<1x32xf32>, vector<1x32xf32> -> vector<1x64xf32>
    %53 = arith.truncf %52 : vector<1x64xf32> to vector<1x64xbf16>
    %c0_40 = arith.constant 0 : index
    %c0_41 = arith.constant 0 : index
    %54 = vector.load %arg11[%c0_40, %c0_41] : memref<64x128xbf16, #tpu.memory_space<vmem>>, vector<64x128xbf16>
    %cst_42 = arith.constant dense<0.000000e+00> : vector<1x128xf32>
    %55 = tpu.matmul %53, %54, %cst_42 {dimension_numbers = #tpu.dot_dimension_numbers<[1], [0], [0], [1], [0, 0, 1, 1], [], []>} : vector<1x64xbf16>, vector<64x128xbf16>, vector<1x128xf32> -> vector<1x128xf32>
    %c0_43 = arith.constant 0 : index
    %c0_44 = arith.constant 0 : index
    %56 = vector.load %arg12[%c0_43, %c0_44] : memref<1x128xf32, #tpu.memory_space<vmem>>, vector<1x128xf32>
    %57 = arith.addf %55, %56 : vector<1x128xf32>
    %58 = vector.extract_strided_slice %57 {offsets = [0, 0], sizes = [1, 32], strides = [1, 1]} : vector<1x128xf32> to vector<1x32xf32>
    %59 = arith.negf %58 : vector<1x32xf32>
    %60 = math.exp %59 : vector<1x32xf32>
    %cst_45 = arith.constant 1.000000e+00 : f32
    %61 = vector.broadcast %cst_45 : f32 to vector<1x32xf32>
    %62 = arith.addf %61, %60 : vector<1x32xf32>
    %63 = arith.divf %61, %62 : vector<1x32xf32>
    %64 = vector.extract_strided_slice %57 {offsets = [0, 32], sizes = [1, 32], strides = [1, 1]} : vector<1x128xf32> to vector<1x32xf32>
    %65 = arith.negf %64 : vector<1x32xf32>
    %66 = math.exp %65 : vector<1x32xf32>
    %cst_46 = arith.constant 1.000000e+00 : f32
    %67 = vector.broadcast %cst_46 : f32 to vector<1x32xf32>
    %68 = arith.addf %67, %66 : vector<1x32xf32>
    %69 = arith.divf %67, %68 : vector<1x32xf32>
    %70 = vector.extract_strided_slice %57 {offsets = [0, 64], sizes = [1, 32], strides = [1, 1]} : vector<1x128xf32> to vector<1x32xf32>
    %71 = vector.extract_strided_slice %57 {offsets = [0, 96], sizes = [1, 32], strides = [1, 1]} : vector<1x128xf32> to vector<1x32xf32>
    %72 = arith.mulf %63, %71 : vector<1x32xf32>
    %73 = arith.addf %70, %72 : vector<1x32xf32>
    %74 = math.tanh %73 : vector<1x32xf32>
    %cst_47 = arith.constant 1.000000e+00 : f32
    %75 = vector.broadcast %cst_47 : f32 to vector<1x32xf32>
    %76 = arith.subf %75, %69 : vector<1x32xf32>
    %77 = arith.mulf %76, %74 : vector<1x32xf32>
    %78 = arith.mulf %69, %50 : vector<1x32xf32>
    %79 = arith.addf %77, %78 : vector<1x32xf32>
    %80 = vector.extract_strided_slice %49 {offsets = [1, 0], sizes = [1, 32], strides = [1, 1]} : vector<8x32xf32> to vector<1x32xf32>
    %81 = tpu.concatenate %80, %79 in 1 : vector<1x32xf32>, vector<1x32xf32> -> vector<1x64xf32>
    %82 = arith.truncf %81 : vector<1x64xf32> to vector<1x64xbf16>
    %c0_48 = arith.constant 0 : index
    %c0_49 = arith.constant 0 : index
    %83 = vector.load %arg11[%c0_48, %c0_49] : memref<64x128xbf16, #tpu.memory_space<vmem>>, vector<64x128xbf16>
    %cst_50 = arith.constant dense<0.000000e+00> : vector<1x128xf32>
    %84 = tpu.matmul %82, %83, %cst_50 {dimension_numbers = #tpu.dot_dimension_numbers<[1], [0], [0], [1], [0, 0, 1, 1], [], []>} : vector<1x64xbf16>, vector<64x128xbf16>, vector<1x128xf32> -> vector<1x128xf32>
    %c0_51 = arith.constant 0 : index
    %c0_52 = arith.constant 0 : index
    %85 = vector.load %arg12[%c0_51, %c0_52] : memref<1x128xf32, #tpu.memory_space<vmem>>, vector<1x128xf32>
    %86 = arith.addf %84, %85 : vector<1x128xf32>
    %87 = vector.extract_strided_slice %86 {offsets = [0, 0], sizes = [1, 32], strides = [1, 1]} : vector<1x128xf32> to vector<1x32xf32>
    %88 = arith.negf %87 : vector<1x32xf32>
    %89 = math.exp %88 : vector<1x32xf32>
    %cst_53 = arith.constant 1.000000e+00 : f32
    %90 = vector.broadcast %cst_53 : f32 to vector<1x32xf32>
    %91 = arith.addf %90, %89 : vector<1x32xf32>
    %92 = arith.divf %90, %91 : vector<1x32xf32>
    %93 = vector.extract_strided_slice %86 {offsets = [0, 32], sizes = [1, 32], strides = [1, 1]} : vector<1x128xf32> to vector<1x32xf32>
    %94 = arith.negf %93 : vector<1x32xf32>
    %95 = math.exp %94 : vector<1x32xf32>
    %cst_54 = arith.constant 1.000000e+00 : f32
    %96 = vector.broadcast %cst_54 : f32 to vector<1x32xf32>
    %97 = arith.addf %96, %95 : vector<1x32xf32>
    %98 = arith.divf %96, %97 : vector<1x32xf32>
    %99 = vector.extract_strided_slice %86 {offsets = [0, 64], sizes = [1, 32], strides = [1, 1]} : vector<1x128xf32> to vector<1x32xf32>
    %100 = vector.extract_strided_slice %86 {offsets = [0, 96], sizes = [1, 32], strides = [1, 1]} : vector<1x128xf32> to vector<1x32xf32>
    %101 = arith.mulf %92, %100 : vector<1x32xf32>
    %102 = arith.addf %99, %101 : vector<1x32xf32>
    %103 = math.tanh %102 : vector<1x32xf32>
    %cst_55 = arith.constant 1.000000e+00 : f32
    %104 = vector.broadcast %cst_55 : f32 to vector<1x32xf32>
    %105 = arith.subf %104, %98 : vector<1x32xf32>
    %106 = arith.mulf %105, %103 : vector<1x32xf32>
    %107 = arith.mulf %98, %79 : vector<1x32xf32>
    %108 = arith.addf %106, %107 : vector<1x32xf32>
    %109 = vector.extract_strided_slice %49 {offsets = [2, 0], sizes = [1, 32], strides = [1, 1]} : vector<8x32xf32> to vector<1x32xf32>
    %110 = tpu.concatenate %109, %108 in 1 : vector<1x32xf32>, vector<1x32xf32> -> vector<1x64xf32>
    %111 = arith.truncf %110 : vector<1x64xf32> to vector<1x64xbf16>
    %c0_56 = arith.constant 0 : index
    %c0_57 = arith.constant 0 : index
    %112 = vector.load %arg11[%c0_56, %c0_57] : memref<64x128xbf16, #tpu.memory_space<vmem>>, vector<64x128xbf16>
    %cst_58 = arith.constant dense<0.000000e+00> : vector<1x128xf32>
    %113 = tpu.matmul %111, %112, %cst_58 {dimension_numbers = #tpu.dot_dimension_numbers<[1], [0], [0], [1], [0, 0, 1, 1], [], []>} : vector<1x64xbf16>, vector<64x128xbf16>, vector<1x128xf32> -> vector<1x128xf32>
    %c0_59 = arith.constant 0 : index
    %c0_60 = arith.constant 0 : index
    %114 = vector.load %arg12[%c0_59, %c0_60] : memref<1x128xf32, #tpu.memory_space<vmem>>, vector<1x128xf32>
    %115 = arith.addf %113, %114 : vector<1x128xf32>
    %116 = vector.extract_strided_slice %115 {offsets = [0, 0], sizes = [1, 32], strides = [1, 1]} : vector<1x128xf32> to vector<1x32xf32>
    %117 = arith.negf %116 : vector<1x32xf32>
    %118 = math.exp %117 : vector<1x32xf32>
    %cst_61 = arith.constant 1.000000e+00 : f32
    %119 = vector.broadcast %cst_61 : f32 to vector<1x32xf32>
    %120 = arith.addf %119, %118 : vector<1x32xf32>
    %121 = arith.divf %119, %120 : vector<1x32xf32>
    %122 = vector.extract_strided_slice %115 {offsets = [0, 32], sizes = [1, 32], strides = [1, 1]} : vector<1x128xf32> to vector<1x32xf32>
    %123 = arith.negf %122 : vector<1x32xf32>
    %124 = math.exp %123 : vector<1x32xf32>
    %cst_62 = arith.constant 1.000000e+00 : f32
    %125 = vector.broadcast %cst_62 : f32 to vector<1x32xf32>
    %126 = arith.addf %125, %124 : vector<1x32xf32>
    %127 = arith.divf %125, %126 : vector<1x32xf32>
    %128 = vector.extract_strided_slice %115 {offsets = [0, 64], sizes = [1, 32], strides = [1, 1]} : vector<1x128xf32> to vector<1x32xf32>
    %129 = vector.extract_strided_slice %115 {offsets = [0, 96], sizes = [1, 32], strides = [1, 1]} : vector<1x128xf32> to vector<1x32xf32>
    %130 = arith.mulf %121, %129 : vector<1x32xf32>
    %131 = arith.addf %128, %130 : vector<1x32xf32>
    %132 = math.tanh %131 : vector<1x32xf32>
    %cst_63 = arith.constant 1.000000e+00 : f32
    %133 = vector.broadcast %cst_63 : f32 to vector<1x32xf32>
    %134 = arith.subf %133, %127 : vector<1x32xf32>
    %135 = arith.mulf %134, %132 : vector<1x32xf32>
    %136 = arith.mulf %127, %108 : vector<1x32xf32>
    %137 = arith.addf %135, %136 : vector<1x32xf32>
    %138 = vector.extract_strided_slice %49 {offsets = [3, 0], sizes = [1, 32], strides = [1, 1]} : vector<8x32xf32> to vector<1x32xf32>
    %139 = tpu.concatenate %138, %137 in 1 : vector<1x32xf32>, vector<1x32xf32> -> vector<1x64xf32>
    %140 = arith.truncf %139 : vector<1x64xf32> to vector<1x64xbf16>
    %c0_64 = arith.constant 0 : index
    %c0_65 = arith.constant 0 : index
    %141 = vector.load %arg11[%c0_64, %c0_65] : memref<64x128xbf16, #tpu.memory_space<vmem>>, vector<64x128xbf16>
    %cst_66 = arith.constant dense<0.000000e+00> : vector<1x128xf32>
    %142 = tpu.matmul %140, %141, %cst_66 {dimension_numbers = #tpu.dot_dimension_numbers<[1], [0], [0], [1], [0, 0, 1, 1], [], []>} : vector<1x64xbf16>, vector<64x128xbf16>, vector<1x128xf32> -> vector<1x128xf32>
    %c0_67 = arith.constant 0 : index
    %c0_68 = arith.constant 0 : index
    %143 = vector.load %arg12[%c0_67, %c0_68] : memref<1x128xf32, #tpu.memory_space<vmem>>, vector<1x128xf32>
    %144 = arith.addf %142, %143 : vector<1x128xf32>
    %145 = vector.extract_strided_slice %144 {offsets = [0, 0], sizes = [1, 32], strides = [1, 1]} : vector<1x128xf32> to vector<1x32xf32>
    %146 = arith.negf %145 : vector<1x32xf32>
    %147 = math.exp %146 : vector<1x32xf32>
    %cst_69 = arith.constant 1.000000e+00 : f32
    %148 = vector.broadcast %cst_69 : f32 to vector<1x32xf32>
    %149 = arith.addf %148, %147 : vector<1x32xf32>
    %150 = arith.divf %148, %149 : vector<1x32xf32>
    %151 = vector.extract_strided_slice %144 {offsets = [0, 32], sizes = [1, 32], strides = [1, 1]} : vector<1x128xf32> to vector<1x32xf32>
    %152 = arith.negf %151 : vector<1x32xf32>
    %153 = math.exp %152 : vector<1x32xf32>
    %cst_70 = arith.constant 1.000000e+00 : f32
    %154 = vector.broadcast %cst_70 : f32 to vector<1x32xf32>
    %155 = arith.addf %154, %153 : vector<1x32xf32>
    %156 = arith.divf %154, %155 : vector<1x32xf32>
    %157 = vector.extract_strided_slice %144 {offsets = [0, 64], sizes = [1, 32], strides = [1, 1]} : vector<1x128xf32> to vector<1x32xf32>
    %158 = vector.extract_strided_slice %144 {offsets = [0, 96], sizes = [1, 32], strides = [1, 1]} : vector<1x128xf32> to vector<1x32xf32>
    %159 = arith.mulf %150, %158 : vector<1x32xf32>
    %160 = arith.addf %157, %159 : vector<1x32xf32>
    %161 = math.tanh %160 : vector<1x32xf32>
    %cst_71 = arith.constant 1.000000e+00 : f32
    %162 = vector.broadcast %cst_71 : f32 to vector<1x32xf32>
    %163 = arith.subf %162, %156 : vector<1x32xf32>
    %164 = arith.mulf %163, %161 : vector<1x32xf32>
    %165 = arith.mulf %156, %137 : vector<1x32xf32>
    %166 = arith.addf %164, %165 : vector<1x32xf32>
    %167 = vector.extract_strided_slice %49 {offsets = [4, 0], sizes = [1, 32], strides = [1, 1]} : vector<8x32xf32> to vector<1x32xf32>
    %168 = tpu.concatenate %167, %166 in 1 : vector<1x32xf32>, vector<1x32xf32> -> vector<1x64xf32>
    %169 = arith.truncf %168 : vector<1x64xf32> to vector<1x64xbf16>
    %c0_72 = arith.constant 0 : index
    %c0_73 = arith.constant 0 : index
    %170 = vector.load %arg11[%c0_72, %c0_73] : memref<64x128xbf16, #tpu.memory_space<vmem>>, vector<64x128xbf16>
    %cst_74 = arith.constant dense<0.000000e+00> : vector<1x128xf32>
    %171 = tpu.matmul %169, %170, %cst_74 {dimension_numbers = #tpu.dot_dimension_numbers<[1], [0], [0], [1], [0, 0, 1, 1], [], []>} : vector<1x64xbf16>, vector<64x128xbf16>, vector<1x128xf32> -> vector<1x128xf32>
    %c0_75 = arith.constant 0 : index
    %c0_76 = arith.constant 0 : index
    %172 = vector.load %arg12[%c0_75, %c0_76] : memref<1x128xf32, #tpu.memory_space<vmem>>, vector<1x128xf32>
    %173 = arith.addf %171, %172 : vector<1x128xf32>
    %174 = vector.extract_strided_slice %173 {offsets = [0, 0], sizes = [1, 32], strides = [1, 1]} : vector<1x128xf32> to vector<1x32xf32>
    %175 = arith.negf %174 : vector<1x32xf32>
    %176 = math.exp %175 : vector<1x32xf32>
    %cst_77 = arith.constant 1.000000e+00 : f32
    %177 = vector.broadcast %cst_77 : f32 to vector<1x32xf32>
    %178 = arith.addf %177, %176 : vector<1x32xf32>
    %179 = arith.divf %177, %178 : vector<1x32xf32>
    %180 = vector.extract_strided_slice %173 {offsets = [0, 32], sizes = [1, 32], strides = [1, 1]} : vector<1x128xf32> to vector<1x32xf32>
    %181 = arith.negf %180 : vector<1x32xf32>
    %182 = math.exp %181 : vector<1x32xf32>
    %cst_78 = arith.constant 1.000000e+00 : f32
    %183 = vector.broadcast %cst_78 : f32 to vector<1x32xf32>
    %184 = arith.addf %183, %182 : vector<1x32xf32>
    %185 = arith.divf %183, %184 : vector<1x32xf32>
    %186 = vector.extract_strided_slice %173 {offsets = [0, 64], sizes = [1, 32], strides = [1, 1]} : vector<1x128xf32> to vector<1x32xf32>
    %187 = vector.extract_strided_slice %173 {offsets = [0, 96], sizes = [1, 32], strides = [1, 1]} : vector<1x128xf32> to vector<1x32xf32>
    %188 = arith.mulf %179, %187 : vector<1x32xf32>
    %189 = arith.addf %186, %188 : vector<1x32xf32>
    %190 = math.tanh %189 : vector<1x32xf32>
    %cst_79 = arith.constant 1.000000e+00 : f32
    %191 = vector.broadcast %cst_79 : f32 to vector<1x32xf32>
    %192 = arith.subf %191, %185 : vector<1x32xf32>
    %193 = arith.mulf %192, %190 : vector<1x32xf32>
    %194 = arith.mulf %185, %166 : vector<1x32xf32>
    %195 = arith.addf %193, %194 : vector<1x32xf32>
    %196 = vector.extract_strided_slice %49 {offsets = [5, 0], sizes = [1, 32], strides = [1, 1]} : vector<8x32xf32> to vector<1x32xf32>
    %197 = tpu.concatenate %196, %195 in 1 : vector<1x32xf32>, vector<1x32xf32> -> vector<1x64xf32>
    %198 = arith.truncf %197 : vector<1x64xf32> to vector<1x64xbf16>
    %c0_80 = arith.constant 0 : index
    %c0_81 = arith.constant 0 : index
    %199 = vector.load %arg11[%c0_80, %c0_81] : memref<64x128xbf16, #tpu.memory_space<vmem>>, vector<64x128xbf16>
    %cst_82 = arith.constant dense<0.000000e+00> : vector<1x128xf32>
    %200 = tpu.matmul %198, %199, %cst_82 {dimension_numbers = #tpu.dot_dimension_numbers<[1], [0], [0], [1], [0, 0, 1, 1], [], []>} : vector<1x64xbf16>, vector<64x128xbf16>, vector<1x128xf32> -> vector<1x128xf32>
    %c0_83 = arith.constant 0 : index
    %c0_84 = arith.constant 0 : index
    %201 = vector.load %arg12[%c0_83, %c0_84] : memref<1x128xf32, #tpu.memory_space<vmem>>, vector<1x128xf32>
    %202 = arith.addf %200, %201 : vector<1x128xf32>
    %203 = vector.extract_strided_slice %202 {offsets = [0, 0], sizes = [1, 32], strides = [1, 1]} : vector<1x128xf32> to vector<1x32xf32>
    %204 = arith.negf %203 : vector<1x32xf32>
    %205 = math.exp %204 : vector<1x32xf32>
    %cst_85 = arith.constant 1.000000e+00 : f32
    %206 = vector.broadcast %cst_85 : f32 to vector<1x32xf32>
    %207 = arith.addf %206, %205 : vector<1x32xf32>
    %208 = arith.divf %206, %207 : vector<1x32xf32>
    %209 = vector.extract_strided_slice %202 {offsets = [0, 32], sizes = [1, 32], strides = [1, 1]} : vector<1x128xf32> to vector<1x32xf32>
    %210 = arith.negf %209 : vector<1x32xf32>
    %211 = math.exp %210 : vector<1x32xf32>
    %cst_86 = arith.constant 1.000000e+00 : f32
    %212 = vector.broadcast %cst_86 : f32 to vector<1x32xf32>
    %213 = arith.addf %212, %211 : vector<1x32xf32>
    %214 = arith.divf %212, %213 : vector<1x32xf32>
    %215 = vector.extract_strided_slice %202 {offsets = [0, 64], sizes = [1, 32], strides = [1, 1]} : vector<1x128xf32> to vector<1x32xf32>
    %216 = vector.extract_strided_slice %202 {offsets = [0, 96], sizes = [1, 32], strides = [1, 1]} : vector<1x128xf32> to vector<1x32xf32>
    %217 = arith.mulf %208, %216 : vector<1x32xf32>
    %218 = arith.addf %215, %217 : vector<1x32xf32>
    %219 = math.tanh %218 : vector<1x32xf32>
    %cst_87 = arith.constant 1.000000e+00 : f32
    %220 = vector.broadcast %cst_87 : f32 to vector<1x32xf32>
    %221 = arith.subf %220, %214 : vector<1x32xf32>
    %222 = arith.mulf %221, %219 : vector<1x32xf32>
    %223 = arith.mulf %214, %195 : vector<1x32xf32>
    %224 = arith.addf %222, %223 : vector<1x32xf32>
    %225 = vector.extract_strided_slice %49 {offsets = [6, 0], sizes = [1, 32], strides = [1, 1]} : vector<8x32xf32> to vector<1x32xf32>
    %226 = tpu.concatenate %225, %224 in 1 : vector<1x32xf32>, vector<1x32xf32> -> vector<1x64xf32>
    %227 = arith.truncf %226 : vector<1x64xf32> to vector<1x64xbf16>
    %c0_88 = arith.constant 0 : index
    %c0_89 = arith.constant 0 : index
    %228 = vector.load %arg11[%c0_88, %c0_89] : memref<64x128xbf16, #tpu.memory_space<vmem>>, vector<64x128xbf16>
    %cst_90 = arith.constant dense<0.000000e+00> : vector<1x128xf32>
    %229 = tpu.matmul %227, %228, %cst_90 {dimension_numbers = #tpu.dot_dimension_numbers<[1], [0], [0], [1], [0, 0, 1, 1], [], []>} : vector<1x64xbf16>, vector<64x128xbf16>, vector<1x128xf32> -> vector<1x128xf32>
    %c0_91 = arith.constant 0 : index
    %c0_92 = arith.constant 0 : index
    %230 = vector.load %arg12[%c0_91, %c0_92] : memref<1x128xf32, #tpu.memory_space<vmem>>, vector<1x128xf32>
    %231 = arith.addf %229, %230 : vector<1x128xf32>
    %232 = vector.extract_strided_slice %231 {offsets = [0, 0], sizes = [1, 32], strides = [1, 1]} : vector<1x128xf32> to vector<1x32xf32>
    %233 = arith.negf %232 : vector<1x32xf32>
    %234 = math.exp %233 : vector<1x32xf32>
    %cst_93 = arith.constant 1.000000e+00 : f32
    %235 = vector.broadcast %cst_93 : f32 to vector<1x32xf32>
    %236 = arith.addf %235, %234 : vector<1x32xf32>
    %237 = arith.divf %235, %236 : vector<1x32xf32>
    %238 = vector.extract_strided_slice %231 {offsets = [0, 32], sizes = [1, 32], strides = [1, 1]} : vector<1x128xf32> to vector<1x32xf32>
    %239 = arith.negf %238 : vector<1x32xf32>
    %240 = math.exp %239 : vector<1x32xf32>
    %cst_94 = arith.constant 1.000000e+00 : f32
    %241 = vector.broadcast %cst_94 : f32 to vector<1x32xf32>
    %242 = arith.addf %241, %240 : vector<1x32xf32>
    %243 = arith.divf %241, %242 : vector<1x32xf32>
    %244 = vector.extract_strided_slice %231 {offsets = [0, 64], sizes = [1, 32], strides = [1, 1]} : vector<1x128xf32> to vector<1x32xf32>
    %245 = vector.extract_strided_slice %231 {offsets = [0, 96], sizes = [1, 32], strides = [1, 1]} : vector<1x128xf32> to vector<1x32xf32>
    %246 = arith.mulf %237, %245 : vector<1x32xf32>
    %247 = arith.addf %244, %246 : vector<1x32xf32>
    %248 = math.tanh %247 : vector<1x32xf32>
    %cst_95 = arith.constant 1.000000e+00 : f32
    %249 = vector.broadcast %cst_95 : f32 to vector<1x32xf32>
    %250 = arith.subf %249, %243 : vector<1x32xf32>
    %251 = arith.mulf %250, %248 : vector<1x32xf32>
    %252 = arith.mulf %243, %224 : vector<1x32xf32>
    %253 = arith.addf %251, %252 : vector<1x32xf32>
    %254 = vector.extract_strided_slice %49 {offsets = [7, 0], sizes = [1, 32], strides = [1, 1]} : vector<8x32xf32> to vector<1x32xf32>
    %255 = tpu.concatenate %254, %253 in 1 : vector<1x32xf32>, vector<1x32xf32> -> vector<1x64xf32>
    %256 = arith.truncf %255 : vector<1x64xf32> to vector<1x64xbf16>
    %c0_96 = arith.constant 0 : index
    %c0_97 = arith.constant 0 : index
    %257 = vector.load %arg11[%c0_96, %c0_97] : memref<64x128xbf16, #tpu.memory_space<vmem>>, vector<64x128xbf16>
    %cst_98 = arith.constant dense<0.000000e+00> : vector<1x128xf32>
    %258 = tpu.matmul %256, %257, %cst_98 {dimension_numbers = #tpu.dot_dimension_numbers<[1], [0], [0], [1], [0, 0, 1, 1], [], []>} : vector<1x64xbf16>, vector<64x128xbf16>, vector<1x128xf32> -> vector<1x128xf32>
    %c0_99 = arith.constant 0 : index
    %c0_100 = arith.constant 0 : index
    %259 = vector.load %arg12[%c0_99, %c0_100] : memref<1x128xf32, #tpu.memory_space<vmem>>, vector<1x128xf32>
    %260 = arith.addf %258, %259 : vector<1x128xf32>
    %261 = vector.extract_strided_slice %260 {offsets = [0, 0], sizes = [1, 32], strides = [1, 1]} : vector<1x128xf32> to vector<1x32xf32>
    %262 = arith.negf %261 : vector<1x32xf32>
    %263 = math.exp %262 : vector<1x32xf32>
    %cst_101 = arith.constant 1.000000e+00 : f32
    %264 = vector.broadcast %cst_101 : f32 to vector<1x32xf32>
    %265 = arith.addf %264, %263 : vector<1x32xf32>
    %266 = arith.divf %264, %265 : vector<1x32xf32>
    %267 = vector.extract_strided_slice %260 {offsets = [0, 32], sizes = [1, 32], strides = [1, 1]} : vector<1x128xf32> to vector<1x32xf32>
    %268 = arith.negf %267 : vector<1x32xf32>
    %269 = math.exp %268 : vector<1x32xf32>
    %cst_102 = arith.constant 1.000000e+00 : f32
    %270 = vector.broadcast %cst_102 : f32 to vector<1x32xf32>
    %271 = arith.addf %270, %269 : vector<1x32xf32>
    %272 = arith.divf %270, %271 : vector<1x32xf32>
    %273 = vector.extract_strided_slice %260 {offsets = [0, 64], sizes = [1, 32], strides = [1, 1]} : vector<1x128xf32> to vector<1x32xf32>
    %274 = vector.extract_strided_slice %260 {offsets = [0, 96], sizes = [1, 32], strides = [1, 1]} : vector<1x128xf32> to vector<1x32xf32>
    %275 = arith.mulf %266, %274 : vector<1x32xf32>
    %276 = arith.addf %273, %275 : vector<1x32xf32>
    %277 = math.tanh %276 : vector<1x32xf32>
    %cst_103 = arith.constant 1.000000e+00 : f32
    %278 = vector.broadcast %cst_103 : f32 to vector<1x32xf32>
    %279 = arith.subf %278, %272 : vector<1x32xf32>
    %280 = arith.mulf %279, %277 : vector<1x32xf32>
    %281 = arith.mulf %272, %253 : vector<1x32xf32>
    %282 = arith.addf %280, %281 : vector<1x32xf32>
    %283 = tpu.concatenate %282, %282 in 1 : vector<1x32xf32>, vector<1x32xf32> -> vector<1x64xf32>
    %284 = arith.truncf %283 : vector<1x64xf32> to vector<1x64xbf16>
    %c0_104 = arith.constant 0 : index
    %c0_105 = arith.constant 0 : index
    %285 = vector.load %arg11[%c0_104, %c0_105] : memref<64x128xbf16, #tpu.memory_space<vmem>>, vector<64x128xbf16>
    %cst_106 = arith.constant dense<0.000000e+00> : vector<1x128xf32>
    %286 = tpu.matmul %284, %285, %cst_106 {dimension_numbers = #tpu.dot_dimension_numbers<[1], [0], [0], [1], [0, 0, 1, 1], [], []>} : vector<1x64xbf16>, vector<64x128xbf16>, vector<1x128xf32> -> vector<1x128xf32>
    %c0_107 = arith.constant 0 : index
    %c0_108 = arith.constant 0 : index
    %287 = vector.load %arg12[%c0_107, %c0_108] : memref<1x128xf32, #tpu.memory_space<vmem>>, vector<1x128xf32>
    %288 = arith.addf %286, %287 : vector<1x128xf32>
    %289 = vector.extract_strided_slice %288 {offsets = [0, 0], sizes = [1, 32], strides = [1, 1]} : vector<1x128xf32> to vector<1x32xf32>
    %290 = arith.negf %289 : vector<1x32xf32>
    %291 = math.exp %290 : vector<1x32xf32>
    %cst_109 = arith.constant 1.000000e+00 : f32
    %292 = vector.broadcast %cst_109 : f32 to vector<1x32xf32>
    %293 = arith.addf %292, %291 : vector<1x32xf32>
    %294 = arith.divf %292, %293 : vector<1x32xf32>
    %295 = vector.extract_strided_slice %288 {offsets = [0, 32], sizes = [1, 32], strides = [1, 1]} : vector<1x128xf32> to vector<1x32xf32>
    %296 = arith.negf %295 : vector<1x32xf32>
    %297 = math.exp %296 : vector<1x32xf32>
    %cst_110 = arith.constant 1.000000e+00 : f32
    %298 = vector.broadcast %cst_110 : f32 to vector<1x32xf32>
    %299 = arith.addf %298, %297 : vector<1x32xf32>
    %300 = arith.divf %298, %299 : vector<1x32xf32>
    %301 = vector.extract_strided_slice %288 {offsets = [0, 64], sizes = [1, 32], strides = [1, 1]} : vector<1x128xf32> to vector<1x32xf32>
    %302 = vector.extract_strided_slice %288 {offsets = [0, 96], sizes = [1, 32], strides = [1, 1]} : vector<1x128xf32> to vector<1x32xf32>
    %303 = arith.mulf %294, %302 : vector<1x32xf32>
    %304 = arith.addf %301, %303 : vector<1x32xf32>
    %305 = math.tanh %304 : vector<1x32xf32>
    %cst_111 = arith.constant 1.000000e+00 : f32
    %306 = vector.broadcast %cst_111 : f32 to vector<1x32xf32>
    %307 = arith.subf %306, %300 : vector<1x32xf32>
    %308 = arith.mulf %307, %305 : vector<1x32xf32>
    %309 = arith.mulf %300, %282 : vector<1x32xf32>
    %310 = arith.addf %308, %309 : vector<1x32xf32>
    %311 = tpu.concatenate %310, %310 in 1 : vector<1x32xf32>, vector<1x32xf32> -> vector<1x64xf32>
    %312 = arith.truncf %311 : vector<1x64xf32> to vector<1x64xbf16>
    %c0_112 = arith.constant 0 : index
    %c0_113 = arith.constant 0 : index
    %313 = vector.load %arg11[%c0_112, %c0_113] : memref<64x128xbf16, #tpu.memory_space<vmem>>, vector<64x128xbf16>
    %cst_114 = arith.constant dense<0.000000e+00> : vector<1x128xf32>
    %314 = tpu.matmul %312, %313, %cst_114 {dimension_numbers = #tpu.dot_dimension_numbers<[1], [0], [0], [1], [0, 0, 1, 1], [], []>} : vector<1x64xbf16>, vector<64x128xbf16>, vector<1x128xf32> -> vector<1x128xf32>
    %c0_115 = arith.constant 0 : index
    %c0_116 = arith.constant 0 : index
    %315 = vector.load %arg12[%c0_115, %c0_116] : memref<1x128xf32, #tpu.memory_space<vmem>>, vector<1x128xf32>
    %316 = arith.addf %314, %315 : vector<1x128xf32>
    %317 = vector.extract_strided_slice %316 {offsets = [0, 0], sizes = [1, 32], strides = [1, 1]} : vector<1x128xf32> to vector<1x32xf32>
    %318 = arith.negf %317 : vector<1x32xf32>
    %319 = math.exp %318 : vector<1x32xf32>
    %cst_117 = arith.constant 1.000000e+00 : f32
    %320 = vector.broadcast %cst_117 : f32 to vector<1x32xf32>
    %321 = arith.addf %320, %319 : vector<1x32xf32>
    %322 = arith.divf %320, %321 : vector<1x32xf32>
    %323 = vector.extract_strided_slice %316 {offsets = [0, 32], sizes = [1, 32], strides = [1, 1]} : vector<1x128xf32> to vector<1x32xf32>
    %324 = arith.negf %323 : vector<1x32xf32>
    %325 = math.exp %324 : vector<1x32xf32>
    %cst_118 = arith.constant 1.000000e+00 : f32
    %326 = vector.broadcast %cst_118 : f32 to vector<1x32xf32>
    %327 = arith.addf %326, %325 : vector<1x32xf32>
    %328 = arith.divf %326, %327 : vector<1x32xf32>
    %329 = vector.extract_strided_slice %316 {offsets = [0, 64], sizes = [1, 32], strides = [1, 1]} : vector<1x128xf32> to vector<1x32xf32>
    %330 = vector.extract_strided_slice %316 {offsets = [0, 96], sizes = [1, 32], strides = [1, 1]} : vector<1x128xf32> to vector<1x32xf32>
    %331 = arith.mulf %322, %330 : vector<1x32xf32>
    %332 = arith.addf %329, %331 : vector<1x32xf32>
    %333 = math.tanh %332 : vector<1x32xf32>
    %cst_119 = arith.constant 1.000000e+00 : f32
    %334 = vector.broadcast %cst_119 : f32 to vector<1x32xf32>
    %335 = arith.subf %334, %328 : vector<1x32xf32>
    %336 = arith.mulf %335, %333 : vector<1x32xf32>
    %337 = arith.mulf %328, %310 : vector<1x32xf32>
    %338 = arith.addf %336, %337 : vector<1x32xf32>
    %339 = tpu.concatenate %338, %338 in 1 : vector<1x32xf32>, vector<1x32xf32> -> vector<1x64xf32>
    %340 = arith.truncf %339 : vector<1x64xf32> to vector<1x64xbf16>
    %c0_120 = arith.constant 0 : index
    %c0_121 = arith.constant 0 : index
    %341 = vector.load %arg11[%c0_120, %c0_121] : memref<64x128xbf16, #tpu.memory_space<vmem>>, vector<64x128xbf16>
    %cst_122 = arith.constant dense<0.000000e+00> : vector<1x128xf32>
    %342 = tpu.matmul %340, %341, %cst_122 {dimension_numbers = #tpu.dot_dimension_numbers<[1], [0], [0], [1], [0, 0, 1, 1], [], []>} : vector<1x64xbf16>, vector<64x128xbf16>, vector<1x128xf32> -> vector<1x128xf32>
    %c0_123 = arith.constant 0 : index
    %c0_124 = arith.constant 0 : index
    %343 = vector.load %arg12[%c0_123, %c0_124] : memref<1x128xf32, #tpu.memory_space<vmem>>, vector<1x128xf32>
    %344 = arith.addf %342, %343 : vector<1x128xf32>
    %345 = vector.extract_strided_slice %344 {offsets = [0, 0], sizes = [1, 32], strides = [1, 1]} : vector<1x128xf32> to vector<1x32xf32>
    %346 = arith.negf %345 : vector<1x32xf32>
    %347 = math.exp %346 : vector<1x32xf32>
    %cst_125 = arith.constant 1.000000e+00 : f32
    %348 = vector.broadcast %cst_125 : f32 to vector<1x32xf32>
    %349 = arith.addf %348, %347 : vector<1x32xf32>
    %350 = arith.divf %348, %349 : vector<1x32xf32>
    %351 = vector.extract_strided_slice %344 {offsets = [0, 32], sizes = [1, 32], strides = [1, 1]} : vector<1x128xf32> to vector<1x32xf32>
    %352 = arith.negf %351 : vector<1x32xf32>
    %353 = math.exp %352 : vector<1x32xf32>
    %cst_126 = arith.constant 1.000000e+00 : f32
    %354 = vector.broadcast %cst_126 : f32 to vector<1x32xf32>
    %355 = arith.addf %354, %353 : vector<1x32xf32>
    %356 = arith.divf %354, %355 : vector<1x32xf32>
    %357 = vector.extract_strided_slice %344 {offsets = [0, 64], sizes = [1, 32], strides = [1, 1]} : vector<1x128xf32> to vector<1x32xf32>
    %358 = vector.extract_strided_slice %344 {offsets = [0, 96], sizes = [1, 32], strides = [1, 1]} : vector<1x128xf32> to vector<1x32xf32>
    %359 = arith.mulf %350, %358 : vector<1x32xf32>
    %360 = arith.addf %357, %359 : vector<1x32xf32>
    %361 = math.tanh %360 : vector<1x32xf32>
    %cst_127 = arith.constant 1.000000e+00 : f32
    %362 = vector.broadcast %cst_127 : f32 to vector<1x32xf32>
    %363 = arith.subf %362, %356 : vector<1x32xf32>
    %364 = arith.mulf %363, %361 : vector<1x32xf32>
    %365 = arith.mulf %356, %338 : vector<1x32xf32>
    %366 = arith.addf %364, %365 : vector<1x32xf32>
    %367 = tpu.concatenate %366, %366 in 1 : vector<1x32xf32>, vector<1x32xf32> -> vector<1x64xf32>
    %368 = arith.truncf %367 : vector<1x64xf32> to vector<1x64xbf16>
    %c0_128 = arith.constant 0 : index
    %c0_129 = arith.constant 0 : index
    %369 = vector.load %arg11[%c0_128, %c0_129] : memref<64x128xbf16, #tpu.memory_space<vmem>>, vector<64x128xbf16>
    %cst_130 = arith.constant dense<0.000000e+00> : vector<1x128xf32>
    %370 = tpu.matmul %368, %369, %cst_130 {dimension_numbers = #tpu.dot_dimension_numbers<[1], [0], [0], [1], [0, 0, 1, 1], [], []>} : vector<1x64xbf16>, vector<64x128xbf16>, vector<1x128xf32> -> vector<1x128xf32>
    %c0_131 = arith.constant 0 : index
    %c0_132 = arith.constant 0 : index
    %371 = vector.load %arg12[%c0_131, %c0_132] : memref<1x128xf32, #tpu.memory_space<vmem>>, vector<1x128xf32>
    %372 = arith.addf %370, %371 : vector<1x128xf32>
    %373 = vector.extract_strided_slice %372 {offsets = [0, 0], sizes = [1, 32], strides = [1, 1]} : vector<1x128xf32> to vector<1x32xf32>
    %374 = arith.negf %373 : vector<1x32xf32>
    %375 = math.exp %374 : vector<1x32xf32>
    %cst_133 = arith.constant 1.000000e+00 : f32
    %376 = vector.broadcast %cst_133 : f32 to vector<1x32xf32>
    %377 = arith.addf %376, %375 : vector<1x32xf32>
    %378 = arith.divf %376, %377 : vector<1x32xf32>
    %379 = vector.extract_strided_slice %372 {offsets = [0, 32], sizes = [1, 32], strides = [1, 1]} : vector<1x128xf32> to vector<1x32xf32>
    %380 = arith.negf %379 : vector<1x32xf32>
    %381 = math.exp %380 : vector<1x32xf32>
    %cst_134 = arith.constant 1.000000e+00 : f32
    %382 = vector.broadcast %cst_134 : f32 to vector<1x32xf32>
    %383 = arith.addf %382, %381 : vector<1x32xf32>
    %384 = arith.divf %382, %383 : vector<1x32xf32>
    %385 = vector.extract_strided_slice %372 {offsets = [0, 64], sizes = [1, 32], strides = [1, 1]} : vector<1x128xf32> to vector<1x32xf32>
    %386 = vector.extract_strided_slice %372 {offsets = [0, 96], sizes = [1, 32], strides = [1, 1]} : vector<1x128xf32> to vector<1x32xf32>
    %387 = arith.mulf %378, %386 : vector<1x32xf32>
    %388 = arith.addf %385, %387 : vector<1x32xf32>
    %389 = math.tanh %388 : vector<1x32xf32>
    %cst_135 = arith.constant 1.000000e+00 : f32
    %390 = vector.broadcast %cst_135 : f32 to vector<1x32xf32>
    %391 = arith.subf %390, %384 : vector<1x32xf32>
    %392 = arith.mulf %391, %389 : vector<1x32xf32>
    %393 = arith.mulf %384, %366 : vector<1x32xf32>
    %394 = arith.addf %392, %393 : vector<1x32xf32>
    %395 = tpu.concatenate %394, %394 in 1 : vector<1x32xf32>, vector<1x32xf32> -> vector<1x64xf32>
    %396 = arith.truncf %395 : vector<1x64xf32> to vector<1x64xbf16>
    %c0_136 = arith.constant 0 : index
    %c0_137 = arith.constant 0 : index
    %397 = vector.load %arg11[%c0_136, %c0_137] : memref<64x128xbf16, #tpu.memory_space<vmem>>, vector<64x128xbf16>
    %cst_138 = arith.constant dense<0.000000e+00> : vector<1x128xf32>
    %398 = tpu.matmul %396, %397, %cst_138 {dimension_numbers = #tpu.dot_dimension_numbers<[1], [0], [0], [1], [0, 0, 1, 1], [], []>} : vector<1x64xbf16>, vector<64x128xbf16>, vector<1x128xf32> -> vector<1x128xf32>
    %c0_139 = arith.constant 0 : index
    %c0_140 = arith.constant 0 : index
    %399 = vector.load %arg12[%c0_139, %c0_140] : memref<1x128xf32, #tpu.memory_space<vmem>>, vector<1x128xf32>
    %400 = arith.addf %398, %399 : vector<1x128xf32>
    %401 = vector.extract_strided_slice %400 {offsets = [0, 0], sizes = [1, 32], strides = [1, 1]} : vector<1x128xf32> to vector<1x32xf32>
    %402 = arith.negf %401 : vector<1x32xf32>
    %403 = math.exp %402 : vector<1x32xf32>
    %cst_141 = arith.constant 1.000000e+00 : f32
    %404 = vector.broadcast %cst_141 : f32 to vector<1x32xf32>
    %405 = arith.addf %404, %403 : vector<1x32xf32>
    %406 = arith.divf %404, %405 : vector<1x32xf32>
    %407 = vector.extract_strided_slice %400 {offsets = [0, 32], sizes = [1, 32], strides = [1, 1]} : vector<1x128xf32> to vector<1x32xf32>
    %408 = arith.negf %407 : vector<1x32xf32>
    %409 = math.exp %408 : vector<1x32xf32>
    %cst_142 = arith.constant 1.000000e+00 : f32
    %410 = vector.broadcast %cst_142 : f32 to vector<1x32xf32>
    %411 = arith.addf %410, %409 : vector<1x32xf32>
    %412 = arith.divf %410, %411 : vector<1x32xf32>
    %413 = vector.extract_strided_slice %400 {offsets = [0, 64], sizes = [1, 32], strides = [1, 1]} : vector<1x128xf32> to vector<1x32xf32>
    %414 = vector.extract_strided_slice %400 {offsets = [0, 96], sizes = [1, 32], strides = [1, 1]} : vector<1x128xf32> to vector<1x32xf32>
    %415 = arith.mulf %406, %414 : vector<1x32xf32>
    %416 = arith.addf %413, %415 : vector<1x32xf32>
    %417 = math.tanh %416 : vector<1x32xf32>
    %cst_143 = arith.constant 1.000000e+00 : f32
    %418 = vector.broadcast %cst_143 : f32 to vector<1x32xf32>
    %419 = arith.subf %418, %412 : vector<1x32xf32>
    %420 = arith.mulf %419, %417 : vector<1x32xf32>
    %421 = arith.mulf %412, %394 : vector<1x32xf32>
    %422 = arith.addf %420, %421 : vector<1x32xf32>
    %423 = tpu.concatenate %422, %422 in 1 : vector<1x32xf32>, vector<1x32xf32> -> vector<1x64xf32>
    %424 = arith.truncf %423 : vector<1x64xf32> to vector<1x64xbf16>
    %c0_144 = arith.constant 0 : index
    %c0_145 = arith.constant 0 : index
    %425 = vector.load %arg11[%c0_144, %c0_145] : memref<64x128xbf16, #tpu.memory_space<vmem>>, vector<64x128xbf16>
    %cst_146 = arith.constant dense<0.000000e+00> : vector<1x128xf32>
    %426 = tpu.matmul %424, %425, %cst_146 {dimension_numbers = #tpu.dot_dimension_numbers<[1], [0], [0], [1], [0, 0, 1, 1], [], []>} : vector<1x64xbf16>, vector<64x128xbf16>, vector<1x128xf32> -> vector<1x128xf32>
    %c0_147 = arith.constant 0 : index
    %c0_148 = arith.constant 0 : index
    %427 = vector.load %arg12[%c0_147, %c0_148] : memref<1x128xf32, #tpu.memory_space<vmem>>, vector<1x128xf32>
    %428 = arith.addf %426, %427 : vector<1x128xf32>
    %429 = vector.extract_strided_slice %428 {offsets = [0, 0], sizes = [1, 32], strides = [1, 1]} : vector<1x128xf32> to vector<1x32xf32>
    %430 = arith.negf %429 : vector<1x32xf32>
    %431 = math.exp %430 : vector<1x32xf32>
    %cst_149 = arith.constant 1.000000e+00 : f32
    %432 = vector.broadcast %cst_149 : f32 to vector<1x32xf32>
    %433 = arith.addf %432, %431 : vector<1x32xf32>
    %434 = arith.divf %432, %433 : vector<1x32xf32>
    %435 = vector.extract_strided_slice %428 {offsets = [0, 32], sizes = [1, 32], strides = [1, 1]} : vector<1x128xf32> to vector<1x32xf32>
    %436 = arith.negf %435 : vector<1x32xf32>
    %437 = math.exp %436 : vector<1x32xf32>
    %cst_150 = arith.constant 1.000000e+00 : f32
    %438 = vector.broadcast %cst_150 : f32 to vector<1x32xf32>
    %439 = arith.addf %438, %437 : vector<1x32xf32>
    %440 = arith.divf %438, %439 : vector<1x32xf32>
    %441 = vector.extract_strided_slice %428 {offsets = [0, 64], sizes = [1, 32], strides = [1, 1]} : vector<1x128xf32> to vector<1x32xf32>
    %442 = vector.extract_strided_slice %428 {offsets = [0, 96], sizes = [1, 32], strides = [1, 1]} : vector<1x128xf32> to vector<1x32xf32>
    %443 = arith.mulf %434, %442 : vector<1x32xf32>
    %444 = arith.addf %441, %443 : vector<1x32xf32>
    %445 = math.tanh %444 : vector<1x32xf32>
    %cst_151 = arith.constant 1.000000e+00 : f32
    %446 = vector.broadcast %cst_151 : f32 to vector<1x32xf32>
    %447 = arith.subf %446, %440 : vector<1x32xf32>
    %448 = arith.mulf %447, %445 : vector<1x32xf32>
    %449 = arith.mulf %440, %422 : vector<1x32xf32>
    %450 = arith.addf %448, %449 : vector<1x32xf32>
    %451 = tpu.concatenate %450, %450 in 1 : vector<1x32xf32>, vector<1x32xf32> -> vector<1x64xf32>
    %452 = arith.truncf %451 : vector<1x64xf32> to vector<1x64xbf16>
    %c0_152 = arith.constant 0 : index
    %c0_153 = arith.constant 0 : index
    %453 = vector.load %arg11[%c0_152, %c0_153] : memref<64x128xbf16, #tpu.memory_space<vmem>>, vector<64x128xbf16>
    %cst_154 = arith.constant dense<0.000000e+00> : vector<1x128xf32>
    %454 = tpu.matmul %452, %453, %cst_154 {dimension_numbers = #tpu.dot_dimension_numbers<[1], [0], [0], [1], [0, 0, 1, 1], [], []>} : vector<1x64xbf16>, vector<64x128xbf16>, vector<1x128xf32> -> vector<1x128xf32>
    %c0_155 = arith.constant 0 : index
    %c0_156 = arith.constant 0 : index
    %455 = vector.load %arg12[%c0_155, %c0_156] : memref<1x128xf32, #tpu.memory_space<vmem>>, vector<1x128xf32>
    %456 = arith.addf %454, %455 : vector<1x128xf32>
    %457 = vector.extract_strided_slice %456 {offsets = [0, 0], sizes = [1, 32], strides = [1, 1]} : vector<1x128xf32> to vector<1x32xf32>
    %458 = arith.negf %457 : vector<1x32xf32>
    %459 = math.exp %458 : vector<1x32xf32>
    %cst_157 = arith.constant 1.000000e+00 : f32
    %460 = vector.broadcast %cst_157 : f32 to vector<1x32xf32>
    %461 = arith.addf %460, %459 : vector<1x32xf32>
    %462 = arith.divf %460, %461 : vector<1x32xf32>
    %463 = vector.extract_strided_slice %456 {offsets = [0, 32], sizes = [1, 32], strides = [1, 1]} : vector<1x128xf32> to vector<1x32xf32>
    %464 = arith.negf %463 : vector<1x32xf32>
    %465 = math.exp %464 : vector<1x32xf32>
    %cst_158 = arith.constant 1.000000e+00 : f32
    %466 = vector.broadcast %cst_158 : f32 to vector<1x32xf32>
    %467 = arith.addf %466, %465 : vector<1x32xf32>
    %468 = arith.divf %466, %467 : vector<1x32xf32>
    %469 = vector.extract_strided_slice %456 {offsets = [0, 64], sizes = [1, 32], strides = [1, 1]} : vector<1x128xf32> to vector<1x32xf32>
    %470 = vector.extract_strided_slice %456 {offsets = [0, 96], sizes = [1, 32], strides = [1, 1]} : vector<1x128xf32> to vector<1x32xf32>
    %471 = arith.mulf %462, %470 : vector<1x32xf32>
    %472 = arith.addf %469, %471 : vector<1x32xf32>
    %473 = math.tanh %472 : vector<1x32xf32>
    %cst_159 = arith.constant 1.000000e+00 : f32
    %474 = vector.broadcast %cst_159 : f32 to vector<1x32xf32>
    %475 = arith.subf %474, %468 : vector<1x32xf32>
    %476 = arith.mulf %475, %473 : vector<1x32xf32>
    %477 = arith.mulf %468, %450 : vector<1x32xf32>
    %478 = arith.addf %476, %477 : vector<1x32xf32>
    %479 = tpu.concatenate %478, %478 in 1 : vector<1x32xf32>, vector<1x32xf32> -> vector<1x64xf32>
    %480 = arith.truncf %479 : vector<1x64xf32> to vector<1x64xbf16>
    %c0_160 = arith.constant 0 : index
    %c0_161 = arith.constant 0 : index
    %481 = vector.load %arg11[%c0_160, %c0_161] : memref<64x128xbf16, #tpu.memory_space<vmem>>, vector<64x128xbf16>
    %cst_162 = arith.constant dense<0.000000e+00> : vector<1x128xf32>
    %482 = tpu.matmul %480, %481, %cst_162 {dimension_numbers = #tpu.dot_dimension_numbers<[1], [0], [0], [1], [0, 0, 1, 1], [], []>} : vector<1x64xbf16>, vector<64x128xbf16>, vector<1x128xf32> -> vector<1x128xf32>
    %c0_163 = arith.constant 0 : index
    %c0_164 = arith.constant 0 : index
    %483 = vector.load %arg12[%c0_163, %c0_164] : memref<1x128xf32, #tpu.memory_space<vmem>>, vector<1x128xf32>
    %484 = arith.addf %482, %483 : vector<1x128xf32>
    %485 = vector.extract_strided_slice %484 {offsets = [0, 0], sizes = [1, 32], strides = [1, 1]} : vector<1x128xf32> to vector<1x32xf32>
    %486 = arith.negf %485 : vector<1x32xf32>
    %487 = math.exp %486 : vector<1x32xf32>
    %cst_165 = arith.constant 1.000000e+00 : f32
    %488 = vector.broadcast %cst_165 : f32 to vector<1x32xf32>
    %489 = arith.addf %488, %487 : vector<1x32xf32>
    %490 = arith.divf %488, %489 : vector<1x32xf32>
    %491 = vector.extract_strided_slice %484 {offsets = [0, 32], sizes = [1, 32], strides = [1, 1]} : vector<1x128xf32> to vector<1x32xf32>
    %492 = arith.negf %491 : vector<1x32xf32>
    %493 = math.exp %492 : vector<1x32xf32>
    %cst_166 = arith.constant 1.000000e+00 : f32
    %494 = vector.broadcast %cst_166 : f32 to vector<1x32xf32>
    %495 = arith.addf %494, %493 : vector<1x32xf32>
    %496 = arith.divf %494, %495 : vector<1x32xf32>
    %497 = vector.extract_strided_slice %484 {offsets = [0, 64], sizes = [1, 32], strides = [1, 1]} : vector<1x128xf32> to vector<1x32xf32>
    %498 = vector.extract_strided_slice %484 {offsets = [0, 96], sizes = [1, 32], strides = [1, 1]} : vector<1x128xf32> to vector<1x32xf32>
    %499 = arith.mulf %490, %498 : vector<1x32xf32>
    %500 = arith.addf %497, %499 : vector<1x32xf32>
    %501 = math.tanh %500 : vector<1x32xf32>
    %cst_167 = arith.constant 1.000000e+00 : f32
    %502 = vector.broadcast %cst_167 : f32 to vector<1x32xf32>
    %503 = arith.subf %502, %496 : vector<1x32xf32>
    %504 = arith.mulf %503, %501 : vector<1x32xf32>
    %505 = arith.mulf %496, %478 : vector<1x32xf32>
    %506 = arith.addf %504, %505 : vector<1x32xf32>
    %507 = tpu.concatenate %310, %338, %366, %394, %422, %450, %478, %506 in 0 : vector<1x32xf32>, vector<1x32xf32>, vector<1x32xf32>, vector<1x32xf32>, vector<1x32xf32>, vector<1x32xf32>, vector<1x32xf32>, vector<1x32xf32> -> vector<8x32xf32>
    %c0_168 = arith.constant 0 : index
    %c0_169 = arith.constant 0 : index
    %c0_170 = arith.constant 0 : index
    %508 = vector.load %arg17[%c0_168, %c0_169, %c0_170] : memref<1x8x32xf32, #tpu.memory_space<vmem>>, vector<1x8x32xf32>
    %509 = vector.shape_cast %508 : vector<1x8x32xf32> to vector<8x32xf32>
    %510 = vector.shape_cast %507 : vector<8x32xf32> to vector<1x8x32xf32>
    tpu.vector_store %arg17[%c0_168, %c0_169, %c0_170], %510 {strides = array<i32>} : memref<1x8x32xf32, #tpu.memory_space<vmem>>, vector<1x8x32xf32>,
    %c0_171 = arith.constant 0 : index
    %c0_172 = arith.constant 0 : index
    %c0_173 = arith.constant 0 : index
    %511 = vector.load %arg18[%c0_171, %c0_172, %c0_173] : memref<1x1x32xf32, #tpu.memory_space<vmem>>, vector<1x1x32xf32>
    %512 = vector.shape_cast %511 : vector<1x1x32xf32> to vector<1x32xf32>
    %513 = vector.shape_cast %506 : vector<1x32xf32> to vector<1x1x32xf32>
    tpu.vector_store %arg18[%c0_171, %c0_172, %c0_173], %513 {strides = array<i32>} : memref<1x1x32xf32, #tpu.memory_space<vmem>>, vector<1x1x32xf32>,
    return
  }
  func.func @transform_0(%arg0: i32) -> (i32, i32) {
    %c0_i32 = arith.constant 0 : i32
    %c0_i32_0 = arith.constant 0 : i32
    return %arg0, %c0_i32 : i32, i32
  }
  func.func @transform_1(%arg0: i32) -> (i32, i32) {
    %c0_i32 = arith.constant 0 : i32
    %c0_i32_0 = arith.constant 0 : i32
    %c0_i32_1 = arith.constant 0 : i32
    return %c0_i32, %c0_i32_0 : i32, i32
  }
  func.func @transform_2(%arg0: i32) -> (i32, i32) {
    %c0_i32 = arith.constant 0 : i32
    %c0_i32_0 = arith.constant 0 : i32
    %c0_i32_1 = arith.constant 0 : i32
    return %c0_i32, %c0_i32_0 : i32, i32
  }
  func.func @transform_3(%arg0: i32) -> (i32, i32) {
    %c0_i32 = arith.constant 0 : i32
    %c0_i32_0 = arith.constant 0 : i32
    %c0_i32_1 = arith.constant 0 : i32
    return %c0_i32, %c0_i32_0 : i32, i32
  }
  func.func @transform_4(%arg0: i32) -> (i32, i32) {
    %c0_i32 = arith.constant 0 : i32
    %c0_i32_0 = arith.constant 0 : i32
    %c0_i32_1 = arith.constant 0 : i32
    return %c0_i32, %c0_i32_0 : i32, i32
  }
  func.func @transform_5(%arg0: i32) -> (i32, i32) {
    %c0_i32 = arith.constant 0 : i32
    %c0_i32_0 = arith.constant 0 : i32
    %c0_i32_1 = arith.constant 0 : i32
    return %c0_i32, %c0_i32_0 : i32, i32
  }
  func.func @transform_6(%arg0: i32) -> (i32, i32) {
    %c0_i32 = arith.constant 0 : i32
    %c0_i32_0 = arith.constant 0 : i32
    %c0_i32_1 = arith.constant 0 : i32
    return %c0_i32, %c0_i32_0 : i32, i32
  }
  func.func @transform_7(%arg0: i32) -> (i32, i32) {
    %c0_i32 = arith.constant 0 : i32
    %c0_i32_0 = arith.constant 0 : i32
    %c0_i32_1 = arith.constant 0 : i32
    return %c0_i32, %c0_i32_0 : i32, i32
  }
  func.func @transform_8(%arg0: i32) -> (i32, i32) {
    %c0_i32 = arith.constant 0 : i32
    %c0_i32_0 = arith.constant 0 : i32
    %c0_i32_1 = arith.constant 0 : i32
    return %c0_i32, %c0_i32_0 : i32, i32
  }
  func.func @transform_9(%arg0: i32) -> (i32, i32) {
    %c0_i32 = arith.constant 0 : i32
    %c0_i32_0 = arith.constant 0 : i32
    %c0_i32_1 = arith.constant 0 : i32
    return %c0_i32, %c0_i32_0 : i32, i32
  }
  func.func @transform_10(%arg0: i32) -> (i32, i32) {
    %c0_i32 = arith.constant 0 : i32
    %c0_i32_0 = arith.constant 0 : i32
    %c0_i32_1 = arith.constant 0 : i32
    return %c0_i32, %c0_i32_0 : i32, i32
  }
  func.func @transform_11(%arg0: i32) -> (i32, i32) {
    %c0_i32 = arith.constant 0 : i32
    %c0_i32_0 = arith.constant 0 : i32
    %c0_i32_1 = arith.constant 0 : i32
    return %c0_i32, %c0_i32_0 : i32, i32
  }
  func.func @transform_12(%arg0: i32) -> (i32, i32) {
    %c0_i32 = arith.constant 0 : i32
    %c0_i32_0 = arith.constant 0 : i32
    return %arg0, %c0_i32 : i32, i32
  }
  func.func @transform_13(%arg0: i32) -> (i32, i32, i32) {
    %c0_i32 = arith.constant 0 : i32
    %c0_i32_0 = arith.constant 0 : i32
    %c0_i32_1 = arith.constant 0 : i32
    return %arg0, %c0_i32, %c0_i32_0 : i32, i32, i32
  }
  func.func @transform_14(%arg0: i32) -> (i32, i32, i32) {
    %c0_i32 = arith.constant 0 : i32
    %c0_i32_0 = arith.constant 0 : i32
    %c0_i32_1 = arith.constant 0 : i32
    return %arg0, %c0_i32, %c0_i32_0 : i32, i32, i32
  }
  func.func @transform_15(%arg0: i32) -> (i32, i32, i32) {
    %c0_i32 = arith.constant 0 : i32
    %c0_i32_0 = arith.constant 0 : i32
    %c0_i32_1 = arith.constant 0 : i32
    return %arg0, %c0_i32, %c0_i32_0 : i32, i32, i32
  }
  func.func @transform_16(%arg0: i32) -> (i32, i32, i32) {
    %c0_i32 = arith.constant 0 : i32
    %c0_i32_0 = arith.constant 0 : i32
    %c0_i32_1 = arith.constant 0 : i32
    return %arg0, %c0_i32, %c0_i32_0 : i32, i32, i32
  }
  func.func @transform_17(%arg0: i32) -> (i32, i32, i32) {
    %c0_i32 = arith.constant 0 : i32
    %c0_i32_0 = arith.constant 0 : i32
    %c0_i32_1 = arith.constant 0 : i32
    return %arg0, %c0_i32, %c0_i32_0 : i32, i32, i32
  }
}

</mosaic_0001>

<llo_original>
// kernel: tile.13
$region0: #{tile.13}
  #allocation0 [shape = 's32[1]{0}', space=sflag, size = 0x4, scoped, tag = 'scoped memory for tile.13']
  %s0 = inlined_call_operand.vmem [shape: f32[32], index: 0, kind: input, shape index: {}]
  %s1 = inlined_call_operand.vmem [shape: f32[4,32], index: 1, kind: output, shape index: {}]
  // Predicated region
  $region2: #{tile.13} parent=0 // pred_check
    _
  $region3: #{tile.13} parent=0 // pred_check_branch
    %3 = sbr.rel (0) target = $region5
  $region4: #{tile.13} parent=0 // pred_region
    _
  $region5: #{tile.13} parent=0 // pred_fallthru
    _
  %v4 = vld [vmem:[%s0] ss:$0 sm:$0xff]
  %5 = vst [vmem:[%s1] sm:$0xf] %v4

// kernel: tile.14
$region0: #{tile.14}
  %s0 = inlined_call_operand.vmem [shape: f32[4,32], index: 0, kind: input, shape index: {}]
  %s1 = inlined_call_operand.vmem [shape: f32[128], index: 1, kind: output, shape index: {}]
  $region1: #{tile.14} parent=0
    #allocation0 [shape = 'u8[4096]{0}', space=vmem, size = 0x1000, scoped, tag = 'scoped mem for output reshape']
    #allocation1 [shape = 'u8[4096]{0}', space=vmem, size = 0x1000, scoped, tag = 'scoped mem for input reshape']
    %s3 = sshllo.u32 0, 4
    %v4 = vld [vmem:[%s0] sm:%s3]
    %5 = vst [vmem:[#allocation1] sm:%s3] %v4
    %v6 = vld [vmem:[#allocation1] sm:$0x1]
    %vm7 = vcmask 261120
    %8 = vst.msk [vmem:[#allocation0] sm:$0x1] %vm7, %v6
    %s9 = scalar_lea.vmem [#allocation1], 3
    %v10 = vld [vmem:[%s9] sm:$0x1]
    %11 = vrot.lane.b32.xlu0 %v10, 96
    %v12 = vpop.permute.xlu0 %11
    %vm13 = vcmask 1048320
    %14 = vst.msk [vmem:[#allocation0] sm:$0x1] %vm13, %v12
    %s15 = scalar_lea.vmem [#allocation1], 2
    %v16 = vld [vmem:[%s15] sm:$0x1]
    %17 = vrot.lane.b32.xlu0 %v16, 64
    %v18 = vpop.permute.xlu0 %17
    %vm19 = vcmask 785920
    %20 = vst.msk [vmem:[#allocation0] sm:$0x1] %vm19, %v18
    %s21 = scalar_lea.vmem [#allocation1], 1
    %v22 = vld [vmem:[%s21] sm:$0x1]
    %23 = vrot.lane.b32.xlu0 %v22, 32
    %v24 = vpop.permute.xlu0 %23
    %vm25 = vcmask 523520
    %26 = vst.msk [vmem:[#allocation0] sm:$0x1] %vm25, %v24
    %s28 = sshllo.u32 0, 1
    %v30 = vld [vmem:[#allocation0] sm:%s28]
    %s31 = sshllo.u32 0, 1
    %32 = vst [vmem:[%s1] sm:%s31] %v30

// kernel: _lambda_.1
$region0: #{_lambda_.1}
  #allocation0 [shape = 'u32[]', space=smem, size = 0x4, offset = 0x4, fixed_abs, tag = 'smem constant byte address 0x4 - core index']
  #allocation1 [shape = 'u32[144,128]{1,0:T(1,128)}', space=vmem, size = 0x12000, scoped, tag = 'internal scratch']
  %s0 = inlined_call_operand.vmem [shape: bf16[1024,128], index: 0, kind: input, shape index: {}]
  %s1 = inlined_call_operand.vmem [shape: bf16[128,32], index: 1, kind: input, shape index: {}]
  %s2 = inlined_call_operand.vmem [shape: f32[1,32], index: 2, kind: input, shape index: {}]
  %s3 = inlined_call_operand.vmem [shape: f32[8,512], index: 3, kind: input, shape index: {}]
  %s4 = inlined_call_operand.vmem [shape: bf16[32,64], index: 4, kind: input, shape index: {}]
  %s5 = inlined_call_operand.vmem [shape: f32[1,64], index: 5, kind: input, shape index: {}]
  %s6 = inlined_call_operand.vmem [shape: bf16[32,128], index: 6, kind: input, shape index: {}]
  %s7 = inlined_call_operand.vmem [shape: f32[1,128], index: 7, kind: input, shape index: {}]
  %s8 = inlined_call_operand.vmem [shape: bf16[128,256], index: 8, kind: input, shape index: {}]
  %s9 = inlined_call_operand.vmem [shape: f32[1,256], index: 9, kind: input, shape index: {}]
  %s10 = inlined_call_operand.vmem [shape: bf16[64,128], index: 10, kind: input, shape index: {}]
  %s11 = inlined_call_operand.vmem [shape: f32[1,128], index: 11, kind: input, shape index: {}]
  %s12 = inlined_call_operand.hbm [shape: f32[1024,32], index: 12, kind: output, shape index: {0}]
  %s13 = inlined_call_operand.vmem [shape: f32[2,8,64], index: 13, kind: output, shape index: {1}]
  %s14 = inlined_call_operand.vmem [shape: f32[2,1,128], index: 14, kind: output, shape index: {2}]
  %s15 = inlined_call_operand.vmem [shape: f32[2,1,128], index: 15, kind: output, shape index: {3}]
  %s16 = inlined_call_operand.vmem [shape: f32[2,8,32], index: 16, kind: output, shape index: {4}]
  %s17 = inlined_call_operand.hbm [shape: f32[2,1,32], index: 17, kind: output, shape index: {5}]
  %18 = xla_tuple %s12, %s13, %s14, %s15, %s16, %s17
  %s19 = sld [smem:[#allocation0]]
  $region121: #{_lambda_.1} parent=0
    _
  %s21 = ssub.s32 1, %s19
  %s22 = scalar_select 0, %s21, %s19
  $region1: #{_lambda_.1} parent=0
    #allocation2 [shape = 'u8[524288]{0}', space=vmem, size = 0x80000, scoped, tag = 'output window, operand 0']
    #allocation3 [shape = 's32[2]{0}', space=sflag, size = 0x8, scoped, tag = 'scoped memory for _lambda_.1']
    #allocation4 [shape = 'u8[1024]{0}', space=vmem, size = 0x400, scoped, tag = 'output window, operand 5']
    #allocation5 [shape = 's32[2]{0}', space=sflag, size = 0x8, scoped, tag = 'scoped memory for _lambda_.1']
    %23 = vsyncpa [#allocation3], 0
    %s24 = scalar_lea.sflag [#allocation3], 1
    %25 = vsyncpa %s24, 0
    %26 = vsyncpa [#allocation5], 0
    %s27 = scalar_lea.sflag [#allocation5], 1
    %28 = vsyncpa %s27, 0
    loop: start=0, step=1, limit=4
    $region2: #{_lambda_.1} parent=1 // loop_pre_header
      _
    $region3: #{_lambda_.1} parent=1 // loop_header
      %s30 = sphi 0, %s34
      %p31 = scmp.ge.s32.totalorder %s30, 4
      %s40 = sphi 0, %s42
      %s43 = sphi 0, %s40
      %s44 = sphi 0, %s43
      %s60 = sphi 0, %s44
      %s64 = sphi 0, %s64
      %s66 = sphi 0, %s64
      %s67 = sphi 0, %s66
      %s81 = sphi 0, %s67
      %s85 = sphi 0, %s85
      %s87 = sphi 0, %s85
      %s88 = sphi 0, %s87
      %s102 = sphi 0, %s88
      %s106 = sphi 0, %s106
      %s108 = sphi 0, %s106
      %s109 = sphi 0, %s108
      %s123 = sphi 0, %s109
      %s127 = sphi 0, %s127
      %s129 = sphi 0, %s127
      %s130 = sphi 0, %s129
      %s144 = sphi 0, %s130
      %s148 = sphi 0, %s148
      %s150 = sphi 0, %s148
      %s151 = sphi 0, %s150
      %s165 = sphi 0, %s151
      %s169 = sphi 0, %s169
      %s171 = sphi 0, %s169
      %s172 = sphi 0, %s171
      %s186 = sphi 0, %s172
      %s190 = sphi 0, %s190
      %s192 = sphi 0, %s190
      %s193 = sphi 0, %s192
      %s207 = sphi 0, %s193
      %s211 = sphi 0, %s211
      %s213 = sphi 0, %s211
      %s214 = sphi 0, %s213
      %s228 = sphi 0, %s214
      %s232 = sphi 0, %s232
      %s234 = sphi 0, %s232
      %s235 = sphi 0, %s234
      %s249 = sphi 0, %s235
      %s253 = sphi 0, %s253
      %s255 = sphi 0, %s253
      %s256 = sphi 0, %s255
      %s270 = sphi 0, %s256
      %s274 = sphi 0, %s274
      %s276 = sphi 0, %s274
      %s277 = sphi 0, %s276
      %s291 = sphi 0, %s277
      %s297 = sphi 0, %s299
      %s300 = sphi 0, %s297
      %s301 = sphi 0, %s300
      %s317 = sphi 0, %s301
      %s323 = sphi 0, %s325
      %s326 = sphi 0, %s323
      %s327 = sphi 0, %s326
      %s343 = sphi 0, %s327
      %s349 = sphi 0, %s351
      %s352 = sphi 0, %s349
      %s353 = sphi 0, %s352
      %s369 = sphi 0, %s353
      %s375 = sphi 0, %s377
      %s378 = sphi 0, %s375
      %s379 = sphi 0, %s378
      %s395 = sphi 0, %s379
      %s401 = sphi 0, %s403
      %s404 = sphi 0, %s401
      %s405 = sphi 0, %s404
      %s421 = sphi 0, %s405
      %s427 = sphi 0, %s429
      %s430 = sphi 0, %s427
      %s431 = sphi 0, %s430
      %s447 = sphi 0, %s431
    $region4: #{_lambda_.1} parent=1 // loop_header_branch
      %33 = sbr.rel (%p31) target = $region8
    $region5: #{_lambda_.1} parent=1 // loop_body
      %s35 = ssub.s32 %s30, 1
      %s36 = ssub.s32 %s30, 2
      %s37 = sadd.s32 %s30, 1
      %s38 = ssub.s32 %s30, %s37
      %p39 = scmp.eq.s32.totalorder %s38, 0
      %s41 = sadd.s32 %s40, 1
      %s42 = scalar_select %p39, %s40, %s41
      %p45 = pneg %p39
      %p46 = scmp.eq.s32.totalorder %s30, 1
      %p47 = por %p45, %p46
      %p48 = scmp.ne.s32.totalorder %s40, %s43
      %p49 = scmp.eq.s32.totalorder %s30, 0
      %p50 = por %p48, %p49
      %p51 = scmp.ne.s32.totalorder %s40, %s43
      %p52 = scmp.eq.s32.totalorder %s35, 1
      %p53 = por %p51, %p52
      %p54 = scmp.ne.s32.totalorder %s43, %s44
      %p55 = scmp.eq.s32.totalorder %s35, 0
      %p56 = por %p54, %p55
      %p57 = scmp.ne.s32.totalorder %s43, %s44
      %p58 = scmp.eq.s32.totalorder %s36, 1
      %p59 = por %p57, %p58
      %p61 = scmp.ne.s32.totalorder %s44, %s60
      %p62 = scmp.eq.s32.totalorder %s36, 0
      %p63 = por %p61, %p62
      %s65 = sadd.s32 %s64, 1
      %p68 = scmp.eq.s32.totalorder %s30, 1
      %p69 = scmp.ne.s32.totalorder %s64, %s66
      %p70 = scmp.eq.s32.totalorder %s30, 0
      %p71 = por %p69, %p70
      %p72 = scmp.ne.s32.totalorder %s64, %s66
      %p73 = scmp.eq.s32.totalorder %s35, 1
      %p74 = por %p72, %p73
      %p75 = scmp.ne.s32.totalorder %s66, %s67
      %p76 = scmp.eq.s32.totalorder %s35, 0
      %p77 = por %p75, %p76
      %p78 = scmp.ne.s32.totalorder %s66, %s67
      %p79 = scmp.eq.s32.totalorder %s36, 1
      %p80 = por %p78, %p79
      %p82 = scmp.ne.s32.totalorder %s67, %s81
      %p83 = scmp.eq.s32.totalorder %s36, 0
      %p84 = por %p82, %p83
      %s86 = sadd.s32 %s85, 1
      %p89 = scmp.eq.s32.totalorder %s30, 1
      %p90 = scmp.ne.s32.totalorder %s85, %s87
      %p91 = scmp.eq.s32.totalorder %s30, 0
      %p92 = por %p90, %p91
      %p93 = scmp.ne.s32.totalorder %s85, %s87
      %p94 = scmp.eq.s32.totalorder %s35, 1
      %p95 = por %p93, %p94
      %p96 = scmp.ne.s32.totalorder %s87, %s88
      %p97 = scmp.eq.s32.totalorder %s35, 0
      %p98 = por %p96, %p97
      %p99 = scmp.ne.s32.totalorder %s87, %s88
      %p100 = scmp.eq.s32.totalorder %s36, 1
      %p101 = por %p99, %p100
      %p103 = scmp.ne.s32.totalorder %s88, %s102
      %p104 = scmp.eq.s32.totalorder %s36, 0
      %p105 = por %p103, %p104
      %s107 = sadd.s32 %s106, 1
      %p110 = scmp.eq.s32.totalorder %s30, 1
      %p111 = scmp.ne.s32.totalorder %s106, %s108
      %p112 = scmp.eq.s32.totalorder %s30, 0
      %p113 = por %p111, %p112
      %p114 = scmp.ne.s32.totalorder %s106, %s108
      %p115 = scmp.eq.s32.totalorder %s35, 1
      %p116 = por %p114, %p115
      %p117 = scmp.ne.s32.totalorder %s108, %s109
      %p118 = scmp.eq.s32.totalorder %s35, 0
      %p119 = por %p117, %p118
      %p120 = scmp.ne.s32.totalorder %s108, %s109
      %p121 = scmp.eq.s32.totalorder %s36, 1
      %p122 = por %p120, %p121
      %p124 = scmp.ne.s32.totalorder %s109, %s123
      %p125 = scmp.eq.s32.totalorder %s36, 0
      %p126 = por %p124, %p125
      %s128 = sadd.s32 %s127, 1
      %p131 = scmp.eq.s32.totalorder %s30, 1
      %p132 = scmp.ne.s32.totalorder %s127, %s129
      %p133 = scmp.eq.s32.totalorder %s30, 0
      %p134 = por %p132, %p133
      %p135 = scmp.ne.s32.totalorder %s127, %s129
      %p136 = scmp.eq.s32.totalorder %s35, 1
      %p137 = por %p135, %p136
      %p138 = scmp.ne.s32.totalorder %s129, %s130
      %p139 = scmp.eq.s32.totalorder %s35, 0
      %p140 = por %p138, %p139
      %p141 = scmp.ne.s32.totalorder %s129, %s130
      %p142 = scmp.eq.s32.totalorder %s36, 1
      %p143 = por %p141, %p142
      %p145 = scmp.ne.s32.totalorder %s130, %s144
      %p146 = scmp.eq.s32.totalorder %s36, 0
      %p147 = por %p145, %p146
      %s149 = sadd.s32 %s148, 1
      %p152 = scmp.eq.s32.totalorder %s30, 1
      %p153 = scmp.ne.s32.totalorder %s148, %s150
      %p154 = scmp.eq.s32.totalorder %s30, 0
      %p155 = por %p153, %p154
      %p156 = scmp.ne.s32.totalorder %s148, %s150
      %p157 = scmp.eq.s32.totalorder %s35, 1
      %p158 = por %p156, %p157
      %p159 = scmp.ne.s32.totalorder %s150, %s151
      %p160 = scmp.eq.s32.totalorder %s35, 0
      %p161 = por %p159, %p160
      %p162 = scmp.ne.s32.totalorder %s150, %s151
      %p163 = scmp.eq.s32.totalorder %s36, 1
      %p164 = por %p162, %p163
      %p166 = scmp.ne.s32.totalorder %s151, %s165
      %p167 = scmp.eq.s32.totalorder %s36, 0
      %p168 = por %p166, %p167
      %s170 = sadd.s32 %s169, 1
      %p173 = scmp.eq.s32.totalorder %s30, 1
      %p174 = scmp.ne.s32.totalorder %s169, %s171
      %p175 = scmp.eq.s32.totalorder %s30, 0
      %p176 = por %p174, %p175
      %p177 = scmp.ne.s32.totalorder %s169, %s171
      %p178 = scmp.eq.s32.totalorder %s35, 1
      %p179 = por %p177, %p178
      %p180 = scmp.ne.s32.totalorder %s171, %s172
      %p181 = scmp.eq.s32.totalorder %s35, 0
      %p182 = por %p180, %p181
      %p183 = scmp.ne.s32.totalorder %s171, %s172
      %p184 = scmp.eq.s32.totalorder %s36, 1
      %p185 = por %p183, %p184
      %p187 = scmp.ne.s32.totalorder %s172, %s186
      %p188 = scmp.eq.s32.totalorder %s36, 0
      %p189 = por %p187, %p188
      %s191 = sadd.s32 %s190, 1
      %p194 = scmp.eq.s32.totalorder %s30, 1
      %p195 = scmp.ne.s32.totalorder %s190, %s192
      %p196 = scmp.eq.s32.totalorder %s30, 0
      %p197 = por %p195, %p196
      %p198 = scmp.ne.s32.totalorder %s190, %s192
      %p199 = scmp.eq.s32.totalorder %s35, 1
      %p200 = por %p198, %p199
      %p201 = scmp.ne.s32.totalorder %s192, %s193
      %p202 = scmp.eq.s32.totalorder %s35, 0
      %p203 = por %p201, %p202
      %p204 = scmp.ne.s32.totalorder %s192, %s193
      %p205 = scmp.eq.s32.totalorder %s36, 1
      %p206 = por %p204, %p205
      %p208 = scmp.ne.s32.totalorder %s193, %s207
      %p209 = scmp.eq.s32.totalorder %s36, 0
      %p210 = por %p208, %p209
      %s212 = sadd.s32 %s211, 1
      %p215 = scmp.eq.s32.totalorder %s30, 1
      %p216 = scmp.ne.s32.totalorder %s211, %s213
      %p217 = scmp.eq.s32.totalorder %s30, 0
      %p218 = por %p216, %p217
      %p219 = scmp.ne.s32.totalorder %s211, %s213
      %p220 = scmp.eq.s32.totalorder %s35, 1
      %p221 = por %p219, %p220
      %p222 = scmp.ne.s32.totalorder %s213, %s214
      %p223 = scmp.eq.s32.totalorder %s35, 0
      %p224 = por %p222, %p223
      %p225 = scmp.ne.s32.totalorder %s213, %s214
      %p226 = scmp.eq.s32.totalorder %s36, 1
      %p227 = por %p225, %p226
      %p229 = scmp.ne.s32.totalorder %s214, %s228
      %p230 = scmp.eq.s32.totalorder %s36, 0
      %p231 = por %p229, %p230
      %s233 = sadd.s32 %s232, 1
      %p236 = scmp.eq.s32.totalorder %s30, 1
      %p237 = scmp.ne.s32.totalorder %s232, %s234
      %p238 = scmp.eq.s32.totalorder %s30, 0
      %p239 = por %p237, %p238
      %p240 = scmp.ne.s32.totalorder %s232, %s234
      %p241 = scmp.eq.s32.totalorder %s35, 1
      %p242 = por %p240, %p241
      %p243 = scmp.ne.s32.totalorder %s234, %s235
      %p244 = scmp.eq.s32.totalorder %s35, 0
      %p245 = por %p243, %p244
      %p246 = scmp.ne.s32.totalorder %s234, %s235
      %p247 = scmp.eq.s32.totalorder %s36, 1
      %p248 = por %p246, %p247
      %p250 = scmp.ne.s32.totalorder %s235, %s249
      %p251 = scmp.eq.s32.totalorder %s36, 0
      %p252 = por %p250, %p251
      %s254 = sadd.s32 %s253, 1
      %p257 = scmp.eq.s32.totalorder %s30, 1
      %p258 = scmp.ne.s32.totalorder %s253, %s255
      %p259 = scmp.eq.s32.totalorder %s30, 0
      %p260 = por %p258, %p259
      %p261 = scmp.ne.s32.totalorder %s253, %s255
      %p262 = scmp.eq.s32.totalorder %s35, 1
      %p263 = por %p261, %p262
      %p264 = scmp.ne.s32.totalorder %s255, %s256
      %p265 = scmp.eq.s32.totalorder %s35, 0
      %p266 = por %p264, %p265
      %p267 = scmp.ne.s32.totalorder %s255, %s256
      %p268 = scmp.eq.s32.totalorder %s36, 1
      %p269 = por %p267, %p268
      %p271 = scmp.ne.s32.totalorder %s256, %s270
      %p272 = scmp.eq.s32.totalorder %s36, 0
      %p273 = por %p271, %p272
      %s275 = sadd.s32 %s274, 1
      %p278 = scmp.eq.s32.totalorder %s30, 1
      %p279 = scmp.ne.s32.totalorder %s274, %s276
      %p280 = scmp.eq.s32.totalorder %s30, 0
      %p281 = por %p279, %p280
      %p282 = scmp.ne.s32.totalorder %s274, %s276
      %p283 = scmp.eq.s32.totalorder %s35, 1
      %p284 = por %p282, %p283
      %p285 = scmp.ne.s32.totalorder %s276, %s277
      %p286 = scmp.eq.s32.totalorder %s35, 0
      %p287 = por %p285, %p286
      %p288 = scmp.ne.s32.totalorder %s276, %s277
      %p289 = scmp.eq.s32.totalorder %s36, 1
      %p290 = por %p288, %p289
      %p292 = scmp.ne.s32.totalorder %s277, %s291
      %p293 = scmp.eq.s32.totalorder %s36, 0
      %p294 = por %p292, %p293
      %s295 = ssub.s32 %s30, %s37
      %p296 = scmp.eq.s32.totalorder %s295, 0
      %s298 = sadd.s32 %s297, 1
      %s299 = scalar_select %p296, %s297, %s298
      %p302 = pneg %p296
      %p303 = scmp.eq.s32.totalorder %s30, 1
      %p304 = por %p302, %p303
      %p305 = scmp.ne.s32.totalorder %s297, %s300
      %p306 = scmp.eq.s32.totalorder %s30, 0
      %p307 = por %p305, %p306
      %p308 = scmp.ne.s32.totalorder %s297, %s300
      %p309 = scmp.eq.s32.totalorder %s35, 1
      %p310 = por %p308, %p309
      %p311 = scmp.ne.s32.totalorder %s300, %s301
      %p312 = scmp.eq.s32.totalorder %s35, 0
      %p313 = por %p311, %p312
      %p314 = scmp.ne.s32.totalorder %s300, %s301
      %p315 = scmp.eq.s32.totalorder %s36, 1
      %p316 = por %p314, %p315
      %p318 = scmp.ne.s32.totalorder %s301, %s317
      %p319 = scmp.eq.s32.totalorder %s36, 0
      %p320 = por %p318, %p319
      %s321 = ssub.s32 %s30, %s37
      %p322 = scmp.eq.s32.totalorder %s321, 0
      %s324 = sadd.s32 %s323, 1
      %s325 = scalar_select %p322, %s323, %s324
      %p328 = pneg %p322
      %p329 = scmp.eq.s32.totalorder %s30, 1
      %p330 = por %p328, %p329
      %p331 = scmp.ne.s32.totalorder %s323, %s326
      %p332 = scmp.eq.s32.totalorder %s30, 0
      %p333 = por %p331, %p332
      %p334 = scmp.ne.s32.totalorder %s323, %s326
      %p335 = scmp.eq.s32.totalorder %s35, 1
      %p336 = por %p334, %p335
      %p337 = scmp.ne.s32.totalorder %s326, %s327
      %p338 = scmp.eq.s32.totalorder %s35, 0
      %p339 = por %p337, %p338
      %p340 = scmp.ne.s32.totalorder %s326, %s327
      %p341 = scmp.eq.s32.totalorder %s36, 1
      %p342 = por %p340, %p341
      %p344 = scmp.ne.s32.totalorder %s327, %s343
      %p345 = scmp.eq.s32.totalorder %s36, 0
      %p346 = por %p344, %p345
      %s347 = ssub.s32 %s30, %s37
      %p348 = scmp.eq.s32.totalorder %s347, 0
      %s350 = sadd.s32 %s349, 1
      %s351 = scalar_select %p348, %s349, %s350
      %p354 = pneg %p348
      %p355 = scmp.eq.s32.totalorder %s30, 1
      %p356 = por %p354, %p355
      %p357 = scmp.ne.s32.totalorder %s349, %s352
      %p358 = scmp.eq.s32.totalorder %s30, 0
      %p359 = por %p357, %p358
      %p360 = scmp.ne.s32.totalorder %s349, %s352
      %p361 = scmp.eq.s32.totalorder %s35, 1
      %p362 = por %p360, %p361
      %p363 = scmp.ne.s32.totalorder %s352, %s353
      %p364 = scmp.eq.s32.totalorder %s35, 0
      %p365 = por %p363, %p364
      %p366 = scmp.ne.s32.totalorder %s352, %s353
      %p367 = scmp.eq.s32.totalorder %s36, 1
      %p368 = por %p366, %p367
      %p370 = scmp.ne.s32.totalorder %s353, %s369
      %p371 = scmp.eq.s32.totalorder %s36, 0
      %p372 = por %p370, %p371
      %s373 = ssub.s32 %s30, %s37
      %p374 = scmp.eq.s32.totalorder %s373, 0
      %s376 = sadd.s32 %s375, 1
      %s377 = scalar_select %p374, %s375, %s376
      %p380 = pneg %p374
      %p381 = scmp.eq.s32.totalorder %s30, 1
      %p382 = por %p380, %p381
      %p383 = scmp.ne.s32.totalorder %s375, %s378
      %p384 = scmp.eq.s32.totalorder %s30, 0
      %p385 = por %p383, %p384
      %p386 = scmp.ne.s32.totalorder %s375, %s378
      %p387 = scmp.eq.s32.totalorder %s35, 1
      %p388 = por %p386, %p387
      %p389 = scmp.ne.s32.totalorder %s378, %s379
      %p390 = scmp.eq.s32.totalorder %s35, 0
      %p391 = por %p389, %p390
      %p392 = scmp.ne.s32.totalorder %s378, %s379
      %p393 = scmp.eq.s32.totalorder %s36, 1
      %p394 = por %p392, %p393
      %p396 = scmp.ne.s32.totalorder %s379, %s395
      %p397 = scmp.eq.s32.totalorder %s36, 0
      %p398 = por %p396, %p397
      %s399 = ssub.s32 %s30, %s37
      %p400 = scmp.eq.s32.totalorder %s399, 0
      %s402 = sadd.s32 %s401, 1
      %s403 = scalar_select %p400, %s401, %s402
      %p406 = pneg %p400
      %p407 = scmp.eq.s32.totalorder %s30, 1
      %p408 = por %p406, %p407
      %p409 = scmp.ne.s32.totalorder %s401, %s404
      %p410 = scmp.eq.s32.totalorder %s30, 0
      %p411 = por %p409, %p410
      %p412 = scmp.ne.s32.totalorder %s401, %s404
      %p413 = scmp.eq.s32.totalorder %s35, 1
      %p414 = por %p412, %p413
      %p415 = scmp.ne.s32.totalorder %s404, %s405
      %p416 = scmp.eq.s32.totalorder %s35, 0
      %p417 = por %p415, %p416
      %p418 = scmp.ne.s32.totalorder %s404, %s405
      %p419 = scmp.eq.s32.totalorder %s36, 1
      %p420 = por %p418, %p419
      %p422 = scmp.ne.s32.totalorder %s405, %s421
      %p423 = scmp.eq.s32.totalorder %s36, 0
      %p424 = por %p422, %p423
      %s425 = ssub.s32 %s30, %s37
      %p426 = scmp.eq.s32.totalorder %s425, 0
      %s428 = sadd.s32 %s427, 1
      %s429 = scalar_select %p426, %s427, %s428
      %p432 = pneg %p426
      %p433 = scmp.eq.s32.totalorder %s30, 1
      %p434 = por %p432, %p433
      %p435 = scmp.ne.s32.totalorder %s427, %s430
      %p436 = scmp.eq.s32.totalorder %s30, 0
      %p437 = por %p435, %p436
      %p438 = scmp.ne.s32.totalorder %s427, %s430
      %p439 = scmp.eq.s32.totalorder %s35, 1
      %p440 = por %p438, %p439
      %p441 = scmp.ne.s32.totalorder %s430, %s431
      %p442 = scmp.eq.s32.totalorder %s35, 0
      %p443 = por %p441, %p442
      %p444 = scmp.ne.s32.totalorder %s430, %s431
      %p445 = scmp.eq.s32.totalorder %s36, 1
      %p446 = por %p444, %p445
      %p448 = scmp.ne.s32.totalorder %s431, %s447
      %p449 = scmp.eq.s32.totalorder %s36, 0
      %p450 = por %p448, %p449
      %p451 = scmp.le.s32.totalorder 1, %s30
      %p452 = scmp.lt.s32.totalorder %s30, 3
      %p453 = pnand %p451, %p452
      %p454 = pneg %p453
      // Predicated region
      $region9: #{_lambda_.1} parent=5 // pred_check
        _
      $region10: #{_lambda_.1} parent=5 // pred_check_branch
        %456 = sbr.rel (%p453) target = $region12
      $region11: #{_lambda_.1} parent=5 // pred_region
        %s457 = ssub.s32 %s30, 1
        // Predicated region
        $region13: #{_lambda_.1} parent=11 // pred_check
          %p458 = pneg %p77
        $region14: #{_lambda_.1} parent=11 // pred_check_branch
          %460 = sbr.rel (%p458) target = $region16
        $region15: #{_lambda_.1} parent=11 // pred_region
          _
        $region16: #{_lambda_.1} parent=11 // pred_fallthru
          _
        // Predicated region
        $region17: #{_lambda_.1} parent=11 // pred_check
          %p461 = pneg %p98
        $region18: #{_lambda_.1} parent=11 // pred_check_branch
          %463 = sbr.rel (%p461) target = $region20
        $region19: #{_lambda_.1} parent=11 // pred_region
          _
        $region20: #{_lambda_.1} parent=11 // pred_fallthru
          _
        // Predicated region
        $region21: #{_lambda_.1} parent=11 // pred_check
          %p464 = pneg %p119
        $region22: #{_lambda_.1} parent=11 // pred_check_branch
          %466 = sbr.rel (%p464) target = $region24
        $region23: #{_lambda_.1} parent=11 // pred_region
          _
        $region24: #{_lambda_.1} parent=11 // pred_fallthru
          _
        // Predicated region
        $region25: #{_lambda_.1} parent=11 // pred_check
          %p467 = pneg %p140
        $region26: #{_lambda_.1} parent=11 // pred_check_branch
          %469 = sbr.rel (%p467) target = $region28
        $region27: #{_lambda_.1} parent=11 // pred_region
          _
        $region28: #{_lambda_.1} parent=11 // pred_fallthru
          _
        // Predicated region
        $region29: #{_lambda_.1} parent=11 // pred_check
          %p470 = pneg %p161
        $region30: #{_lambda_.1} parent=11 // pred_check_branch
          %472 = sbr.rel (%p470) target = $region32
        $region31: #{_lambda_.1} parent=11 // pred_region
          _
        $region32: #{_lambda_.1} parent=11 // pred_fallthru
          _
        // Predicated region
        $region33: #{_lambda_.1} parent=11 // pred_check
          %p473 = pneg %p182
        $region34: #{_lambda_.1} parent=11 // pred_check_branch
          %475 = sbr.rel (%p473) target = $region36
        $region35: #{_lambda_.1} parent=11 // pred_region
          _
        $region36: #{_lambda_.1} parent=11 // pred_fallthru
          _
        // Predicated region
        $region37: #{_lambda_.1} parent=11 // pred_check
          %p476 = pneg %p203
        $region38: #{_lambda_.1} parent=11 // pred_check_branch
          %478 = sbr.rel (%p476) target = $region40
        $region39: #{_lambda_.1} parent=11 // pred_region
          _
        $region40: #{_lambda_.1} parent=11 // pred_fallthru
          _
        // Predicated region
        $region41: #{_lambda_.1} parent=11 // pred_check
          %p479 = pneg %p224
        $region42: #{_lambda_.1} parent=11 // pred_check_branch
          %481 = sbr.rel (%p479) target = $region44
        $region43: #{_lambda_.1} parent=11 // pred_region
          _
        $region44: #{_lambda_.1} parent=11 // pred_fallthru
          _
        // Predicated region
        $region45: #{_lambda_.1} parent=11 // pred_check
          %p482 = pneg %p245
        $region46: #{_lambda_.1} parent=11 // pred_check_branch
          %484 = sbr.rel (%p482) target = $region48
        $region47: #{_lambda_.1} parent=11 // pred_region
          _
        $region48: #{_lambda_.1} parent=11 // pred_fallthru
          _
        // Predicated region
        $region49: #{_lambda_.1} parent=11 // pred_check
          %p485 = pneg %p266
        $region50: #{_lambda_.1} parent=11 // pred_check_branch
          %487 = sbr.rel (%p485) target = $region52
        $region51: #{_lambda_.1} parent=11 // pred_region
          _
        $region52: #{_lambda_.1} parent=11 // pred_fallthru
          _
        // Predicated region
        $region53: #{_lambda_.1} parent=11 // pred_check
          %p488 = pneg %p287
        $region54: #{_lambda_.1} parent=11 // pred_check_branch
          %490 = sbr.rel (%p488) target = $region56
        $region55: #{_lambda_.1} parent=11 // pred_region
          _
        $region56: #{_lambda_.1} parent=11 // pred_fallthru
          _
      $region12: #{_lambda_.1} parent=5 // pred_fallthru
        _
      %p491 = scmp.lt.s32.totalorder %s30, 2
      // Predicated region
      $region57: #{_lambda_.1} parent=5 // pred_check
        %p492 = pneg %p491
      $region58: #{_lambda_.1} parent=5 // pred_check_branch
        %494 = sbr.rel (%p492) target = $region60
      $region59: #{_lambda_.1} parent=5 // pred_region
        // Predicated region
        $region61: #{_lambda_.1} parent=59 // pred_check
          %p495 = pneg %p50
        $region62: #{_lambda_.1} parent=59 // pred_check_branch
          %497 = sbr.rel (%p495) target = $region64
        $region63: #{_lambda_.1} parent=59 // pred_region
          %s498 = smul.u32 64, %s30
          %p499 = scmp.lt.s32.totalorder %s498, 127
          %s500 = scalar_select %p499, %s498, 127
          %s501 = smul.addr %s500, 4
          %s502 = scalar_lea.vmem %s0, %s501
          %s503 = smul.u32 64, %s30
        $region64: #{_lambda_.1} parent=59 // pred_fallthru
          _
      $region60: #{_lambda_.1} parent=5 // pred_fallthru
        _
      %p504 = scmp.le.s32.totalorder 1, %s30
      %p505 = scmp.lt.s32.totalorder %s30, 3
      %p506 = pnand %p504, %p505
      %p507 = pneg %p506
      // Predicated region
      $region65: #{_lambda_.1} parent=5 // pred_check
        _
      $region66: #{_lambda_.1} parent=5 // pred_check_branch
        %509 = sbr.rel (%p506) target = $region68
      $region67: #{_lambda_.1} parent=5 // pred_region
        %s510 = ssub.s32 %s30, 1
        %s511 = smul.u32 64, %s35
        %p512 = scmp.lt.s32.totalorder %s511, 127
        %s513 = scalar_select %p512, %s511, 127
        %s514 = smul.addr %s513, 4
        %s515 = scalar_lea.vmem %s0, %s514
        %p516 = pneg %p56
        %p517 = pneg %p53
        %p518 = pneg %p77
        %p519 = pneg %p74
        %p520 = pneg %p98
        %p521 = pneg %p95
        %p522 = pneg %p119
        %p523 = pneg %p116
        %p524 = pneg %p140
        %p525 = pneg %p137
        %p526 = pneg %p161
        %p527 = pneg %p158
        %p528 = pneg %p182
        %p529 = pneg %p179
        %p530 = pneg %p203
        %p531 = pneg %p200
        %p532 = pneg %p224
        %p533 = pneg %p221
        %p534 = pneg %p245
        %p535 = pneg %p242
        %p536 = pneg %p266
        %p537 = pneg %p263
        %p538 = pneg %p287
        %p539 = pneg %p284
        %p540 = pneg %p313
        %p541 = pneg %p310
        %s542 = sand.u32 %s300, 1
        %s543 = scalar_lea.sflag [#allocation3], %s542
        %s544 = sand.u32 %s300, 1
        %s545 = smul.addr %s544, 512
        %s546 = scalar_lea.vmem [#allocation2], %s545
        %p547 = pneg %p339
        %p548 = pneg %p336
        %p549 = scmp.lt.s32.totalorder %s35, 1
        %s550 = scalar_select %p549, %s35, 1
        %s551 = smul.addr %s550, 8
        %s552 = scalar_lea.vmem %s13, %s551
        %p553 = pneg %p365
        %p554 = pneg %p362
        %p555 = scmp.lt.s32.totalorder %s35, 1
        %s556 = scalar_select %p555, %s35, 1
        %s557 = scalar_lea.vmem %s14, %s556
        %p558 = pneg %p391
        %p559 = pneg %p388
        %p560 = scmp.lt.s32.totalorder %s35, 1
        %s561 = scalar_select %p560, %s35, 1
        %s562 = scalar_lea.vmem %s15, %s561
        %p563 = pneg %p417
        %p564 = pneg %p414
        %p565 = scmp.lt.s32.totalorder %s35, 1
        %s566 = scalar_select %p565, %s35, 1
        %s567 = smul.addr %s566, 8
        %s568 = scalar_lea.vmem %s16, %s567
        %p569 = pneg %p443
        %p570 = pneg %p440
        %s571 = sand.u32 %s430, 1
        %s572 = scalar_lea.sflag [#allocation5], %s571
        %s573 = sand.u32 %s430, 1
        %s574 = scalar_lea.vmem [#allocation4], %s573
        %s575 = smul.u32 64, %s35
        %p576 = scmp.lt.s32.totalorder %s575, 127
        %s577 = scalar_select %p576, %s575, 127
        %s578 = smul.addr %s577, 4
        %s579 = scalar_lea.vmem %s0, %s578
        %s580 = smul.u32 64, %s35
        %s581 = smul.u32 64, %s35
        %p582 = scmp.lt.s32.totalorder %s35, 1
        %s583 = scalar_select %p582, %s35, 1
        %s584 = smul.addr %s583, 8
        %s585 = scalar_lea.vmem %s13, %s584
        %p586 = scmp.lt.s32.totalorder %s35, 1
        %s587 = scalar_select %p586, %s35, 1
        %s588 = scalar_lea.vmem %s14, %s587
        %p589 = scmp.lt.s32.totalorder %s35, 1
        %s590 = scalar_select %p589, %s35, 1
        %s591 = scalar_lea.vmem %s15, %s590
        %p592 = scmp.lt.s32.totalorder %s35, 1
        %s593 = scalar_select %p592, %s35, 1
        %s594 = smul.addr %s593, 8
        %s595 = scalar_lea.vmem %s16, %s594
        %v597 = vld [vmem:[%s579] sm:$0xf]
        %v598 = vld [vmem:[%s579 + $0x4] sm:$0xf]
        %v599 = vld [vmem:[%s579 + $0x8] sm:$0xf]
        %v600 = vld [vmem:[%s579 + $0xc] sm:$0xf]
        %v601 = vld [vmem:[%s579 + $0x10] sm:$0xf]
        %v602 = vld [vmem:[%s579 + $0x14] sm:$0xf]
        %v603 = vld [vmem:[%s579 + $0x18] sm:$0xf]
        %v604 = vld [vmem:[%s579 + $0x1c] sm:$0xf]
        %v605 = vld [vmem:[%s579 + $0x20] sm:$0xf]
        %v606 = vld [vmem:[%s579 + $0x24] sm:$0xf]
        %v607 = vld [vmem:[%s579 + $0x28] sm:$0xf]
        %v608 = vld [vmem:[%s579 + $0x2c] sm:$0xf]
        %v609 = vld [vmem:[%s579 + $0x30] sm:$0xf]
        %v610 = vld [vmem:[%s579 + $0x34] sm:$0xf]
        %v611 = vld [vmem:[%s579 + $0x38] sm:$0xf]
        %v612 = vld [vmem:[%s579 + $0x3c] sm:$0xf]
        %v613 = vld [vmem:[%s579 + $0x40] sm:$0xf]
        %v614 = vld [vmem:[%s579 + $0x44] sm:$0xf]
        %v615 = vld [vmem:[%s579 + $0x48] sm:$0xf]
        %v616 = vld [vmem:[%s579 + $0x4c] sm:$0xf]
        %v617 = vld [vmem:[%s579 + $0x50] sm:$0xf]
        %v618 = vld [vmem:[%s579 + $0x54] sm:$0xf]
        %v619 = vld [vmem:[%s579 + $0x58] sm:$0xf]
        %v620 = vld [vmem:[%s579 + $0x5c] sm:$0xf]
        %v621 = vld [vmem:[%s579 + $0x60] sm:$0xf]
        %v622 = vld [vmem:[%s579 + $0x64] sm:$0xf]
        %v623 = vld [vmem:[%s579 + $0x68] sm:$0xf]
        %v624 = vld [vmem:[%s579 + $0x6c] sm:$0xf]
        %v625 = vld [vmem:[%s579 + $0x70] sm:$0xf]
        %v626 = vld [vmem:[%s579 + $0x74] sm:$0xf]
        %v627 = vld [vmem:[%s579 + $0x78] sm:$0xf]
        %v628 = vld [vmem:[%s579 + $0x7c] sm:$0xf]
        %v629 = vld [vmem:[%s579 + $0x80] sm:$0xf]
        %v630 = vld [vmem:[%s579 + $0x84] sm:$0xf]
        %v631 = vld [vmem:[%s579 + $0x88] sm:$0xf]
        %v632 = vld [vmem:[%s579 + $0x8c] sm:$0xf]
        %v633 = vld [vmem:[%s579 + $0x90] sm:$0xf]
        %v634 = vld [vmem:[%s579 + $0x94] sm:$0xf]
        %v635 = vld [vmem:[%s579 + $0x98] sm:$0xf]
        %v636 = vld [vmem:[%s579 + $0x9c] sm:$0xf]
        %v637 = vld [vmem:[%s579 + $0xa0] sm:$0xf]
        %v638 = vld [vmem:[%s579 + $0xa4] sm:$0xf]
        %v639 = vld [vmem:[%s579 + $0xa8] sm:$0xf]
        %v640 = vld [vmem:[%s579 + $0xac] sm:$0xf]
        %v641 = vld [vmem:[%s579 + $0xb0] sm:$0xf]
        %v642 = vld [vmem:[%s579 + $0xb4] sm:$0xf]
        %v643 = vld [vmem:[%s579 + $0xb8] sm:$0xf]
        %v644 = vld [vmem:[%s579 + $0xbc] sm:$0xf]
        %v645 = vld [vmem:[%s579 + $0xc0] sm:$0xf]
        %v646 = vld [vmem:[%s579 + $0xc4] sm:$0xf]
        %v647 = vld [vmem:[%s579 + $0xc8] sm:$0xf]
        %v648 = vld [vmem:[%s579 + $0xcc] sm:$0xf]
        %v649 = vld [vmem:[%s579 + $0xd0] sm:$0xf]
        %v650 = vld [vmem:[%s579 + $0xd4] sm:$0xf]
        %v651 = vld [vmem:[%s579 + $0xd8] sm:$0xf]
        %v652 = vld [vmem:[%s579 + $0xdc] sm:$0xf]
        %v653 = vld [vmem:[%s579 + $0xe0] sm:$0xf]
        %v654 = vld [vmem:[%s579 + $0xe4] sm:$0xf]
        %v655 = vld [vmem:[%s579 + $0xe8] sm:$0xf]
        %v656 = vld [vmem:[%s579 + $0xec] sm:$0xf]
        %v657 = vld [vmem:[%s579 + $0xf0] sm:$0xf]
        %v658 = vld [vmem:[%s579 + $0xf4] sm:$0xf]
        %v659 = vld [vmem:[%s579 + $0xf8] sm:$0xf]
        %v660 = vld [vmem:[%s579 + $0xfc] sm:$0xf]
        %v661 = vld [vmem:[%s1] sm:$0xf]
        %v662 = vld [vmem:[%s1 + $0x4] sm:$0xf]
        %v663 = vld [vmem:[%s1 + $0x8] sm:$0xf]
        %v664 = vld [vmem:[%s1 + $0xc] sm:$0xf]
        %v665 = vld [vmem:[%s1 + $0x10] sm:$0xf]
        %v666 = vld [vmem:[%s1 + $0x14] sm:$0xf]
        %v667 = vld [vmem:[%s1 + $0x18] sm:$0xf]
        %v668 = vld [vmem:[%s1 + $0x1c] sm:$0xf]
        %v669 = vld [vmem:[%s1 + $0x20] sm:$0xf]
        %v670 = vld [vmem:[%s1 + $0x24] sm:$0xf]
        %v671 = vld [vmem:[%s1 + $0x28] sm:$0xf]
        %v672 = vld [vmem:[%s1 + $0x2c] sm:$0xf]
        %v673 = vld [vmem:[%s1 + $0x30] sm:$0xf]
        %v674 = vld [vmem:[%s1 + $0x34] sm:$0xf]
        %v675 = vld [vmem:[%s1 + $0x38] sm:$0xf]
        %v676 = vld [vmem:[%s1 + $0x3c] sm:$0xf]
        %v677 = vld [vmem:[%s2] sm:$0x1]
        %v679 = vlaneseq
        %v680 = vshrl.u32 %v679, 7
        %v681 = vsub.s32 0, %v680
        %v682 = vrot.slane %v677, %v681
        %v748 = vunpack.c.l.b16 %v597
        %v749 = vunpack.c.l.b16 %v598
        %v750 = vunpack.c.l.b16 %v599
        %v751 = vunpack.c.l.b16 %v600
        %v752 = vunpack.c.l.b16 %v601
        %v753 = vunpack.c.l.b16 %v602
        %v754 = vunpack.c.l.b16 %v603
        %v755 = vunpack.c.l.b16 %v604
        %v756 = vunpack.c.l.b16 %v605
        %v757 = vunpack.c.l.b16 %v606
        %v758 = vunpack.c.l.b16 %v607
        %v759 = vunpack.c.l.b16 %v608
        %v760 = vunpack.c.l.b16 %v609
        %v761 = vunpack.c.l.b16 %v610
        %v762 = vunpack.c.l.b16 %v611
        %v763 = vunpack.c.l.b16 %v612
        %v764 = vunpack.c.l.b16 %v613
        %v765 = vunpack.c.l.b16 %v614
        %v766 = vunpack.c.l.b16 %v615
        %v767 = vunpack.c.l.b16 %v616
        %v768 = vunpack.c.l.b16 %v617
        %v769 = vunpack.c.l.b16 %v618
        %v770 = vunpack.c.l.b16 %v619
        %v771 = vunpack.c.l.b16 %v620
        %v772 = vunpack.c.l.b16 %v621
        %v773 = vunpack.c.l.b16 %v622
        %v774 = vunpack.c.l.b16 %v623
        %v775 = vunpack.c.l.b16 %v624
        %v776 = vunpack.c.l.b16 %v625
        %v777 = vunpack.c.l.b16 %v626
        %v778 = vunpack.c.l.b16 %v627
        %v779 = vunpack.c.l.b16 %v628
        %v780 = vunpack.c.l.b16 %v629
        %v781 = vunpack.c.l.b16 %v630
        %v782 = vunpack.c.l.b16 %v631
        %v783 = vunpack.c.l.b16 %v632
        %v784 = vunpack.c.l.b16 %v633
        %v785 = vunpack.c.l.b16 %v634
        %v786 = vunpack.c.l.b16 %v635
        %v787 = vunpack.c.l.b16 %v636
        %v788 = vunpack.c.l.b16 %v637
        %v789 = vunpack.c.l.b16 %v638
        %v790 = vunpack.c.l.b16 %v639
        %v791 = vunpack.c.l.b16 %v640
        %v792 = vunpack.c.l.b16 %v641
        %v793 = vunpack.c.l.b16 %v642
        %v794 = vunpack.c.l.b16 %v643
        %v795 = vunpack.c.l.b16 %v644
        %v796 = vunpack.c.l.b16 %v645
        %v797 = vunpack.c.l.b16 %v646
        %v798 = vunpack.c.l.b16 %v647
        %v799 = vunpack.c.l.b16 %v648
        %v800 = vunpack.c.l.b16 %v649
        %v801 = vunpack.c.l.b16 %v650
        %v802 = vunpack.c.l.b16 %v651
        %v803 = vunpack.c.l.b16 %v652
        %v804 = vunpack.c.l.b16 %v653
        %v805 = vunpack.c.l.b16 %v654
        %v806 = vunpack.c.l.b16 %v655
        %v807 = vunpack.c.l.b16 %v656
        %v808 = vunpack.c.l.b16 %v657
        %v809 = vunpack.c.l.b16 %v658
        %v810 = vunpack.c.l.b16 %v659
        %v811 = vunpack.c.l.b16 %v660
        %v812 = vpack.c.b16 %v749, %v748
        %v813 = vpack.c.b16 %v751, %v750
        %v814 = vpack.c.b16 %v753, %v752
        %v815 = vpack.c.b16 %v755, %v754
        %v816 = vpack.c.b16 %v757, %v756
        %v817 = vpack.c.b16 %v759, %v758
        %v818 = vpack.c.b16 %v761, %v760
        %v819 = vpack.c.b16 %v763, %v762
        %v820 = vpack.c.b16 %v765, %v764
        %v821 = vpack.c.b16 %v767, %v766
        %v822 = vpack.c.b16 %v769, %v768
        %v823 = vpack.c.b16 %v771, %v770
        %v824 = vpack.c.b16 %v773, %v772
        %v825 = vpack.c.b16 %v775, %v774
        %v826 = vpack.c.b16 %v777, %v776
        %v827 = vpack.c.b16 %v779, %v778
        %v828 = vpack.c.b16 %v781, %v780
        %v829 = vpack.c.b16 %v783, %v782
        %v830 = vpack.c.b16 %v785, %v784
        %v831 = vpack.c.b16 %v787, %v786
        %v832 = vpack.c.b16 %v789, %v788
        %v833 = vpack.c.b16 %v791, %v790
        %v834 = vpack.c.b16 %v793, %v792
        %v835 = vpack.c.b16 %v795, %v794
        %v836 = vpack.c.b16 %v797, %v796
        %v837 = vpack.c.b16 %v799, %v798
        %v838 = vpack.c.b16 %v801, %v800
        %v839 = vpack.c.b16 %v803, %v802
        %v840 = vpack.c.b16 %v805, %v804
        %v841 = vpack.c.b16 %v807, %v806
        %v842 = vpack.c.b16 %v809, %v808
        %v843 = vpack.c.b16 %v811, %v810
        %v892 = vunpack.c.l.b16 %v661
        %v893 = vunpack.c.l.b16 %v662
        %v894 = vunpack.c.l.b16 %v663
        %v895 = vunpack.c.l.b16 %v664
        %v896 = vunpack.c.l.b16 %v665
        %v897 = vunpack.c.l.b16 %v666
        %v898 = vunpack.c.l.b16 %v667
        %v899 = vunpack.c.l.b16 %v668
        %v900 = vunpack.c.l.b16 %v669
        %v901 = vunpack.c.l.b16 %v670
        %v902 = vunpack.c.l.b16 %v671
        %v903 = vunpack.c.l.b16 %v672
        %v904 = vunpack.c.l.b16 %v673
        %v905 = vunpack.c.l.b16 %v674
        %v906 = vunpack.c.l.b16 %v675
        %v907 = vunpack.c.l.b16 %v676
        %v908 = vpack.c.b16 %v893, %v892
        %v909 = vpack.c.b16 %v895, %v894
        %v910 = vpack.c.b16 %v897, %v896
        %v911 = vpack.c.b16 %v899, %v898
        %v912 = vpack.c.b16 %v901, %v900
        %v913 = vpack.c.b16 %v903, %v902
        %v914 = vpack.c.b16 %v905, %v904
        %v915 = vpack.c.b16 %v907, %v906
        %924 = vmatprep.subr.bf16.mxu0 0
        %925 = vmatpush1.bf16.msra.mxu0 %v908
        %926 = vmatprep.subr.bf16.mxu0 0
        %927 = vmatpush1.bf16.msra.mxu0 %v909
        %928 = vmatprep.subr.bf16.mxu0 0
        %929 = vmatpush1.bf16.msra.mxu0 %v910
        %930 = vmatprep.subr.bf16.mxu0 0
        %931 = vmatpush1.bf16.msra.mxu0 %v911
        %932 = vmatprep.subr.bf16.mxu0 0
        %933 = vmatpush1.bf16.msra.mxu0 %v912
        %934 = vmatprep.subr.bf16.mxu0 0
        %935 = vmatpush1.bf16.msra.mxu0 %v913
        %936 = vmatprep.subr.bf16.mxu0 0
        %937 = vmatpush1.bf16.msra.mxu0 %v914
        %938 = vmatprep.subr.bf16.mxu0 0
        %939 = vmatpush1.bf16.msra.mxu0 %v915
        %940 = vmatprep.subr.bf16.mxu0 0
        %941 = vmatpush1.bf16.msra.mxu0 0
        %942 = vmatprep.subr.bf16.mxu0 0
        %943 = vmatpush1.bf16.msra.mxu0 0
        %944 = vmatprep.subr.bf16.mxu0 0
        %945 = vmatpush1.bf16.msra.mxu0 0
        %946 = vmatprep.subr.bf16.mxu0 0
        %947 = vmatpush1.bf16.msra.mxu0 0
        %948 = vmatprep.subr.bf16.mxu0 0
        %949 = vmatpush1.bf16.msra.mxu0 0
        %950 = vmatprep.subr.bf16.mxu0 0
        %951 = vmatpush1.bf16.msra.mxu0 0
        %952 = vmatprep.subr.bf16.mxu0 0
        %953 = vmatpush1.bf16.msra.mxu0 0
        %954 = vmatprep.subr.bf16.mxu0 0
        %955 = vmatpush1.bf16.msra.mxu0 0
        %956 = vmatprep.mubr.bf16.mxu0 0
        %957 = vmatmul.mubr.bf16.gmra.mrb[0].mxu0 %v812
        %v958 = vpop.f32.mrb[0].mxu0
        %v959 = vadd.f32 %v682, %v958
        %v960 = vpop.f32.mrb[0].mxu0
        %v961 = vpop.f32.mrb[0].mxu0
        %v962 = vadd.f32 %v682, %v961
        %v963 = vpop.f32.mrb[0].mxu0
        %964 = vmatprep.mubr.bf16.mxu0 0
        %965 = vmatmul.mubr.bf16.gmra.mrb[0].mxu0 %v813
        %v966 = vpop.f32.mrb[0].mxu0
        %v967 = vadd.f32 %v682, %v966
        %v968 = vpop.f32.mrb[0].mxu0
        %v969 = vpop.f32.mrb[0].mxu0
        %v970 = vadd.f32 %v682, %v969
        %v971 = vpop.f32.mrb[0].mxu0
        %972 = vmatprep.mubr.bf16.mxu0 0
        %973 = vmatmul.mubr.bf16.gmra.mrb[0].mxu0 %v814
        %v974 = vpop.f32.mrb[0].mxu0
        %v975 = vadd.f32 %v682, %v974
        %v976 = vpop.f32.mrb[0].mxu0
        %v977 = vpop.f32.mrb[0].mxu0
        %v978 = vadd.f32 %v682, %v977
        %v979 = vpop.f32.mrb[0].mxu0
        %980 = vmatprep.mubr.bf16.mxu0 0
        %981 = vmatmul.mubr.bf16.gmra.mrb[0].mxu0 %v815
        %v982 = vpop.f32.mrb[0].mxu0
        %v983 = vadd.f32 %v682, %v982
        %v984 = vpop.f32.mrb[0].mxu0
        %v985 = vpop.f32.mrb[0].mxu0
        %v986 = vadd.f32 %v682, %v985
        %v987 = vpop.f32.mrb[0].mxu0
        %988 = vmatprep.mubr.bf16.mxu0 0
        %989 = vmatmul.mubr.bf16.gmra.mrb[0].mxu0 %v816
        %v990 = vpop.f32.mrb[0].mxu0
        %v991 = vadd.f32 %v682, %v990
        %v992 = vpop.f32.mrb[0].mxu0
        %v993 = vpop.f32.mrb[0].mxu0
        %v994 = vadd.f32 %v682, %v993
        %v995 = vpop.f32.mrb[0].mxu0
        %996 = vmatprep.mubr.bf16.mxu0 0
        %997 = vmatmul.mubr.bf16.gmra.mrb[0].mxu0 %v817
        %v998 = vpop.f32.mrb[0].mxu0
        %v999 = vadd.f32 %v682, %v998
        %v1000 = vpop.f32.mrb[0].mxu0
        %v1001 = vpop.f32.mrb[0].mxu0
        %v1002 = vadd.f32 %v682, %v1001
        %v1003 = vpop.f32.mrb[0].mxu0
        %1004 = vmatprep.mubr.bf16.mxu0 0
        %1005 = vmatmul.mubr.bf16.gmra.mrb[0].mxu0 %v818
        %v1006 = vpop.f32.mrb[0].mxu0
        %v1007 = vadd.f32 %v682, %v1006
        %v1008 = vpop.f32.mrb[0].mxu0
        %v1009 = vpop.f32.mrb[0].mxu0
        %v1010 = vadd.f32 %v682, %v1009
        %v1011 = vpop.f32.mrb[0].mxu0
        %1012 = vmatprep.mubr.bf16.mxu0 0
        %1013 = vmatmul.mubr.bf16.gmra.mrb[0].mxu0 %v819
        %v1014 = vpop.f32.mrb[0].mxu0
        %v1015 = vadd.f32 %v682, %v1014
        %v1016 = vpop.f32.mrb[0].mxu0
        %v1017 = vpop.f32.mrb[0].mxu0
        %v1018 = vadd.f32 %v682, %v1017
        %v1019 = vpop.f32.mrb[0].mxu0
        %1020 = vmatprep.mubr.bf16.mxu0 0
        %1021 = vmatmul.mubr.bf16.gmra.mrb[0].mxu0 %v820
        %v1022 = vpop.f32.mrb[0].mxu0
        %v1023 = vadd.f32 %v682, %v1022
        %v1024 = vpop.f32.mrb[0].mxu0
        %v1025 = vpop.f32.mrb[0].mxu0
        %v1026 = vadd.f32 %v682, %v1025
        %v1027 = vpop.f32.mrb[0].mxu0
        %1028 = vmatprep.mubr.bf16.mxu0 0
        %1029 = vmatmul.mubr.bf16.gmra.mrb[0].mxu0 %v821
        %v1030 = vpop.f32.mrb[0].mxu0
        %v1031 = vadd.f32 %v682, %v1030
        %v1032 = vpop.f32.mrb[0].mxu0
        %v1033 = vpop.f32.mrb[0].mxu0
        %v1034 = vadd.f32 %v682, %v1033
        %v1035 = vpop.f32.mrb[0].mxu0
        %1036 = vmatprep.mubr.bf16.mxu0 0
        %1037 = vmatmul.mubr.bf16.gmra.mrb[0].mxu0 %v822
        %v1038 = vpop.f32.mrb[0].mxu0
        %v1039 = vadd.f32 %v682, %v1038
        %v1040 = vpop.f32.mrb[0].mxu0
        %v1041 = vpop.f32.mrb[0].mxu0
        %v1042 = vadd.f32 %v682, %v1041
        %v1043 = vpop.f32.mrb[0].mxu0
        %1044 = vmatprep.mubr.bf16.mxu0 0
        %1045 = vmatmul.mubr.bf16.gmra.mrb[0].mxu0 %v823
        %v1046 = vpop.f32.mrb[0].mxu0
        %v1047 = vadd.f32 %v682, %v1046
        %v1048 = vpop.f32.mrb[0].mxu0
        %v1049 = vpop.f32.mrb[0].mxu0
        %v1050 = vadd.f32 %v682, %v1049
        %v1051 = vpop.f32.mrb[0].mxu0
        %1052 = vmatprep.mubr.bf16.mxu0 0
        %1053 = vmatmul.mubr.bf16.gmra.mrb[0].mxu0 %v824
        %v1054 = vpop.f32.mrb[0].mxu0
        %v1055 = vadd.f32 %v682, %v1054
        %v1056 = vpop.f32.mrb[0].mxu0
        %v1057 = vpop.f32.mrb[0].mxu0
        %v1058 = vadd.f32 %v682, %v1057
        %v1059 = vpop.f32.mrb[0].mxu0
        %1060 = vmatprep.mubr.bf16.mxu0 0
        %1061 = vmatmul.mubr.bf16.gmra.mrb[0].mxu0 %v825
        %v1062 = vpop.f32.mrb[0].mxu0
        %v1063 = vadd.f32 %v682, %v1062
        %v1064 = vpop.f32.mrb[0].mxu0
        %v1065 = vpop.f32.mrb[0].mxu0
        %v1066 = vadd.f32 %v682, %v1065
        %v1067 = vpop.f32.mrb[0].mxu0
        %1068 = vmatprep.mubr.bf16.mxu0 0
        %1069 = vmatmul.mubr.bf16.gmra.mrb[0].mxu0 %v826
        %v1070 = vpop.f32.mrb[0].mxu0
        %v1071 = vadd.f32 %v682, %v1070
        %v1072 = vpop.f32.mrb[0].mxu0
        %v1073 = vpop.f32.mrb[0].mxu0
        %v1074 = vadd.f32 %v682, %v1073
        %v1075 = vpop.f32.mrb[0].mxu0
        %1076 = vmatprep.mubr.bf16.mxu0 0
        %1077 = vmatmul.mubr.bf16.gmra.mrb[0].mxu0 %v827
        %v1078 = vpop.f32.mrb[0].mxu0
        %v1079 = vadd.f32 %v682, %v1078
        %v1080 = vpop.f32.mrb[0].mxu0
        %v1081 = vpop.f32.mrb[0].mxu0
        %v1082 = vadd.f32 %v682, %v1081
        %v1083 = vpop.f32.mrb[0].mxu0
        %1084 = vmatprep.mubr.bf16.mxu0 0
        %1085 = vmatmul.mubr.bf16.gmra.mrb[0].mxu0 %v828
        %v1086 = vpop.f32.mrb[0].mxu0
        %v1087 = vadd.f32 %v682, %v1086
        %v1088 = vpop.f32.mrb[0].mxu0
        %v1089 = vpop.f32.mrb[0].mxu0
        %v1090 = vadd.f32 %v682, %v1089
        %v1091 = vpop.f32.mrb[0].mxu0
        %1092 = vmatprep.mubr.bf16.mxu0 0
        %1093 = vmatmul.mubr.bf16.gmra.mrb[0].mxu0 %v829
        %v1094 = vpop.f32.mrb[0].mxu0
        %v1095 = vadd.f32 %v682, %v1094
        %v1096 = vpop.f32.mrb[0].mxu0
        %v1097 = vpop.f32.mrb[0].mxu0
        %v1098 = vadd.f32 %v682, %v1097
        %v1099 = vpop.f32.mrb[0].mxu0
        %1100 = vmatprep.mubr.bf16.mxu0 0
        %1101 = vmatmul.mubr.bf16.gmra.mrb[0].mxu0 %v830
        %v1102 = vpop.f32.mrb[0].mxu0
        %v1103 = vadd.f32 %v682, %v1102
        %v1104 = vpop.f32.mrb[0].mxu0
        %v1105 = vpop.f32.mrb[0].mxu0
        %v1106 = vadd.f32 %v682, %v1105
        %v1107 = vpop.f32.mrb[0].mxu0
        %1108 = vmatprep.mubr.bf16.mxu0 0
        %1109 = vmatmul.mubr.bf16.gmra.mrb[0].mxu0 %v831
        %v1110 = vpop.f32.mrb[0].mxu0
        %v1111 = vadd.f32 %v682, %v1110
        %v1112 = vpop.f32.mrb[0].mxu0
        %v1113 = vpop.f32.mrb[0].mxu0
        %v1114 = vadd.f32 %v682, %v1113
        %v1115 = vpop.f32.mrb[0].mxu0
        %1116 = vmatprep.mubr.bf16.mxu0 0
        %1117 = vmatmul.mubr.bf16.gmra.mrb[0].mxu0 %v832
        %v1118 = vpop.f32.mrb[0].mxu0
        %v1119 = vadd.f32 %v682, %v1118
        %v1120 = vpop.f32.mrb[0].mxu0
        %v1121 = vpop.f32.mrb[0].mxu0
        %v1122 = vadd.f32 %v682, %v1121
        %v1123 = vpop.f32.mrb[0].mxu0
        %1124 = vmatprep.mubr.bf16.mxu0 0
        %1125 = vmatmul.mubr.bf16.gmra.mrb[0].mxu0 %v833
        %v1126 = vpop.f32.mrb[0].mxu0
        %v1127 = vadd.f32 %v682, %v1126
        %v1128 = vpop.f32.mrb[0].mxu0
        %v1129 = vpop.f32.mrb[0].mxu0
        %v1130 = vadd.f32 %v682, %v1129
        %v1131 = vpop.f32.mrb[0].mxu0
        %1132 = vmatprep.mubr.bf16.mxu0 0
        %1133 = vmatmul.mubr.bf16.gmra.mrb[0].mxu0 %v834
        %v1134 = vpop.f32.mrb[0].mxu0
        %v1135 = vadd.f32 %v682, %v1134
        %v1136 = vpop.f32.mrb[0].mxu0
        %v1137 = vpop.f32.mrb[0].mxu0
        %v1138 = vadd.f32 %v682, %v1137
        %v1139 = vpop.f32.mrb[0].mxu0
        %1140 = vmatprep.mubr.bf16.mxu0 0
        %1141 = vmatmul.mubr.bf16.gmra.mrb[0].mxu0 %v835
        %v1142 = vpop.f32.mrb[0].mxu0
        %v1143 = vadd.f32 %v682, %v1142
        %v1144 = vpop.f32.mrb[0].mxu0
        %v1145 = vpop.f32.mrb[0].mxu0
        %v1146 = vadd.f32 %v682, %v1145
        %v1147 = vpop.f32.mrb[0].mxu0
        %1148 = vmatprep.mubr.bf16.mxu0 0
        %1149 = vmatmul.mubr.bf16.gmra.mrb[0].mxu0 %v836
        %v1150 = vpop.f32.mrb[0].mxu0
        %v1151 = vadd.f32 %v682, %v1150
        %v1152 = vpop.f32.mrb[0].mxu0
        %v1153 = vpop.f32.mrb[0].mxu0
        %v1154 = vadd.f32 %v682, %v1153
        %v1155 = vpop.f32.mrb[0].mxu0
        %1156 = vmatprep.mubr.bf16.mxu0 0
        %1157 = vmatmul.mubr.bf16.gmra.mrb[0].mxu0 %v837
        %v1158 = vpop.f32.mrb[0].mxu0
        %v1159 = vadd.f32 %v682, %v1158
        %v1160 = vpop.f32.mrb[0].mxu0
        %v1161 = vpop.f32.mrb[0].mxu0
        %v1162 = vadd.f32 %v682, %v1161
        %v1163 = vpop.f32.mrb[0].mxu0
        %1164 = vmatprep.mubr.bf16.mxu0 0
        %1165 = vmatmul.mubr.bf16.gmra.mrb[0].mxu0 %v838
        %v1166 = vpop.f32.mrb[0].mxu0
        %v1167 = vadd.f32 %v682, %v1166
        %v1168 = vpop.f32.mrb[0].mxu0
        %v1169 = vpop.f32.mrb[0].mxu0
        %v1170 = vadd.f32 %v682, %v1169
        %v1171 = vpop.f32.mrb[0].mxu0
        %1172 = vmatprep.mubr.bf16.mxu0 0
        %1173 = vmatmul.mubr.bf16.gmra.mrb[0].mxu0 %v839
        %v1174 = vpop.f32.mrb[0].mxu0
        %v1175 = vadd.f32 %v682, %v1174
        %v1176 = vpop.f32.mrb[0].mxu0
        %v1177 = vpop.f32.mrb[0].mxu0
        %v1178 = vadd.f32 %v682, %v1177
        %v1179 = vpop.f32.mrb[0].mxu0
        %1180 = vmatprep.mubr.bf16.mxu0 0
        %1181 = vmatmul.mubr.bf16.gmra.mrb[0].mxu0 %v840
        %v1182 = vpop.f32.mrb[0].mxu0
        %v1183 = vadd.f32 %v682, %v1182
        %v1184 = vpop.f32.mrb[0].mxu0
        %v1185 = vpop.f32.mrb[0].mxu0
        %v1186 = vadd.f32 %v682, %v1185
        %v1187 = vpop.f32.mrb[0].mxu0
        %1188 = vmatprep.mubr.bf16.mxu0 0
        %1189 = vmatmul.mubr.bf16.gmra.mrb[0].mxu0 %v841
        %v1190 = vpop.f32.mrb[0].mxu0
        %v1191 = vadd.f32 %v682, %v1190
        %v1192 = vpop.f32.mrb[0].mxu0
        %v1193 = vpop.f32.mrb[0].mxu0
        %v1194 = vadd.f32 %v682, %v1193
        %v1195 = vpop.f32.mrb[0].mxu0
        %1196 = vmatprep.mubr.bf16.mxu0 0
        %1197 = vmatmul.mubr.bf16.gmra.mrb[0].mxu0 %v842
        %v1198 = vpop.f32.mrb[0].mxu0
        %v1199 = vadd.f32 %v682, %v1198
        %v1200 = vpop.f32.mrb[0].mxu0
        %v1201 = vpop.f32.mrb[0].mxu0
        %v1202 = vadd.f32 %v682, %v1201
        %v1203 = vpop.f32.mrb[0].mxu0
        %1204 = vmatprep.mubr.bf16.mxu0 0
        %1205 = vmatmul.mubr.bf16.gmra.mrb[0].mxu0 %v843
        %v1206 = vpop.f32.mrb[0].mxu0
        %v1207 = vadd.f32 %v682, %v1206
        %v1208 = vpop.f32.mrb[0].mxu0
        %v1209 = vpop.f32.mrb[0].mxu0
        %v1210 = vadd.f32 %v682, %v1209
        %v1211 = vpop.f32.mrb[0].mxu0
        %1212 = vdwg.mxu0
        %vm1213 = vcmp.ge.f32.partialorder %v959, 0.0
        %vm1214 = vcmp.ge.f32.partialorder %v962, 0.0
        %vm1215 = vcmp.ge.f32.partialorder %v967, 0.0
        %vm1216 = vcmp.ge.f32.partialorder %v970, 0.0
        %vm1217 = vcmp.ge.f32.partialorder %v975, 0.0
        %vm1218 = vcmp.ge.f32.partialorder %v978, 0.0
        %vm1219 = vcmp.ge.f32.partialorder %v983, 0.0
        %vm1220 = vcmp.ge.f32.partialorder %v986, 0.0
        %vm1221 = vcmp.ge.f32.partialorder %v991, 0.0
        %vm1222 = vcmp.ge.f32.partialorder %v994, 0.0
        %vm1223 = vcmp.ge.f32.partialorder %v999, 0.0
        %vm1224 = vcmp.ge.f32.partialorder %v1002, 0.0
        %vm1225 = vcmp.ge.f32.partialorder %v1007, 0.0
        %vm1226 = vcmp.ge.f32.partialorder %v1010, 0.0
        %vm1227 = vcmp.ge.f32.partialorder %v1015, 0.0
        %vm1228 = vcmp.ge.f32.partialorder %v1018, 0.0
        %vm1229 = vcmp.ge.f32.partialorder %v1023, 0.0
        %vm1230 = vcmp.ge.f32.partialorder %v1026, 0.0
        %vm1231 = vcmp.ge.f32.partialorder %v1031, 0.0
        %vm1232 = vcmp.ge.f32.partialorder %v1034, 0.0
        %vm1233 = vcmp.ge.f32.partialorder %v1039, 0.0
        %vm1234 = vcmp.ge.f32.partialorder %v1042, 0.0
        %vm1235 = vcmp.ge.f32.partialorder %v1047, 0.0
        %vm1236 = vcmp.ge.f32.partialorder %v1050, 0.0
        %vm1237 = vcmp.ge.f32.partialorder %v1055, 0.0
        %vm1238 = vcmp.ge.f32.partialorder %v1058, 0.0
        %vm1239 = vcmp.ge.f32.partialorder %v1063, 0.0
        %vm1240 = vcmp.ge.f32.partialorder %v1066, 0.0
        %vm1241 = vcmp.ge.f32.partialorder %v1071, 0.0
        %vm1242 = vcmp.ge.f32.partialorder %v1074, 0.0
        %vm1243 = vcmp.ge.f32.partialorder %v1079, 0.0
        %vm1244 = vcmp.ge.f32.partialorder %v1082, 0.0
        %vm1245 = vcmp.ge.f32.partialorder %v1087, 0.0
        %vm1246 = vcmp.ge.f32.partialorder %v1090, 0.0
        %vm1247 = vcmp.ge.f32.partialorder %v1095, 0.0
        %vm1248 = vcmp.ge.f32.partialorder %v1098, 0.0
        %vm1249 = vcmp.ge.f32.partialorder %v1103, 0.0
        %vm1250 = vcmp.ge.f32.partialorder %v1106, 0.0
        %vm1251 = vcmp.ge.f32.partialorder %v1111, 0.0
        %vm1252 = vcmp.ge.f32.partialorder %v1114, 0.0
        %vm1253 = vcmp.ge.f32.partialorder %v1119, 0.0
        %vm1254 = vcmp.ge.f32.partialorder %v1122, 0.0
        %vm1255 = vcmp.ge.f32.partialorder %v1127, 0.0
        %vm1256 = vcmp.ge.f32.partialorder %v1130, 0.0
        %vm1257 = vcmp.ge.f32.partialorder %v1135, 0.0
        %vm1258 = vcmp.ge.f32.partialorder %v1138, 0.0
        %vm1259 = vcmp.ge.f32.partialorder %v1143, 0.0
        %vm1260 = vcmp.ge.f32.partialorder %v1146, 0.0
        %vm1261 = vcmp.ge.f32.partialorder %v1151, 0.0
        %vm1262 = vcmp.ge.f32.partialorder %v1154, 0.0
        %vm1263 = vcmp.ge.f32.partialorder %v1159, 0.0
        %vm1264 = vcmp.ge.f32.partialorder %v1162, 0.0
        %vm1265 = vcmp.ge.f32.partialorder %v1167, 0.0
        %vm1266 = vcmp.ge.f32.partialorder %v1170, 0.0
        %vm1267 = vcmp.ge.f32.partialorder %v1175, 0.0
        %vm1268 = vcmp.ge.f32.partialorder %v1178, 0.0
        %vm1269 = vcmp.ge.f32.partialorder %v1183, 0.0
        %vm1270 = vcmp.ge.f32.partialorder %v1186, 0.0
        %vm1271 = vcmp.ge.f32.partialorder %v1191, 0.0
        %vm1272 = vcmp.ge.f32.partialorder %v1194, 0.0
        %vm1273 = vcmp.ge.f32.partialorder %v1199, 0.0
        %vm1274 = vcmp.ge.f32.partialorder %v1202, 0.0
        %vm1275 = vcmp.ge.f32.partialorder %v1207, 0.0
        %vm1276 = vcmp.ge.f32.partialorder %v1210, 0.0
        %v1277 = vmul.f32 %v959, 0.2
        %v1278 = vmul.f32 %v962, 0.2
        %v1279 = vmul.f32 %v967, 0.2
        %v1280 = vmul.f32 %v970, 0.2
        %v1281 = vmul.f32 %v975, 0.2
        %v1282 = vmul.f32 %v978, 0.2
        %v1283 = vmul.f32 %v983, 0.2
        %v1284 = vmul.f32 %v986, 0.2
        %v1285 = vmul.f32 %v991, 0.2
        %v1286 = vmul.f32 %v994, 0.2
        %v1287 = vmul.f32 %v999, 0.2
        %v1288 = vmul.f32 %v1002, 0.2
        %v1289 = vmul.f32 %v1007, 0.2
        %v1290 = vmul.f32 %v1010, 0.2
        %v1291 = vmul.f32 %v1015, 0.2
        %v1292 = vmul.f32 %v1018, 0.2
        %v1293 = vmul.f32 %v1023, 0.2
        %v1294 = vmul.f32 %v1026, 0.2
        %v1295 = vmul.f32 %v1031, 0.2
        %v1296 = vmul.f32 %v1034, 0.2
        %v1297 = vmul.f32 %v1039, 0.2
        %v1298 = vmul.f32 %v1042, 0.2
        %v1299 = vmul.f32 %v1047, 0.2
        %v1300 = vmul.f32 %v1050, 0.2
        %v1301 = vmul.f32 %v1055, 0.2
        %v1302 = vmul.f32 %v1058, 0.2
        %v1303 = vmul.f32 %v1063, 0.2
        %v1304 = vmul.f32 %v1066, 0.2
        %v1305 = vmul.f32 %v1071, 0.2
        %v1306 = vmul.f32 %v1074, 0.2
        %v1307 = vmul.f32 %v1079, 0.2
        %v1308 = vmul.f32 %v1082, 0.2
        %v1309 = vmul.f32 %v1087, 0.2
        %v1310 = vmul.f32 %v1090, 0.2
        %v1311 = vmul.f32 %v1095, 0.2
        %v1312 = vmul.f32 %v1098, 0.2
        %v1313 = vmul.f32 %v1103, 0.2
        %v1314 = vmul.f32 %v1106, 0.2
        %v1315 = vmul.f32 %v1111, 0.2
        %v1316 = vmul.f32 %v1114, 0.2
        %v1317 = vmul.f32 %v1119, 0.2
        %v1318 = vmul.f32 %v1122, 0.2
        %v1319 = vmul.f32 %v1127, 0.2
        %v1320 = vmul.f32 %v1130, 0.2
        %v1321 = vmul.f32 %v1135, 0.2
        %v1322 = vmul.f32 %v1138, 0.2
        %v1323 = vmul.f32 %v1143, 0.2
        %v1324 = vmul.f32 %v1146, 0.2
        %v1325 = vmul.f32 %v1151, 0.2
        %v1326 = vmul.f32 %v1154, 0.2
        %v1327 = vmul.f32 %v1159, 0.2
        %v1328 = vmul.f32 %v1162, 0.2
        %v1329 = vmul.f32 %v1167, 0.2
        %v1330 = vmul.f32 %v1170, 0.2
        %v1331 = vmul.f32 %v1175, 0.2
        %v1332 = vmul.f32 %v1178, 0.2
        %v1333 = vmul.f32 %v1183, 0.2
        %v1334 = vmul.f32 %v1186, 0.2
        %v1335 = vmul.f32 %v1191, 0.2
        %v1336 = vmul.f32 %v1194, 0.2
        %v1337 = vmul.f32 %v1199, 0.2
        %v1338 = vmul.f32 %v1202, 0.2
        %v1339 = vmul.f32 %v1207, 0.2
        %v1340 = vmul.f32 %v1210, 0.2
        %v1341 = vsel %vm1213, %v959, %v1277
        %v1342 = vsel %vm1214, %v962, %v1278
        %v1343 = vsel %vm1215, %v967, %v1279
        %v1344 = vsel %vm1216, %v970, %v1280
        %v1345 = vsel %vm1217, %v975, %v1281
        %v1346 = vsel %vm1218, %v978, %v1282
        %v1347 = vsel %vm1219, %v983, %v1283
        %v1348 = vsel %vm1220, %v986, %v1284
        %v1349 = vsel %vm1221, %v991, %v1285
        %v1350 = vsel %vm1222, %v994, %v1286
        %v1351 = vsel %vm1223, %v999, %v1287
        %v1352 = vsel %vm1224, %v1002, %v1288
        %v1353 = vsel %vm1225, %v1007, %v1289
        %v1354 = vsel %vm1226, %v1010, %v1290
        %v1355 = vsel %vm1227, %v1015, %v1291
        %v1356 = vsel %vm1228, %v1018, %v1292
        %v1357 = vsel %vm1229, %v1023, %v1293
        %v1358 = vsel %vm1230, %v1026, %v1294
        %v1359 = vsel %vm1231, %v1031, %v1295
        %v1360 = vsel %vm1232, %v1034, %v1296
        %v1361 = vsel %vm1233, %v1039, %v1297
        %v1362 = vsel %vm1234, %v1042, %v1298
        %v1363 = vsel %vm1235, %v1047, %v1299
        %v1364 = vsel %vm1236, %v1050, %v1300
        %v1365 = vsel %vm1237, %v1055, %v1301
        %v1366 = vsel %vm1238, %v1058, %v1302
        %v1367 = vsel %vm1239, %v1063, %v1303
        %v1368 = vsel %vm1240, %v1066, %v1304
        %v1369 = vsel %vm1241, %v1071, %v1305
        %v1370 = vsel %vm1242, %v1074, %v1306
        %v1371 = vsel %vm1243, %v1079, %v1307
        %v1372 = vsel %vm1244, %v1082, %v1308
        %v1373 = vsel %vm1245, %v1087, %v1309
        %v1374 = vsel %vm1246, %v1090, %v1310
        %v1375 = vsel %vm1247, %v1095, %v1311
        %v1376 = vsel %vm1248, %v1098, %v1312
        %v1377 = vsel %vm1249, %v1103, %v1313
        %v1378 = vsel %vm1250, %v1106, %v1314
        %v1379 = vsel %vm1251, %v1111, %v1315
        %v1380 = vsel %vm1252, %v1114, %v1316
        %v1381 = vsel %vm1253, %v1119, %v1317
        %v1382 = vsel %vm1254, %v1122, %v1318
        %v1383 = vsel %vm1255, %v1127, %v1319
        %v1384 = vsel %vm1256, %v1130, %v1320
        %v1385 = vsel %vm1257, %v1135, %v1321
        %v1386 = vsel %vm1258, %v1138, %v1322
        %v1387 = vsel %vm1259, %v1143, %v1323
        %v1388 = vsel %vm1260, %v1146, %v1324
        %v1389 = vsel %vm1261, %v1151, %v1325
        %v1390 = vsel %vm1262, %v1154, %v1326
        %v1391 = vsel %vm1263, %v1159, %v1327
        %v1392 = vsel %vm1264, %v1162, %v1328
        %v1393 = vsel %vm1265, %v1167, %v1329
        %v1394 = vsel %vm1266, %v1170, %v1330
        %v1395 = vsel %vm1267, %v1175, %v1331
        %v1396 = vsel %vm1268, %v1178, %v1332
        %v1397 = vsel %vm1269, %v1183, %v1333
        %v1398 = vsel %vm1270, %v1186, %v1334
        %v1399 = vsel %vm1271, %v1191, %v1335
        %v1400 = vsel %vm1272, %v1194, %v1336
        %v1401 = vsel %vm1273, %v1199, %v1337
        %v1402 = vsel %vm1274, %v1202, %v1338
        %v1403 = vsel %vm1275, %v1207, %v1339
        %v1404 = vsel %vm1276, %v1210, %v1340
        %vm1405 = vcmask 261120
        %1406 = vst.msk [vmem:[%s546] sm:$0xff] %vm1405, %v1341
        %1407 = vst.msk [vmem:[%s546 + $0x8] sm:$0xff] %vm1405, %v1342
        %1408 = vst.msk [vmem:[%s546 + $0x10] sm:$0xff] %vm1405, %v1343
        %1409 = vst.msk [vmem:[%s546 + $0x18] sm:$0xff] %vm1405, %v1344
        %1410 = vst.msk [vmem:[%s546 + $0x20] sm:$0xff] %vm1405, %v1345
        %1411 = vst.msk [vmem:[%s546 + $0x28] sm:$0xff] %vm1405, %v1346
        %1412 = vst.msk [vmem:[%s546 + $0x30] sm:$0xff] %vm1405, %v1347
        %1413 = vst.msk [vmem:[%s546 + $0x38] sm:$0xff] %vm1405, %v1348
        %1414 = vst.msk [vmem:[%s546 + $0x40] sm:$0xff] %vm1405, %v1349
        %1415 = vst.msk [vmem:[%s546 + $0x48] sm:$0xff] %vm1405, %v1350
        %1416 = vst.msk [vmem:[%s546 + $0x50] sm:$0xff] %vm1405, %v1351
        %1417 = vst.msk [vmem:[%s546 + $0x58] sm:$0xff] %vm1405, %v1352
        %1418 = vst.msk [vmem:[%s546 + $0x60] sm:$0xff] %vm1405, %v1353
        %1419 = vst.msk [vmem:[%s546 + $0x68] sm:$0xff] %vm1405, %v1354
        %1420 = vst.msk [vmem:[%s546 + $0x70] sm:$0xff] %vm1405, %v1355
        %1421 = vst.msk [vmem:[%s546 + $0x78] sm:$0xff] %vm1405, %v1356
        %1422 = vst.msk [vmem:[%s546 + $0x80] sm:$0xff] %vm1405, %v1357
        %1423 = vst.msk [vmem:[%s546 + $0x88] sm:$0xff] %vm1405, %v1358
        %1424 = vst.msk [vmem:[%s546 + $0x90] sm:$0xff] %vm1405, %v1359
        %1425 = vst.msk [vmem:[%s546 + $0x98] sm:$0xff] %vm1405, %v1360
        %1426 = vst.msk [vmem:[%s546 + $0xa0] sm:$0xff] %vm1405, %v1361
        %1427 = vst.msk [vmem:[%s546 + $0xa8] sm:$0xff] %vm1405, %v1362
        %1428 = vst.msk [vmem:[%s546 + $0xb0] sm:$0xff] %vm1405, %v1363
        %1429 = vst.msk [vmem:[%s546 + $0xb8] sm:$0xff] %vm1405, %v1364
        %1430 = vst.msk [vmem:[%s546 + $0xc0] sm:$0xff] %vm1405, %v1365
        %1431 = vst.msk [vmem:[%s546 + $0xc8] sm:$0xff] %vm1405, %v1366
        %1432 = vst.msk [vmem:[%s546 + $0xd0] sm:$0xff] %vm1405, %v1367
        %1433 = vst.msk [vmem:[%s546 + $0xd8] sm:$0xff] %vm1405, %v1368
        %1434 = vst.msk [vmem:[%s546 + $0xe0] sm:$0xff] %vm1405, %v1369
        %1435 = vst.msk [vmem:[%s546 + $0xe8] sm:$0xff] %vm1405, %v1370
        %1436 = vst.msk [vmem:[%s546 + $0xf0] sm:$0xff] %vm1405, %v1371
        %1437 = vst.msk [vmem:[%s546 + $0xf8] sm:$0xff] %vm1405, %v1372
        %1438 = vst.msk [vmem:[%s546 + $0x100] sm:$0xff] %vm1405, %v1373
        %1439 = vst.msk [vmem:[%s546 + $0x108] sm:$0xff] %vm1405, %v1374
        %1440 = vst.msk [vmem:[%s546 + $0x110] sm:$0xff] %vm1405, %v1375
        %1441 = vst.msk [vmem:[%s546 + $0x118] sm:$0xff] %vm1405, %v1376
        %1442 = vst.msk [vmem:[%s546 + $0x120] sm:$0xff] %vm1405, %v1377
        %1443 = vst.msk [vmem:[%s546 + $0x128] sm:$0xff] %vm1405, %v1378
        %1444 = vst.msk [vmem:[%s546 + $0x130] sm:$0xff] %vm1405, %v1379
        %1445 = vst.msk [vmem:[%s546 + $0x138] sm:$0xff] %vm1405, %v1380
        %1446 = vst.msk [vmem:[%s546 + $0x140] sm:$0xff] %vm1405, %v1381
        %1447 = vst.msk [vmem:[%s546 + $0x148] sm:$0xff] %vm1405, %v1382
        %1448 = vst.msk [vmem:[%s546 + $0x150] sm:$0xff] %vm1405, %v1383
        %1449 = vst.msk [vmem:[%s546 + $0x158] sm:$0xff] %vm1405, %v1384
        %1450 = vst.msk [vmem:[%s546 + $0x160] sm:$0xff] %vm1405, %v1385
        %1451 = vst.msk [vmem:[%s546 + $0x168] sm:$0xff] %vm1405, %v1386
        %1452 = vst.msk [vmem:[%s546 + $0x170] sm:$0xff] %vm1405, %v1387
        %1453 = vst.msk [vmem:[%s546 + $0x178] sm:$0xff] %vm1405, %v1388
        %1454 = vst.msk [vmem:[%s546 + $0x180] sm:$0xff] %vm1405, %v1389
        %1455 = vst.msk [vmem:[%s546 + $0x188] sm:$0xff] %vm1405, %v1390
        %1456 = vst.msk [vmem:[%s546 + $0x190] sm:$0xff] %vm1405, %v1391
        %1457 = vst.msk [vmem:[%s546 + $0x198] sm:$0xff] %vm1405, %v1392
        %1458 = vst.msk [vmem:[%s546 + $0x1a0] sm:$0xff] %vm1405, %v1393
        %1459 = vst.msk [vmem:[%s546 + $0x1a8] sm:$0xff] %vm1405, %v1394
        %1460 = vst.msk [vmem:[%s546 + $0x1b0] sm:$0xff] %vm1405, %v1395
        %1461 = vst.msk [vmem:[%s546 + $0x1b8] sm:$0xff] %vm1405, %v1396
        %1462 = vst.msk [vmem:[%s546 + $0x1c0] sm:$0xff] %vm1405, %v1397
        %1463 = vst.msk [vmem:[%s546 + $0x1c8] sm:$0xff] %vm1405, %v1398
        %1464 = vst.msk [vmem:[%s546 + $0x1d0] sm:$0xff] %vm1405, %v1399
        %1465 = vst.msk [vmem:[%s546 + $0x1d8] sm:$0xff] %vm1405, %v1400
        %1466 = vst.msk [vmem:[%s546 + $0x1e0] sm:$0xff] %vm1405, %v1401
        %1467 = vst.msk [vmem:[%s546 + $0x1e8] sm:$0xff] %vm1405, %v1402
        %1468 = vst.msk [vmem:[%s546 + $0x1f0] sm:$0xff] %vm1405, %v1403
        %1469 = vst.msk [vmem:[%s546 + $0x1f8] sm:$0xff] %vm1405, %v1404
        %v1470 = vld [vmem:[%s3] sm:$0xff]
        %v1471 = vld [vmem:[%s3 + $0x8] sm:$0xff]
        %v1472 = vld [vmem:[%s3 + $0x10] sm:$0xff]
        %v1473 = vld [vmem:[%s3 + $0x18] sm:$0xff]
        %1474 = vmatprep.subr.mxu0 0.0
        %1475 = vmatpush1.msra.mxu0 %v1341
        %1476 = vmatprep.subr.mxu0 0.0
        %1477 = vmatpush1.msra.mxu0 %v1342
        %1478 = vmatprep.subr.mxu0 0.0
        %1479 = vmatpush1.msra.mxu0 %v1343
        %1480 = vmatprep.subr.mxu0 0.0
        %1481 = vmatpush1.msra.mxu0 %v1344
        %1482 = vmatprep.subr.mxu0 0.0
        %1483 = vmatpush1.msra.mxu0 %v1345
        %1484 = vmatprep.subr.mxu0 0.0
        %1485 = vmatpush1.msra.mxu0 %v1346
        %1486 = vmatprep.subr.mxu0 0.0
        %1487 = vmatpush1.msra.mxu0 %v1347
        %1488 = vmatprep.subr.mxu0 0.0
        %1489 = vmatpush1.msra.mxu0 %v1348
        %1490 = vmatprep.subr.mxu0 0.0
        %1491 = vmatpush1.msra.mxu0 %v1349
        %1492 = vmatprep.subr.mxu0 0.0
        %1493 = vmatpush1.msra.mxu0 %v1350
        %1494 = vmatprep.subr.mxu0 0.0
        %1495 = vmatpush1.msra.mxu0 %v1351
        %1496 = vmatprep.subr.mxu0 0.0
        %1497 = vmatpush1.msra.mxu0 %v1352
        %1498 = vmatprep.subr.mxu0 0.0
        %1499 = vmatpush1.msra.mxu0 %v1353
        %1500 = vmatprep.subr.mxu0 0.0
        %1501 = vmatpush1.msra.mxu0 %v1354
        %1502 = vmatprep.subr.mxu0 0.0
        %1503 = vmatpush1.msra.mxu0 %v1355
        %1504 = vmatprep.subr.mxu0 0.0
        %1505 = vmatpush1.msra.mxu0 %v1356
        %1506 = vmatprep.subr.mxu0 0.0
        %1507 = vmatpush1.msra.mxu0 %v1357
        %1508 = vmatprep.subr.mxu0 0.0
        %1509 = vmatpush1.msra.mxu0 %v1358
        %1510 = vmatprep.subr.mxu0 0.0
        %1511 = vmatpush1.msra.mxu0 %v1359
        %1512 = vmatprep.subr.mxu0 0.0
        %1513 = vmatpush1.msra.mxu0 %v1360
        %1514 = vmatprep.subr.mxu0 0.0
        %1515 = vmatpush1.msra.mxu0 %v1361
        %1516 = vmatprep.subr.mxu0 0.0
        %1517 = vmatpush1.msra.mxu0 %v1362
        %1518 = vmatprep.subr.mxu0 0.0
        %1519 = vmatpush1.msra.mxu0 %v1363
        %1520 = vmatprep.subr.mxu0 0.0
        %1521 = vmatpush1.msra.mxu0 %v1364
        %1522 = vmatprep.subr.mxu0 0.0
        %1523 = vmatpush1.msra.mxu0 %v1365
        %1524 = vmatprep.subr.mxu0 0.0
        %1525 = vmatpush1.msra.mxu0 %v1366
        %1526 = vmatprep.subr.mxu0 0.0
        %1527 = vmatpush1.msra.mxu0 %v1367
        %1528 = vmatprep.subr.mxu0 0.0
        %1529 = vmatpush1.msra.mxu0 %v1368
        %1530 = vmatprep.subr.mxu0 0.0
        %1531 = vmatpush1.msra.mxu0 %v1369
        %1532 = vmatprep.subr.mxu0 0.0
        %1533 = vmatpush1.msra.mxu0 %v1370
        %1534 = vmatprep.subr.mxu0 0.0
        %1535 = vmatpush1.msra.mxu0 %v1371
        %1536 = vmatprep.subr.mxu0 0.0
        %1537 = vmatpush1.msra.mxu0 %v1372
        %1538 = vmatprep.mubr.f32.mxu0 %v1471
        %1539 = vmatmul.mubr.f32.gmra.mrb[0].mxu0 %v1470
        %v1540 = vpop.f32.mrb[0].mxu0
        %v1541 = vadd.f32 0.0, %v1540
        %v1542 = vpop.f32.mrb[0].mxu0
        %1543 = vdwg.mxu0
        %1544 = vmatprep.subr.mxu0 0.0
        %1545 = vmatpush1.msra.mxu0 %v1373
        %1546 = vmatprep.subr.mxu0 0.0
        %1547 = vmatpush1.msra.mxu0 %v1374
        %1548 = vmatprep.subr.mxu0 0.0
        %1549 = vmatpush1.msra.mxu0 %v1375
        %1550 = vmatprep.subr.mxu0 0.0
        %1551 = vmatpush1.msra.mxu0 %v1376
        %1552 = vmatprep.subr.mxu0 0.0
        %1553 = vmatpush1.msra.mxu0 %v1377
        %1554 = vmatprep.subr.mxu0 0.0
        %1555 = vmatpush1.msra.mxu0 %v1378
        %1556 = vmatprep.subr.mxu0 0.0
        %1557 = vmatpush1.msra.mxu0 %v1379
        %1558 = vmatprep.subr.mxu0 0.0
        %1559 = vmatpush1.msra.mxu0 %v1380
        %1560 = vmatprep.subr.mxu0 0.0
        %1561 = vmatpush1.msra.mxu0 %v1381
        %1562 = vmatprep.subr.mxu0 0.0
        %1563 = vmatpush1.msra.mxu0 %v1382
        %1564 = vmatprep.subr.mxu0 0.0
        %1565 = vmatpush1.msra.mxu0 %v1383
        %1566 = vmatprep.subr.mxu0 0.0
        %1567 = vmatpush1.msra.mxu0 %v1384
        %1568 = vmatprep.subr.mxu0 0.0
        %1569 = vmatpush1.msra.mxu0 %v1385
        %1570 = vmatprep.subr.mxu0 0.0
        %1571 = vmatpush1.msra.mxu0 %v1386
        %1572 = vmatprep.subr.mxu0 0.0
        %1573 = vmatpush1.msra.mxu0 %v1387
        %1574 = vmatprep.subr.mxu0 0.0
        %1575 = vmatpush1.msra.mxu0 %v1388
        %1576 = vmatprep.subr.mxu0 0.0
        %1577 = vmatpush1.msra.mxu0 %v1389
        %1578 = vmatprep.subr.mxu0 0.0
        %1579 = vmatpush1.msra.mxu0 %v1390
        %1580 = vmatprep.subr.mxu0 0.0
        %1581 = vmatpush1.msra.mxu0 %v1391
        %1582 = vmatprep.subr.mxu0 0.0
        %1583 = vmatpush1.msra.mxu0 %v1392
        %1584 = vmatprep.subr.mxu0 0.0
        %1585 = vmatpush1.msra.mxu0 %v1393
        %1586 = vmatprep.subr.mxu0 0.0
        %1587 = vmatpush1.msra.mxu0 %v1394
        %1588 = vmatprep.subr.mxu0 0.0
        %1589 = vmatpush1.msra.mxu0 %v1395
        %1590 = vmatprep.subr.mxu0 0.0
        %1591 = vmatpush1.msra.mxu0 %v1396
        %1592 = vmatprep.subr.mxu0 0.0
        %1593 = vmatpush1.msra.mxu0 %v1397
        %1594 = vmatprep.subr.mxu0 0.0
        %1595 = vmatpush1.msra.mxu0 %v1398
        %1596 = vmatprep.subr.mxu0 0.0
        %1597 = vmatpush1.msra.mxu0 %v1399
        %1598 = vmatprep.subr.mxu0 0.0
        %1599 = vmatpush1.msra.mxu0 %v1400
        %1600 = vmatprep.subr.mxu0 0.0
        %1601 = vmatpush1.msra.mxu0 %v1401
        %1602 = vmatprep.subr.mxu0 0.0
        %1603 = vmatpush1.msra.mxu0 %v1402
        %1604 = vmatprep.subr.mxu0 0.0
        %1605 = vmatpush1.msra.mxu0 %v1403
        %1606 = vmatprep.subr.mxu0 0.0
        %1607 = vmatpush1.msra.mxu0 %v1404
        %1608 = vmatprep.mubr.f32.mxu0 %v1473
        %1609 = vmatmul.mubr.f32.gmra.mrb[0].mxu0 %v1472
        %v1610 = vpop.f32.mrb[0].mxu0
        %v1611 = vadd.f32 %v1541, %v1610
        %v1612 = vpop.f32.mrb[0].mxu0
        %1613 = vdwg.mxu0
        %v1614 = vpack.c.bf16 %v1611, %v1611
        %v1615 = vld [vmem:[%s4] sm:$0xf]
        %v1616 = vld [vmem:[%s4 + $0x4] sm:$0xf]
        %v1617 = vld [vmem:[%s4 + $0x8] sm:$0xf]
        %v1618 = vld [vmem:[%s4 + $0xc] sm:$0xf]
        %v1619 = vld [vmem:[%s5] sm:$0x1]
        %v1621 = vlaneseq
        %v1622 = vshrl.u32 %v1621, 7
        %v1623 = vsub.s32 0, %v1622
        %v1624 = vrot.slane %v1619, %v1623
        %v1630 = vunpack.c.l.b16 %v1615
        %v1631 = vunpack.c.l.b16 %v1616
        %v1632 = vunpack.c.l.b16 %v1617
        %v1633 = vunpack.c.l.b16 %v1618
        %v1634 = vpack.c.b16 %v1631, %v1630
        %v1635 = vpack.c.b16 %v1633, %v1632
        %v1639 = vsel %vm1405, %v1614, 0
        %1641 = vmatprep.subr.bf16.mxu0 0
        %1642 = vmatpush1.bf16.msra.mxu0 %v1634
        %1643 = vmatprep.subr.bf16.mxu0 0
        %1644 = vmatpush1.bf16.msra.mxu0 %v1635
        %1645 = vmatprep.subr.bf16.mxu0 0
        %1646 = vmatpush1.bf16.msra.mxu0 0
        %1647 = vmatprep.subr.bf16.mxu0 0
        %1648 = vmatpush1.bf16.msra.mxu0 0
        %1649 = vmatprep.subr.bf16.mxu0 0
        %1650 = vmatpush1.bf16.msra.mxu0 0
        %1651 = vmatprep.subr.bf16.mxu0 0
        %1652 = vmatpush1.bf16.msra.mxu0 0
        %1653 = vmatprep.subr.bf16.mxu0 0
        %1654 = vmatpush1.bf16.msra.mxu0 0
        %1655 = vmatprep.subr.bf16.mxu0 0
        %1656 = vmatpush1.bf16.msra.mxu0 0
        %1657 = vmatprep.subr.bf16.mxu0 0
        %1658 = vmatpush1.bf16.msra.mxu0 0
        %1659 = vmatprep.subr.bf16.mxu0 0
        %1660 = vmatpush1.bf16.msra.mxu0 0
        %1661 = vmatprep.subr.bf16.mxu0 0
        %1662 = vmatpush1.bf16.msra.mxu0 0
        %1663 = vmatprep.subr.bf16.mxu0 0
        %1664 = vmatpush1.bf16.msra.mxu0 0
        %1665 = vmatprep.subr.bf16.mxu0 0
        %1666 = vmatpush1.bf16.msra.mxu0 0
        %1667 = vmatprep.subr.bf16.mxu0 0
        %1668 = vmatpush1.bf16.msra.mxu0 0
        %1669 = vmatprep.subr.bf16.mxu0 0
        %1670 = vmatpush1.bf16.msra.mxu0 0
        %1671 = vmatprep.subr.bf16.mxu0 0
        %1672 = vmatpush1.bf16.msra.mxu0 0
        %1673 = vmatprep.mubr.bf16.mxu0 0
        %1674 = vmatmul.mubr.bf16.gmra.mrb[0].mxu0 %v1639
        %v1675 = vpop.f32.mrb[0].mxu0
        %v1676 = vadd.f32 %v1624, %v1675
        %v1677 = vpop.f32.mrb[0].mxu0
        %v1678 = vpop.f32.mrb[0].mxu0
        %v1679 = vpop.f32.mrb[0].mxu0
        %1680 = vdwg.mxu0
        %vm1681 = vcmask 523264
        %1682 = vst.msk [vmem:[%s585] sm:$0xff] %vm1681, %v1676
        %v1683 = vsel %vm1405, %v1676, 0.0
        %v1684 = vrot.slane %v1683, 4
        %v1685 = vadd.f32 %v1683, %v1684
        %v1686 = vrot.slane %v1685, 2
        %v1687 = vadd.f32 %v1685, %v1686
        %v1688 = vrot.slane %v1687, 1
        %v1689 = vadd.f32 %v1687, %v1688
        %v1690 = vrcp.pop 8.0
        %v1691 = vmul.f32 %v1689, %v1690
        %v1692 = vpack.c.bf16 %v1691, %v1691
        %v1693 = vld [vmem:[%s6] sm:$0xf]
        %v1694 = vld [vmem:[%s6 + $0x4] sm:$0xf]
        %v1695 = vld [vmem:[%s6 + $0x8] sm:$0xf]
        %v1696 = vld [vmem:[%s6 + $0xc] sm:$0xf]
        %v1697 = vld [vmem:[%s7] sm:$0x1]
        %v1702 = vunpack.c.l.b16 %v1693
        %v1703 = vunpack.c.l.b16 %v1694
        %v1704 = vunpack.c.l.b16 %v1695
        %v1705 = vunpack.c.l.b16 %v1696
        %v1706 = vpack.c.b16 %v1703, %v1702
        %v1707 = vpack.c.b16 %v1705, %v1704
        %v1711 = vsel %vm1405, %v1692, 0
        %1713 = vmatprep.subr.bf16.mxu0 0
        %1714 = vmatpush1.bf16.msra.mxu0 %v1706
        %1715 = vmatprep.subr.bf16.mxu0 0
        %1716 = vmatpush1.bf16.msra.mxu0 %v1707
        %1717 = vmatprep.subr.bf16.mxu0 0
        %1718 = vmatpush1.bf16.msra.mxu0 0
        %1719 = vmatprep.subr.bf16.mxu0 0
        %1720 = vmatpush1.bf16.msra.mxu0 0
        %1721 = vmatprep.subr.bf16.mxu0 0
        %1722 = vmatpush1.bf16.msra.mxu0 0
        %1723 = vmatprep.subr.bf16.mxu0 0
        %1724 = vmatpush1.bf16.msra.mxu0 0
        %1725 = vmatprep.subr.bf16.mxu0 0
        %1726 = vmatpush1.bf16.msra.mxu0 0
        %1727 = vmatprep.subr.bf16.mxu0 0
        %1728 = vmatpush1.bf16.msra.mxu0 0
        %1729 = vmatprep.subr.bf16.mxu0 0
        %1730 = vmatpush1.bf16.msra.mxu0 0
        %1731 = vmatprep.subr.bf16.mxu0 0
        %1732 = vmatpush1.bf16.msra.mxu0 0
        %1733 = vmatprep.subr.bf16.mxu0 0
        %1734 = vmatpush1.bf16.msra.mxu0 0
        %1735 = vmatprep.subr.bf16.mxu0 0
        %1736 = vmatpush1.bf16.msra.mxu0 0
        %1737 = vmatprep.subr.bf16.mxu0 0
        %1738 = vmatpush1.bf16.msra.mxu0 0
        %1739 = vmatprep.subr.bf16.mxu0 0
        %1740 = vmatpush1.bf16.msra.mxu0 0
        %1741 = vmatprep.subr.bf16.mxu0 0
        %1742 = vmatpush1.bf16.msra.mxu0 0
        %1743 = vmatprep.subr.bf16.mxu0 0
        %1744 = vmatpush1.bf16.msra.mxu0 0
        %1745 = vmatprep.mubr.bf16.mxu0 0
        %1746 = vmatmul.mubr.bf16.gmra.mrb[0].mxu0 %v1711
        %v1747 = vpop.f32.mrb[0].mxu0
        %v1748 = vadd.f32 %v1697, %v1747
        %v1749 = vpop.f32.mrb[0].mxu0
        %v1750 = vpop.f32.mrb[0].mxu0
        %v1751 = vpop.f32.mrb[0].mxu0
        %1752 = vdwg.mxu0
        %v1753 = vpack.c.bf16 %v1748, %v1748
        %v1754 = vld [vmem:[%s8] sm:$0xff]
        %v1755 = vld [vmem:[%s8 + $0x8] sm:$0xff]
        %v1756 = vld [vmem:[%s8 + $0x10] sm:$0xff]
        %v1757 = vld [vmem:[%s8 + $0x18] sm:$0xff]
        %v1758 = vld [vmem:[%s8 + $0x20] sm:$0xff]
        %v1759 = vld [vmem:[%s8 + $0x28] sm:$0xff]
        %v1760 = vld [vmem:[%s8 + $0x30] sm:$0xff]
        %v1761 = vld [vmem:[%s8 + $0x38] sm:$0xff]
        %v1762 = vld [vmem:[%s8 + $0x40] sm:$0xff]
        %v1763 = vld [vmem:[%s8 + $0x48] sm:$0xff]
        %v1764 = vld [vmem:[%s8 + $0x50] sm:$0xff]
        %v1765 = vld [vmem:[%s8 + $0x58] sm:$0xff]
        %v1766 = vld [vmem:[%s8 + $0x60] sm:$0xff]
        %v1767 = vld [vmem:[%s8 + $0x68] sm:$0xff]
        %v1768 = vld [vmem:[%s8 + $0x70] sm:$0xff]
        %v1769 = vld [vmem:[%s8 + $0x78] sm:$0xff]
        %v1770 = vld [vmem:[%s9] sm:$0x3]
        %v1787 = vunpack.c.l.b16 %v1754
        %v1788 = vunpack.c.h.b16 %v1754
        %v1789 = vunpack.c.l.b16 %v1755
        %v1790 = vunpack.c.h.b16 %v1755
        %v1791 = vunpack.c.l.b16 %v1756
        %v1792 = vunpack.c.h.b16 %v1756
        %v1793 = vunpack.c.l.b16 %v1757
        %v1794 = vunpack.c.h.b16 %v1757
        %v1795 = vunpack.c.l.b16 %v1758
        %v1796 = vunpack.c.h.b16 %v1758
        %v1797 = vunpack.c.l.b16 %v1759
        %v1798 = vunpack.c.h.b16 %v1759
        %v1799 = vunpack.c.l.b16 %v1760
        %v1800 = vunpack.c.h.b16 %v1760
        %v1801 = vunpack.c.l.b16 %v1761
        %v1802 = vunpack.c.h.b16 %v1761
        %v1803 = vunpack.c.l.b16 %v1762
        %v1804 = vunpack.c.h.b16 %v1762
        %v1805 = vunpack.c.l.b16 %v1763
        %v1806 = vunpack.c.h.b16 %v1763
        %v1807 = vunpack.c.l.b16 %v1764
        %v1808 = vunpack.c.h.b16 %v1764
        %v1809 = vunpack.c.l.b16 %v1765
        %v1810 = vunpack.c.h.b16 %v1765
        %v1811 = vunpack.c.l.b16 %v1766
        %v1812 = vunpack.c.h.b16 %v1766
        %v1813 = vunpack.c.l.b16 %v1767
        %v1814 = vunpack.c.h.b16 %v1767
        %v1815 = vunpack.c.l.b16 %v1768
        %v1816 = vunpack.c.h.b16 %v1768
        %v1817 = vunpack.c.l.b16 %v1769
        %v1818 = vunpack.c.h.b16 %v1769
        %v1819 = vpack.c.b16 %v1789, %v1787
        %v1820 = vpack.c.b16 %v1790, %v1788
        %v1821 = vpack.c.b16 %v1793, %v1791
        %v1822 = vpack.c.b16 %v1794, %v1792
        %v1823 = vpack.c.b16 %v1797, %v1795
        %v1824 = vpack.c.b16 %v1798, %v1796
        %v1825 = vpack.c.b16 %v1801, %v1799
        %v1826 = vpack.c.b16 %v1802, %v1800
        %v1827 = vpack.c.b16 %v1805, %v1803
        %v1828 = vpack.c.b16 %v1806, %v1804
        %v1829 = vpack.c.b16 %v1809, %v1807
        %v1830 = vpack.c.b16 %v1810, %v1808
        %v1831 = vpack.c.b16 %v1813, %v1811
        %v1832 = vpack.c.b16 %v1814, %v1812
        %v1833 = vpack.c.b16 %v1817, %v1815
        %v1834 = vpack.c.b16 %v1818, %v1816
        %v1852 = vlaneseq
        %v1853 = vshrl.u32 %v1852, 7
        %v1854 = vsub.s32 0, %v1853
        %v1855 = vrot.slane %v1770, %v1854
        %v1856 = vlaneseq
        %v1857 = vshrl.u32 %v1856, 7
        %v1858 = vsub.s32 1, %v1857
        %v1859 = vrot.slane %v1770, %v1858
        %1862 = vmatprep.subr.bf16.mxu0 %v1820
        %1863 = vmatpush1.bf16.msra.mxu0 %v1819
        %1864 = vmatprep.subr.bf16.mxu0 %v1822
        %1865 = vmatpush1.bf16.msra.mxu0 %v1821
        %1866 = vmatprep.subr.bf16.mxu0 %v1824
        %1867 = vmatpush1.bf16.msra.mxu0 %v1823
        %1868 = vmatprep.subr.bf16.mxu0 %v1826
        %1869 = vmatpush1.bf16.msra.mxu0 %v1825
        %1870 = vmatprep.subr.bf16.mxu0 %v1828
        %1871 = vmatpush1.bf16.msra.mxu0 %v1827
        %1872 = vmatprep.subr.bf16.mxu0 %v1830
        %1873 = vmatpush1.bf16.msra.mxu0 %v1829
        %1874 = vmatprep.subr.bf16.mxu0 %v1832
        %1875 = vmatpush1.bf16.msra.mxu0 %v1831
        %1876 = vmatprep.subr.bf16.mxu0 %v1834
        %1877 = vmatpush1.bf16.msra.mxu0 %v1833
        %1878 = vmatprep.subr.bf16.mxu0 0
        %1879 = vmatpush1.bf16.msra.mxu0 0
        %1880 = vmatprep.subr.bf16.mxu0 0
        %1881 = vmatpush1.bf16.msra.mxu0 0
        %1882 = vmatprep.subr.bf16.mxu0 0
        %1883 = vmatpush1.bf16.msra.mxu0 0
        %1884 = vmatprep.subr.bf16.mxu0 0
        %1885 = vmatpush1.bf16.msra.mxu0 0
        %1886 = vmatprep.subr.bf16.mxu0 0
        %1887 = vmatpush1.bf16.msra.mxu0 0
        %1888 = vmatprep.subr.bf16.mxu0 0
        %1889 = vmatpush1.bf16.msra.mxu0 0
        %1890 = vmatprep.subr.bf16.mxu0 0
        %1891 = vmatpush1.bf16.msra.mxu0 0
        %1892 = vmatprep.subr.bf16.mxu0 0
        %1893 = vmatpush1.bf16.msra.mxu0 0
        %1894 = vmatprep.mubr.bf16.mxu0 0
        %1895 = vmatmul.mubr.bf16.gmra.mrb[0].mxu0 %v1753
        %v1896 = vpop.f32.mrb[0].mxu0
        %v1897 = vadd.f32 %v1855, %v1896
        %v1898 = vpop.f32.mrb[0].mxu0
        %v1899 = vadd.f32 %v1859, %v1898
        %v1900 = vpop.f32.mrb[0].mxu0
        %v1901 = vpop.f32.mrb[0].mxu0
        %1902 = vdwg.mxu0
        %1903 = vst [vmem:[%s588] sm:$0x1] %v1897
        %v1904 = vmul.f32 %v1899, 1.442695
        %v1905 = vpow.pop %v1904
        %v1906 = vmul.f32 %v1905, 0.5
        %1907 = vst [vmem:[%s591] sm:$0x1] %v1906
        %1909 = vrot.lane.b32.xlu0 %v1676, 96
        %v1910 = vpop.permute.xlu0 %1909
        %v1912 = vsel %vm1405, %v1910, 0.0
        %v1913 = vpack.c.bf16 %v1912, %v1912
        %v1914 = vld [vmem:[%s10] sm:$0xf]
        %v1915 = vld [vmem:[%s10 + $0x4] sm:$0xf]
        %v1916 = vld [vmem:[%s10 + $0x8] sm:$0xf]
        %v1917 = vld [vmem:[%s10 + $0xc] sm:$0xf]
        %v1918 = vld [vmem:[%s10 + $0x10] sm:$0xf]
        %v1919 = vld [vmem:[%s10 + $0x14] sm:$0xf]
        %v1920 = vld [vmem:[%s10 + $0x18] sm:$0xf]
        %v1921 = vld [vmem:[%s10 + $0x1c] sm:$0xf]
        %v1922 = vld [vmem:[%s11] sm:$0x1]
        %v1931 = vunpack.c.l.b16 %v1914
        %v1932 = vunpack.c.l.b16 %v1915
        %v1933 = vunpack.c.l.b16 %v1916
        %v1934 = vunpack.c.l.b16 %v1917
        %v1935 = vunpack.c.l.b16 %v1918
        %v1936 = vunpack.c.l.b16 %v1919
        %v1937 = vunpack.c.l.b16 %v1920
        %v1938 = vunpack.c.l.b16 %v1921
        %v1939 = vpack.c.b16 %v1932, %v1931
        %v1940 = vpack.c.b16 %v1934, %v1933
        %v1941 = vpack.c.b16 %v1936, %v1935
        %v1942 = vpack.c.b16 %v1938, %v1937
        %v1948 = vsel %vm1681, %v1913, 0
        %1950 = vmatprep.subr.bf16.mxu0 0
        %1951 = vmatpush1.bf16.msra.mxu0 %v1939
        %1952 = vmatprep.subr.bf16.mxu0 0
        %1953 = vmatpush1.bf16.msra.mxu0 %v1940
        %1954 = vmatprep.subr.bf16.mxu0 0
        %1955 = vmatpush1.bf16.msra.mxu0 %v1941
        %1956 = vmatprep.subr.bf16.mxu0 0
        %1957 = vmatpush1.bf16.msra.mxu0 %v1942
        %1958 = vmatprep.subr.bf16.mxu0 0
        %1959 = vmatpush1.bf16.msra.mxu0 0
        %1960 = vmatprep.subr.bf16.mxu0 0
        %1961 = vmatpush1.bf16.msra.mxu0 0
        %1962 = vmatprep.subr.bf16.mxu0 0
        %1963 = vmatpush1.bf16.msra.mxu0 0
        %1964 = vmatprep.subr.bf16.mxu0 0
        %1965 = vmatpush1.bf16.msra.mxu0 0
        %1966 = vmatprep.subr.bf16.mxu0 0
        %1967 = vmatpush1.bf16.msra.mxu0 0
        %1968 = vmatprep.subr.bf16.mxu0 0
        %1969 = vmatpush1.bf16.msra.mxu0 0
        %1970 = vmatprep.subr.bf16.mxu0 0
        %1971 = vmatpush1.bf16.msra.mxu0 0
        %1972 = vmatprep.subr.bf16.mxu0 0
        %1973 = vmatpush1.bf16.msra.mxu0 0
        %1974 = vmatprep.subr.bf16.mxu0 0
        %1975 = vmatpush1.bf16.msra.mxu0 0
        %1976 = vmatprep.subr.bf16.mxu0 0
        %1977 = vmatpush1.bf16.msra.mxu0 0
        %1978 = vmatprep.subr.bf16.mxu0 0
        %1979 = vmatpush1.bf16.msra.mxu0 0
        %1980 = vmatprep.subr.bf16.mxu0 0
        %1981 = vmatpush1.bf16.msra.mxu0 0
        %1982 = vmatprep.mubr.bf16.mxu0 0
        %1983 = vmatmul.mubr.bf16.gmra.mrb[0].mxu0 %v1948
        %v1984 = vpop.f32.mrb[0].mxu0
        %v1985 = vadd.f32 %v1922, %v1984
        %v1986 = vpop.f32.mrb[0].mxu0
        %v1987 = vpop.f32.mrb[0].mxu0
        %v1988 = vpop.f32.mrb[0].mxu0
        %1989 = vdwg.mxu0
        %v1990 = vxor.u32 %v1985, 2147483648
        %v1991 = vmul.f32 %v1990, 1.442695
        %v1992 = vpow.pop %v1991
        %v1993 = vadd.f32 %v1992, 1.0
        %v1994 = vrcp.pop %v1993
        %v1995 = vmul.f32 1.0, %v1994
        %1997 = vrot.lane.b32.xlu0 %v1985, 32
        %v1998 = vpop.permute.xlu0 %1997
        %v2000 = vmul.f32 %v1995, %v1998
        %2002 = vrot.lane.b32.xlu0 %v2000, 64
        %v2003 = vpop.permute.xlu0 %2002
        %v2005 = vadd.f32 %v1985, %v2003
        %v2006 = vtanh.pop %v2005
        %v2007 = vsub.f32 1.0, %v1995
        %2009 = vrot.lane.b32.xlu0 %v2006, 96
        %v2010 = vpop.permute.xlu0 %2009
        %v2012 = vmul.f32 %v2007, %v2010
        %v2013 = vmul.f32 %v1995, 0.0
        %v2014 = vadd.f32 %v2012, %v2013
        %v2016 = vrot.slane %v2014, 7
        %v2018 = vsel %vm1405, %v1910, %v2016
        %v2019 = vpack.c.bf16 %v2018, %v2018
        %v2021 = vshrl.u32 %v2019, 16
        %v2024 = vsel %vm1681, %v2021, 0
        %2026 = vmatprep.subr.bf16.mxu0 0
        %2027 = vmatpush1.bf16.msra.mxu0 %v1939
        %2028 = vmatprep.subr.bf16.mxu0 0
        %2029 = vmatpush1.bf16.msra.mxu0 %v1940
        %2030 = vmatprep.subr.bf16.mxu0 0
        %2031 = vmatpush1.bf16.msra.mxu0 %v1941
        %2032 = vmatprep.subr.bf16.mxu0 0
        %2033 = vmatpush1.bf16.msra.mxu0 %v1942
        %2034 = vmatprep.subr.bf16.mxu0 0
        %2035 = vmatpush1.bf16.msra.mxu0 0
        %2036 = vmatprep.subr.bf16.mxu0 0
        %2037 = vmatpush1.bf16.msra.mxu0 0
        %2038 = vmatprep.subr.bf16.mxu0 0
        %2039 = vmatpush1.bf16.msra.mxu0 0
        %2040 = vmatprep.subr.bf16.mxu0 0
        %2041 = vmatpush1.bf16.msra.mxu0 0
        %2042 = vmatprep.subr.bf16.mxu0 0
        %2043 = vmatpush1.bf16.msra.mxu0 0
        %2044 = vmatprep.subr.bf16.mxu0 0
        %2045 = vmatpush1.bf16.msra.mxu0 0
        %2046 = vmatprep.subr.bf16.mxu0 0
        %2047 = vmatpush1.bf16.msra.mxu0 0
        %2048 = vmatprep.subr.bf16.mxu0 0
        %2049 = vmatpush1.bf16.msra.mxu0 0
        %2050 = vmatprep.subr.bf16.mxu0 0
        %2051 = vmatpush1.bf16.msra.mxu0 0
        %2052 = vmatprep.subr.bf16.mxu0 0
        %2053 = vmatpush1.bf16.msra.mxu0 0
        %2054 = vmatprep.subr.bf16.mxu0 0
        %2055 = vmatpush1.bf16.msra.mxu0 0
        %2056 = vmatprep.subr.bf16.mxu0 0
        %2057 = vmatpush1.bf16.msra.mxu0 0
        %2058 = vmatprep.mubr.bf16.mxu0 0
        %2059 = vmatmul.mubr.bf16.gmra.mrb[0].mxu0 %v2024
        %v2060 = vpop.f32.mrb[0].mxu0
        %v2061 = vadd.f32 %v1922, %v2060
        %v2062 = vpop.f32.mrb[0].mxu0
        %v2063 = vpop.f32.mrb[0].mxu0
        %v2064 = vpop.f32.mrb[0].mxu0
        %2065 = vdwg.mxu0
        %v2066 = vxor.u32 %v2061, 2147483648
        %v2067 = vmul.f32 %v2066, 1.442695
        %v2068 = vpow.pop %v2067
        %v2069 = vadd.f32 %v2068, 1.0
        %v2070 = vrcp.pop %v2069
        %v2071 = vmul.f32 1.0, %v2070
        %2073 = vrot.lane.b32.xlu0 %v2061, 32
        %v2074 = vpop.permute.xlu0 %2073
        %v2076 = vmul.f32 %v2071, %v2074
        %2078 = vrot.lane.b32.xlu0 %v2076, 64
        %v2079 = vpop.permute.xlu0 %2078
        %v2081 = vadd.f32 %v2061, %v2079
        %v2082 = vtanh.pop %v2081
        %v2083 = vsub.f32 1.0, %v2071
        %2085 = vrot.lane.b32.xlu0 %v2082, 96
        %v2086 = vpop.permute.xlu0 %2085
        %v2088 = vmul.f32 %v2083, %v2086
        %v2089 = vmul.f32 %v2071, %v2014
        %v2090 = vadd.f32 %v2088, %v2089
        %v2092 = vrot.slane %v2090, 6
        %v2094 = vsel %vm1405, %v1910, %v2092
        %v2095 = vpack.c.bf16 %v2094, %v2094
        %v2097 = vrot.slane %v2095, 1
        %v2099 = vsel %vm1681, %v2097, 0
        %2101 = vmatprep.subr.bf16.mxu0 0
        %2102 = vmatpush1.bf16.msra.mxu0 %v1939
        %2103 = vmatprep.subr.bf16.mxu0 0
        %2104 = vmatpush1.bf16.msra.mxu0 %v1940
        %2105 = vmatprep.subr.bf16.mxu0 0
        %2106 = vmatpush1.bf16.msra.mxu0 %v1941
        %2107 = vmatprep.subr.bf16.mxu0 0
        %2108 = vmatpush1.bf16.msra.mxu0 %v1942
        %2109 = vmatprep.subr.bf16.mxu0 0
        %2110 = vmatpush1.bf16.msra.mxu0 0
        %2111 = vmatprep.subr.bf16.mxu0 0
        %2112 = vmatpush1.bf16.msra.mxu0 0
        %2113 = vmatprep.subr.bf16.mxu0 0
        %2114 = vmatpush1.bf16.msra.mxu0 0
        %2115 = vmatprep.subr.bf16.mxu0 0
        %2116 = vmatpush1.bf16.msra.mxu0 0
        %2117 = vmatprep.subr.bf16.mxu0 0
        %2118 = vmatpush1.bf16.msra.mxu0 0
        %2119 = vmatprep.subr.bf16.mxu0 0
        %2120 = vmatpush1.bf16.msra.mxu0 0
        %2121 = vmatprep.subr.bf16.mxu0 0
        %2122 = vmatpush1.bf16.msra.mxu0 0
        %2123 = vmatprep.subr.bf16.mxu0 0
        %2124 = vmatpush1.bf16.msra.mxu0 0
        %2125 = vmatprep.subr.bf16.mxu0 0
        %2126 = vmatpush1.bf16.msra.mxu0 0
        %2127 = vmatprep.subr.bf16.mxu0 0
        %2128 = vmatpush1.bf16.msra.mxu0 0
        %2129 = vmatprep.subr.bf16.mxu0 0
        %2130 = vmatpush1.bf16.msra.mxu0 0
        %2131 = vmatprep.subr.bf16.mxu0 0
        %2132 = vmatpush1.bf16.msra.mxu0 0
        %2133 = vmatprep.mubr.bf16.mxu0 0
        %2134 = vmatmul.mubr.bf16.gmra.mrb[0].mxu0 %v2099
        %v2135 = vpop.f32.mrb[0].mxu0
        %v2136 = vadd.f32 %v1922, %v2135
        %v2137 = vpop.f32.mrb[0].mxu0
        %v2138 = vpop.f32.mrb[0].mxu0
        %v2139 = vpop.f32.mrb[0].mxu0
        %2140 = vdwg.mxu0
        %v2141 = vxor.u32 %v2136, 2147483648
        %v2142 = vmul.f32 %v2141, 1.442695
        %v2143 = vpow.pop %v2142
        %v2144 = vadd.f32 %v2143, 1.0
        %v2145 = vrcp.pop %v2144
        %v2146 = vmul.f32 1.0, %v2145
        %2148 = vrot.lane.b32.xlu0 %v2136, 32
        %v2149 = vpop.permute.xlu0 %2148
        %v2151 = vmul.f32 %v2146, %v2149
        %2153 = vrot.lane.b32.xlu0 %v2151, 64
        %v2154 = vpop.permute.xlu0 %2153
        %v2156 = vadd.f32 %v2136, %v2154
        %v2157 = vtanh.pop %v2156
        %v2158 = vsub.f32 1.0, %v2146
        %2160 = vrot.lane.b32.xlu0 %v2157, 96
        %v2161 = vpop.permute.xlu0 %2160
        %v2163 = vmul.f32 %v2158, %v2161
        %v2164 = vmul.f32 %v2146, %v2090
        %v2165 = vadd.f32 %v2163, %v2164
        %v2167 = vrot.slane %v2165, 5
        %v2169 = vsel %vm1405, %v1910, %v2167
        %v2170 = vpack.c.bf16 %v2169, %v2169
        %v2172 = vshrl.u32 %v2170, 16
        %v2174 = vrot.slane %v2172, 1
        %v2176 = vsel %vm1681, %v2174, 0
        %2178 = vmatprep.subr.bf16.mxu0 0
        %2179 = vmatpush1.bf16.msra.mxu0 %v1939
        %2180 = vmatprep.subr.bf16.mxu0 0
        %2181 = vmatpush1.bf16.msra.mxu0 %v1940
        %2182 = vmatprep.subr.bf16.mxu0 0
        %2183 = vmatpush1.bf16.msra.mxu0 %v1941
        %2184 = vmatprep.subr.bf16.mxu0 0
        %2185 = vmatpush1.bf16.msra.mxu0 %v1942
        %2186 = vmatprep.subr.bf16.mxu0 0
        %2187 = vmatpush1.bf16.msra.mxu0 0
        %2188 = vmatprep.subr.bf16.mxu0 0
        %2189 = vmatpush1.bf16.msra.mxu0 0
        %2190 = vmatprep.subr.bf16.mxu0 0
        %2191 = vmatpush1.bf16.msra.mxu0 0
        %2192 = vmatprep.subr.bf16.mxu0 0
        %2193 = vmatpush1.bf16.msra.mxu0 0
        %2194 = vmatprep.subr.bf16.mxu0 0
        %2195 = vmatpush1.bf16.msra.mxu0 0
        %2196 = vmatprep.subr.bf16.mxu0 0
        %2197 = vmatpush1.bf16.msra.mxu0 0
        %2198 = vmatprep.subr.bf16.mxu0 0
        %2199 = vmatpush1.bf16.msra.mxu0 0
        %2200 = vmatprep.subr.bf16.mxu0 0
        %2201 = vmatpush1.bf16.msra.mxu0 0
        %2202 = vmatprep.subr.bf16.mxu0 0
        %2203 = vmatpush1.bf16.msra.mxu0 0
        %2204 = vmatprep.subr.bf16.mxu0 0
        %2205 = vmatpush1.bf16.msra.mxu0 0
        %2206 = vmatprep.subr.bf16.mxu0 0
        %2207 = vmatpush1.bf16.msra.mxu0 0
        %2208 = vmatprep.subr.bf16.mxu0 0
        %2209 = vmatpush1.bf16.msra.mxu0 0
        %2210 = vmatprep.mubr.bf16.mxu0 0
        %2211 = vmatmul.mubr.bf16.gmra.mrb[0].mxu0 %v2176
        %v2212 = vpop.f32.mrb[0].mxu0
        %v2213 = vadd.f32 %v1922, %v2212
        %v2214 = vpop.f32.mrb[0].mxu0
        %v2215 = vpop.f32.mrb[0].mxu0
        %v2216 = vpop.f32.mrb[0].mxu0
        %2217 = vdwg.mxu0
        %v2218 = vxor.u32 %v2213, 2147483648
        %v2219 = vmul.f32 %v2218, 1.442695
        %v2220 = vpow.pop %v2219
        %v2221 = vadd.f32 %v2220, 1.0
        %v2222 = vrcp.pop %v2221
        %v2223 = vmul.f32 1.0, %v2222
        %2225 = vrot.lane.b32.xlu0 %v2213, 32
        %v2226 = vpop.permute.xlu0 %2225
        %v2228 = vmul.f32 %v2223, %v2226
        %2230 = vrot.lane.b32.xlu0 %v2228, 64
        %v2231 = vpop.permute.xlu0 %2230
        %v2233 = vadd.f32 %v2213, %v2231
        %v2234 = vtanh.pop %v2233
        %v2235 = vsub.f32 1.0, %v2223
        %2237 = vrot.lane.b32.xlu0 %v2234, 96
        %v2238 = vpop.permute.xlu0 %2237
        %v2240 = vmul.f32 %v2235, %v2238
        %v2241 = vmul.f32 %v2223, %v2165
        %v2242 = vadd.f32 %v2240, %v2241
        %v2244 = vrot.slane %v2242, 4
        %v2246 = vsel %vm1405, %v1910, %v2244
        %v2247 = vpack.c.bf16 %v2246, %v2246
        %v2249 = vrot.slane %v2247, 2
        %v2251 = vsel %vm1681, %v2249, 0
        %2253 = vmatprep.subr.bf16.mxu0 0
        %2254 = vmatpush1.bf16.msra.mxu0 %v1939
        %2255 = vmatprep.subr.bf16.mxu0 0
        %2256 = vmatpush1.bf16.msra.mxu0 %v1940
        %2257 = vmatprep.subr.bf16.mxu0 0
        %2258 = vmatpush1.bf16.msra.mxu0 %v1941
        %2259 = vmatprep.subr.bf16.mxu0 0
        %2260 = vmatpush1.bf16.msra.mxu0 %v1942
        %2261 = vmatprep.subr.bf16.mxu0 0
        %2262 = vmatpush1.bf16.msra.mxu0 0
        %2263 = vmatprep.subr.bf16.mxu0 0
        %2264 = vmatpush1.bf16.msra.mxu0 0
        %2265 = vmatprep.subr.bf16.mxu0 0
        %2266 = vmatpush1.bf16.msra.mxu0 0
        %2267 = vmatprep.subr.bf16.mxu0 0
        %2268 = vmatpush1.bf16.msra.mxu0 0
        %2269 = vmatprep.subr.bf16.mxu0 0
        %2270 = vmatpush1.bf16.msra.mxu0 0
        %2271 = vmatprep.subr.bf16.mxu0 0
        %2272 = vmatpush1.bf16.msra.mxu0 0
        %2273 = vmatprep.subr.bf16.mxu0 0
        %2274 = vmatpush1.bf16.msra.mxu0 0
        %2275 = vmatprep.subr.bf16.mxu0 0
        %2276 = vmatpush1.bf16.msra.mxu0 0
        %2277 = vmatprep.subr.bf16.mxu0 0
        %2278 = vmatpush1.bf16.msra.mxu0 0
        %2279 = vmatprep.subr.bf16.mxu0 0
        %2280 = vmatpush1.bf16.msra.mxu0 0
        %2281 = vmatprep.subr.bf16.mxu0 0
        %2282 = vmatpush1.bf16.msra.mxu0 0
        %2283 = vmatprep.subr.bf16.mxu0 0
        %2284 = vmatpush1.bf16.msra.mxu0 0
        %2285 = vmatprep.mubr.bf16.mxu0 0
        %2286 = vmatmul.mubr.bf16.gmra.mrb[0].mxu0 %v2251
        %v2287 = vpop.f32.mrb[0].mxu0
        %v2288 = vadd.f32 %v1922, %v2287
        %v2289 = vpop.f32.mrb[0].mxu0
        %v2290 = vpop.f32.mrb[0].mxu0
        %v2291 = vpop.f32.mrb[0].mxu0
        %2292 = vdwg.mxu0
        %v2293 = vxor.u32 %v2288, 2147483648
        %v2294 = vmul.f32 %v2293, 1.442695
        %v2295 = vpow.pop %v2294
        %v2296 = vadd.f32 %v2295, 1.0
        %v2297 = vrcp.pop %v2296
        %v2298 = vmul.f32 1.0, %v2297
        %2300 = vrot.lane.b32.xlu0 %v2288, 32
        %v2301 = vpop.permute.xlu0 %2300
        %v2303 = vmul.f32 %v2298, %v2301
        %2305 = vrot.lane.b32.xlu0 %v2303, 64
        %v2306 = vpop.permute.xlu0 %2305
        %v2308 = vadd.f32 %v2288, %v2306
        %v2309 = vtanh.pop %v2308
        %v2310 = vsub.f32 1.0, %v2298
        %2312 = vrot.lane.b32.xlu0 %v2309, 96
        %v2313 = vpop.permute.xlu0 %2312
        %v2315 = vmul.f32 %v2310, %v2313
        %v2316 = vmul.f32 %v2298, %v2242
        %v2317 = vadd.f32 %v2315, %v2316
        %v2319 = vrot.slane %v2317, 3
        %v2321 = vsel %vm1405, %v1910, %v2319
        %v2322 = vpack.c.bf16 %v2321, %v2321
        %v2324 = vshrl.u32 %v2322, 16
        %v2326 = vrot.slane %v2324, 2
        %v2328 = vsel %vm1681, %v2326, 0
        %2330 = vmatprep.subr.bf16.mxu0 0
        %2331 = vmatpush1.bf16.msra.mxu0 %v1939
        %2332 = vmatprep.subr.bf16.mxu0 0
        %2333 = vmatpush1.bf16.msra.mxu0 %v1940
        %2334 = vmatprep.subr.bf16.mxu0 0
        %2335 = vmatpush1.bf16.msra.mxu0 %v1941
        %2336 = vmatprep.subr.bf16.mxu0 0
        %2337 = vmatpush1.bf16.msra.mxu0 %v1942
        %2338 = vmatprep.subr.bf16.mxu0 0
        %2339 = vmatpush1.bf16.msra.mxu0 0
        %2340 = vmatprep.subr.bf16.mxu0 0
        %2341 = vmatpush1.bf16.msra.mxu0 0
        %2342 = vmatprep.subr.bf16.mxu0 0
        %2343 = vmatpush1.bf16.msra.mxu0 0
        %2344 = vmatprep.subr.bf16.mxu0 0
        %2345 = vmatpush1.bf16.msra.mxu0 0
        %2346 = vmatprep.subr.bf16.mxu0 0
        %2347 = vmatpush1.bf16.msra.mxu0 0
        %2348 = vmatprep.subr.bf16.mxu0 0
        %2349 = vmatpush1.bf16.msra.mxu0 0
        %2350 = vmatprep.subr.bf16.mxu0 0
        %2351 = vmatpush1.bf16.msra.mxu0 0
        %2352 = vmatprep.subr.bf16.mxu0 0
        %2353 = vmatpush1.bf16.msra.mxu0 0
        %2354 = vmatprep.subr.bf16.mxu0 0
        %2355 = vmatpush1.bf16.msra.mxu0 0
        %2356 = vmatprep.subr.bf16.mxu0 0
        %2357 = vmatpush1.bf16.msra.mxu0 0
        %2358 = vmatprep.subr.bf16.mxu0 0
        %2359 = vmatpush1.bf16.msra.mxu0 0
        %2360 = vmatprep.subr.bf16.mxu0 0
        %2361 = vmatpush1.bf16.msra.mxu0 0
        %2362 = vmatprep.mubr.bf16.mxu0 0
        %2363 = vmatmul.mubr.bf16.gmra.mrb[0].mxu0 %v2328
        %v2364 = vpop.f32.mrb[0].mxu0
        %v2365 = vadd.f32 %v1922, %v2364
        %v2366 = vpop.f32.mrb[0].mxu0
        %v2367 = vpop.f32.mrb[0].mxu0
        %v2368 = vpop.f32.mrb[0].mxu0
        %2369 = vdwg.mxu0
        %v2370 = vxor.u32 %v2365, 2147483648
        %v2371 = vmul.f32 %v2370, 1.442695
        %v2372 = vpow.pop %v2371
        %v2373 = vadd.f32 %v2372, 1.0
        %v2374 = vrcp.pop %v2373
        %v2375 = vmul.f32 1.0, %v2374
        %2377 = vrot.lane.b32.xlu0 %v2365, 32
        %v2378 = vpop.permute.xlu0 %2377
        %v2380 = vmul.f32 %v2375, %v2378
        %2382 = vrot.lane.b32.xlu0 %v2380, 64
        %v2383 = vpop.permute.xlu0 %2382
        %v2385 = vadd.f32 %v2365, %v2383
        %v2386 = vtanh.pop %v2385
        %v2387 = vsub.f32 1.0, %v2375
        %2389 = vrot.lane.b32.xlu0 %v2386, 96
        %v2390 = vpop.permute.xlu0 %2389
        %v2392 = vmul.f32 %v2387, %v2390
        %v2393 = vmul.f32 %v2375, %v2317
        %v2394 = vadd.f32 %v2392, %v2393
        %v2396 = vrot.slane %v2394, 2
        %v2398 = vsel %vm1405, %v1910, %v2396
        %v2399 = vpack.c.bf16 %v2398, %v2398
        %v2401 = vrot.slane %v2399, 3
        %v2403 = vsel %vm1681, %v2401, 0
        %2405 = vmatprep.subr.bf16.mxu0 0
        %2406 = vmatpush1.bf16.msra.mxu0 %v1939
        %2407 = vmatprep.subr.bf16.mxu0 0
        %2408 = vmatpush1.bf16.msra.mxu0 %v1940
        %2409 = vmatprep.subr.bf16.mxu0 0
        %2410 = vmatpush1.bf16.msra.mxu0 %v1941
        %2411 = vmatprep.subr.bf16.mxu0 0
        %2412 = vmatpush1.bf16.msra.mxu0 %v1942
        %2413 = vmatprep.subr.bf16.mxu0 0
        %2414 = vmatpush1.bf16.msra.mxu0 0
        %2415 = vmatprep.subr.bf16.mxu0 0
        %2416 = vmatpush1.bf16.msra.mxu0 0
        %2417 = vmatprep.subr.bf16.mxu0 0
        %2418 = vmatpush1.bf16.msra.mxu0 0
        %2419 = vmatprep.subr.bf16.mxu0 0
        %2420 = vmatpush1.bf16.msra.mxu0 0
        %2421 = vmatprep.subr.bf16.mxu0 0
        %2422 = vmatpush1.bf16.msra.mxu0 0
        %2423 = vmatprep.subr.bf16.mxu0 0
        %2424 = vmatpush1.bf16.msra.mxu0 0
        %2425 = vmatprep.subr.bf16.mxu0 0
        %2426 = vmatpush1.bf16.msra.mxu0 0
        %2427 = vmatprep.subr.bf16.mxu0 0
        %2428 = vmatpush1.bf16.msra.mxu0 0
        %2429 = vmatprep.subr.bf16.mxu0 0
        %2430 = vmatpush1.bf16.msra.mxu0 0
        %2431 = vmatprep.subr.bf16.mxu0 0
        %2432 = vmatpush1.bf16.msra.mxu0 0
        %2433 = vmatprep.subr.bf16.mxu0 0
        %2434 = vmatpush1.bf16.msra.mxu0 0
        %2435 = vmatprep.subr.bf16.mxu0 0
        %2436 = vmatpush1.bf16.msra.mxu0 0
        %2437 = vmatprep.mubr.bf16.mxu0 0
        %2438 = vmatmul.mubr.bf16.gmra.mrb[0].mxu0 %v2403
        %v2439 = vpop.f32.mrb[0].mxu0
        %v2440 = vadd.f32 %v1922, %v2439
        %v2441 = vpop.f32.mrb[0].mxu0
        %v2442 = vpop.f32.mrb[0].mxu0
        %v2443 = vpop.f32.mrb[0].mxu0
        %2444 = vdwg.mxu0
        %v2445 = vxor.u32 %v2440, 2147483648
        %v2446 = vmul.f32 %v2445, 1.442695
        %v2447 = vpow.pop %v2446
        %v2448 = vadd.f32 %v2447, 1.0
        %v2449 = vrcp.pop %v2448
        %v2450 = vmul.f32 1.0, %v2449
        %2452 = vrot.lane.b32.xlu0 %v2440, 32
        %v2453 = vpop.permute.xlu0 %2452
        %v2455 = vmul.f32 %v2450, %v2453
        %2457 = vrot.lane.b32.xlu0 %v2455, 64
        %v2458 = vpop.permute.xlu0 %2457
        %v2460 = vadd.f32 %v2440, %v2458
        %v2461 = vtanh.pop %v2460
        %v2462 = vsub.f32 1.0, %v2450
        %2464 = vrot.lane.b32.xlu0 %v2461, 96
        %v2465 = vpop.permute.xlu0 %2464
        %v2467 = vmul.f32 %v2462, %v2465
        %v2468 = vmul.f32 %v2450, %v2394
        %v2469 = vadd.f32 %v2467, %v2468
        %v2471 = vrot.slane %v2469, 1
        %v2473 = vsel %vm1405, %v1910, %v2471
        %v2474 = vpack.c.bf16 %v2473, %v2473
        %v2476 = vshrl.u32 %v2474, 16
        %v2478 = vrot.slane %v2476, 3
        %v2480 = vsel %vm1681, %v2478, 0
        %2482 = vmatprep.subr.bf16.mxu0 0
        %2483 = vmatpush1.bf16.msra.mxu0 %v1939
        %2484 = vmatprep.subr.bf16.mxu0 0
        %2485 = vmatpush1.bf16.msra.mxu0 %v1940
        %2486 = vmatprep.subr.bf16.mxu0 0
        %2487 = vmatpush1.bf16.msra.mxu0 %v1941
        %2488 = vmatprep.subr.bf16.mxu0 0
        %2489 = vmatpush1.bf16.msra.mxu0 %v1942
        %2490 = vmatprep.subr.bf16.mxu0 0
        %2491 = vmatpush1.bf16.msra.mxu0 0
        %2492 = vmatprep.subr.bf16.mxu0 0
        %2493 = vmatpush1.bf16.msra.mxu0 0
        %2494 = vmatprep.subr.bf16.mxu0 0
        %2495 = vmatpush1.bf16.msra.mxu0 0
        %2496 = vmatprep.subr.bf16.mxu0 0
        %2497 = vmatpush1.bf16.msra.mxu0 0
        %2498 = vmatprep.subr.bf16.mxu0 0
        %2499 = vmatpush1.bf16.msra.mxu0 0
        %2500 = vmatprep.subr.bf16.mxu0 0
        %2501 = vmatpush1.bf16.msra.mxu0 0
        %2502 = vmatprep.subr.bf16.mxu0 0
        %2503 = vmatpush1.bf16.msra.mxu0 0
        %2504 = vmatprep.subr.bf16.mxu0 0
        %2505 = vmatpush1.bf16.msra.mxu0 0
        %2506 = vmatprep.subr.bf16.mxu0 0
        %2507 = vmatpush1.bf16.msra.mxu0 0
        %2508 = vmatprep.subr.bf16.mxu0 0
        %2509 = vmatpush1.bf16.msra.mxu0 0
        %2510 = vmatprep.subr.bf16.mxu0 0
        %2511 = vmatpush1.bf16.msra.mxu0 0
        %2512 = vmatprep.subr.bf16.mxu0 0
        %2513 = vmatpush1.bf16.msra.mxu0 0
        %2514 = vmatprep.mubr.bf16.mxu0 0
        %2515 = vmatmul.mubr.bf16.gmra.mrb[0].mxu0 %v2480
        %v2516 = vpop.f32.mrb[0].mxu0
        %v2517 = vadd.f32 %v1922, %v2516
        %v2518 = vpop.f32.mrb[0].mxu0
        %v2519 = vpop.f32.mrb[0].mxu0
        %v2520 = vpop.f32.mrb[0].mxu0
        %2521 = vdwg.mxu0
        %v2522 = vxor.u32 %v2517, 2147483648
        %v2523 = vmul.f32 %v2522, 1.442695
        %v2524 = vpow.pop %v2523
        %v2525 = vadd.f32 %v2524, 1.0
        %v2526 = vrcp.pop %v2525
        %v2527 = vmul.f32 1.0, %v2526
        %2529 = vrot.lane.b32.xlu0 %v2517, 32
        %v2530 = vpop.permute.xlu0 %2529
        %v2532 = vmul.f32 %v2527, %v2530
        %2534 = vrot.lane.b32.xlu0 %v2532, 64
        %v2535 = vpop.permute.xlu0 %2534
        %v2537 = vadd.f32 %v2517, %v2535
        %v2538 = vtanh.pop %v2537
        %v2539 = vsub.f32 1.0, %v2527
        %2541 = vrot.lane.b32.xlu0 %v2538, 96
        %v2542 = vpop.permute.xlu0 %2541
        %v2544 = vmul.f32 %v2539, %v2542
        %v2545 = vmul.f32 %v2527, %v2469
        %v2546 = vadd.f32 %v2544, %v2545
        %2548 = vrot.lane.b32.xlu0 %v2546, 96
        %v2549 = vpop.permute.xlu0 %2548
        %v2551 = vsel %vm1405, %v2549, %v2546
        %v2552 = vpack.c.bf16 %v2551, %v2551
        %v2554 = vsel %vm1681, %v2552, 0
        %2556 = vmatprep.subr.bf16.mxu0 0
        %2557 = vmatpush1.bf16.msra.mxu0 %v1939
        %2558 = vmatprep.subr.bf16.mxu0 0
        %2559 = vmatpush1.bf16.msra.mxu0 %v1940
        %2560 = vmatprep.subr.bf16.mxu0 0
        %2561 = vmatpush1.bf16.msra.mxu0 %v1941
        %2562 = vmatprep.subr.bf16.mxu0 0
        %2563 = vmatpush1.bf16.msra.mxu0 %v1942
        %2564 = vmatprep.subr.bf16.mxu0 0
        %2565 = vmatpush1.bf16.msra.mxu0 0
        %2566 = vmatprep.subr.bf16.mxu0 0
        %2567 = vmatpush1.bf16.msra.mxu0 0
        %2568 = vmatprep.subr.bf16.mxu0 0
        %2569 = vmatpush1.bf16.msra.mxu0 0
        %2570 = vmatprep.subr.bf16.mxu0 0
        %2571 = vmatpush1.bf16.msra.mxu0 0
        %2572 = vmatprep.subr.bf16.mxu0 0
        %2573 = vmatpush1.bf16.msra.mxu0 0
        %2574 = vmatprep.subr.bf16.mxu0 0
        %2575 = vmatpush1.bf16.msra.mxu0 0
        %2576 = vmatprep.subr.bf16.mxu0 0
        %2577 = vmatpush1.bf16.msra.mxu0 0
        %2578 = vmatprep.subr.bf16.mxu0 0
        %2579 = vmatpush1.bf16.msra.mxu0 0
        %2580 = vmatprep.subr.bf16.mxu0 0
        %2581 = vmatpush1.bf16.msra.mxu0 0
        %2582 = vmatprep.subr.bf16.mxu0 0
        %2583 = vmatpush1.bf16.msra.mxu0 0
        %2584 = vmatprep.subr.bf16.mxu0 0
        %2585 = vmatpush1.bf16.msra.mxu0 0
        %2586 = vmatprep.subr.bf16.mxu0 0
        %2587 = vmatpush1.bf16.msra.mxu0 0
        %2588 = vmatprep.mubr.bf16.mxu0 0
        %2589 = vmatmul.mubr.bf16.gmra.mrb[0].mxu0 %v2554
        %v2590 = vpop.f32.mrb[0].mxu0
        %v2591 = vadd.f32 %v1922, %v2590
        %v2592 = vpop.f32.mrb[0].mxu0
        %v2593 = vpop.f32.mrb[0].mxu0
        %v2594 = vpop.f32.mrb[0].mxu0
        %2595 = vdwg.mxu0
        %v2596 = vxor.u32 %v2591, 2147483648
        %v2597 = vmul.f32 %v2596, 1.442695
        %v2598 = vpow.pop %v2597
        %v2599 = vadd.f32 %v2598, 1.0
        %v2600 = vrcp.pop %v2599
        %v2601 = vmul.f32 1.0, %v2600
        %2603 = vrot.lane.b32.xlu0 %v2591, 32
        %v2604 = vpop.permute.xlu0 %2603
        %v2606 = vmul.f32 %v2601, %v2604
        %2608 = vrot.lane.b32.xlu0 %v2606, 64
        %v2609 = vpop.permute.xlu0 %2608
        %v2611 = vadd.f32 %v2591, %v2609
        %v2612 = vtanh.pop %v2611
        %v2613 = vsub.f32 1.0, %v2601
        %2615 = vrot.lane.b32.xlu0 %v2612, 96
        %v2616 = vpop.permute.xlu0 %2615
        %v2618 = vmul.f32 %v2613, %v2616
        %v2619 = vmul.f32 %v2601, %v2546
        %v2620 = vadd.f32 %v2618, %v2619
        %2622 = vrot.lane.b32.xlu0 %v2620, 96
        %v2623 = vpop.permute.xlu0 %2622
        %v2625 = vsel %vm1405, %v2623, %v2620
        %v2626 = vpack.c.bf16 %v2625, %v2625
        %v2628 = vsel %vm1681, %v2626, 0
        %2630 = vmatprep.subr.bf16.mxu0 0
        %2631 = vmatpush1.bf16.msra.mxu0 %v1939
        %2632 = vmatprep.subr.bf16.mxu0 0
        %2633 = vmatpush1.bf16.msra.mxu0 %v1940
        %2634 = vmatprep.subr.bf16.mxu0 0
        %2635 = vmatpush1.bf16.msra.mxu0 %v1941
        %2636 = vmatprep.subr.bf16.mxu0 0
        %2637 = vmatpush1.bf16.msra.mxu0 %v1942
        %2638 = vmatprep.subr.bf16.mxu0 0
        %2639 = vmatpush1.bf16.msra.mxu0 0
        %2640 = vmatprep.subr.bf16.mxu0 0
        %2641 = vmatpush1.bf16.msra.mxu0 0
        %2642 = vmatprep.subr.bf16.mxu0 0
        %2643 = vmatpush1.bf16.msra.mxu0 0
        %2644 = vmatprep.subr.bf16.mxu0 0
        %2645 = vmatpush1.bf16.msra.mxu0 0
        %2646 = vmatprep.subr.bf16.mxu0 0
        %2647 = vmatpush1.bf16.msra.mxu0 0
        %2648 = vmatprep.subr.bf16.mxu0 0
        %2649 = vmatpush1.bf16.msra.mxu0 0
        %2650 = vmatprep.subr.bf16.mxu0 0
        %2651 = vmatpush1.bf16.msra.mxu0 0
        %2652 = vmatprep.subr.bf16.mxu0 0
        %2653 = vmatpush1.bf16.msra.mxu0 0
        %2654 = vmatprep.subr.bf16.mxu0 0
        %2655 = vmatpush1.bf16.msra.mxu0 0
        %2656 = vmatprep.subr.bf16.mxu0 0
        %2657 = vmatpush1.bf16.msra.mxu0 0
        %2658 = vmatprep.subr.bf16.mxu0 0
        %2659 = vmatpush1.bf16.msra.mxu0 0
        %2660 = vmatprep.subr.bf16.mxu0 0
        %2661 = vmatpush1.bf16.msra.mxu0 0
        %2662 = vmatprep.mubr.bf16.mxu0 0
        %2663 = vmatmul.mubr.bf16.gmra.mrb[0].mxu0 %v2628
        %v2664 = vpop.f32.mrb[0].mxu0
        %v2665 = vadd.f32 %v1922, %v2664
        %v2666 = vpop.f32.mrb[0].mxu0
        %v2667 = vpop.f32.mrb[0].mxu0
        %v2668 = vpop.f32.mrb[0].mxu0
        %2669 = vdwg.mxu0
        %v2670 = vxor.u32 %v2665, 2147483648
        %v2671 = vmul.f32 %v2670, 1.442695
        %v2672 = vpow.pop %v2671
        %v2673 = vadd.f32 %v2672, 1.0
        %v2674 = vrcp.pop %v2673
        %v2675 = vmul.f32 1.0, %v2674
        %2677 = vrot.lane.b32.xlu0 %v2665, 32
        %v2678 = vpop.permute.xlu0 %2677
        %v2680 = vmul.f32 %v2675, %v2678
        %2682 = vrot.lane.b32.xlu0 %v2680, 64
        %v2683 = vpop.permute.xlu0 %2682
        %v2685 = vadd.f32 %v2665, %v2683
        %v2686 = vtanh.pop %v2685
        %v2687 = vsub.f32 1.0, %v2675
        %2689 = vrot.lane.b32.xlu0 %v2686, 96
        %v2690 = vpop.permute.xlu0 %2689
        %v2692 = vmul.f32 %v2687, %v2690
        %v2693 = vmul.f32 %v2675, %v2620
        %v2694 = vadd.f32 %v2692, %v2693
        %2696 = vrot.lane.b32.xlu0 %v2694, 96
        %v2697 = vpop.permute.xlu0 %2696
        %v2699 = vsel %vm1405, %v2697, %v2694
        %v2700 = vpack.c.bf16 %v2699, %v2699
        %v2702 = vsel %vm1681, %v2700, 0
        %2704 = vmatprep.subr.bf16.mxu0 0
        %2705 = vmatpush1.bf16.msra.mxu0 %v1939
        %2706 = vmatprep.subr.bf16.mxu0 0
        %2707 = vmatpush1.bf16.msra.mxu0 %v1940
        %2708 = vmatprep.subr.bf16.mxu0 0
        %2709 = vmatpush1.bf16.msra.mxu0 %v1941
        %2710 = vmatprep.subr.bf16.mxu0 0
        %2711 = vmatpush1.bf16.msra.mxu0 %v1942
        %2712 = vmatprep.subr.bf16.mxu0 0
        %2713 = vmatpush1.bf16.msra.mxu0 0
        %2714 = vmatprep.subr.bf16.mxu0 0
        %2715 = vmatpush1.bf16.msra.mxu0 0
        %2716 = vmatprep.subr.bf16.mxu0 0
        %2717 = vmatpush1.bf16.msra.mxu0 0
        %2718 = vmatprep.subr.bf16.mxu0 0
        %2719 = vmatpush1.bf16.msra.mxu0 0
        %2720 = vmatprep.subr.bf16.mxu0 0
        %2721 = vmatpush1.bf16.msra.mxu0 0
        %2722 = vmatprep.subr.bf16.mxu0 0
        %2723 = vmatpush1.bf16.msra.mxu0 0
        %2724 = vmatprep.subr.bf16.mxu0 0
        %2725 = vmatpush1.bf16.msra.mxu0 0
        %2726 = vmatprep.subr.bf16.mxu0 0
        %2727 = vmatpush1.bf16.msra.mxu0 0
        %2728 = vmatprep.subr.bf16.mxu0 0
        %2729 = vmatpush1.bf16.msra.mxu0 0
        %2730 = vmatprep.subr.bf16.mxu0 0
        %2731 = vmatpush1.bf16.msra.mxu0 0
        %2732 = vmatprep.subr.bf16.mxu0 0
        %2733 = vmatpush1.bf16.msra.mxu0 0
        %2734 = vmatprep.subr.bf16.mxu0 0
        %2735 = vmatpush1.bf16.msra.mxu0 0
        %2736 = vmatprep.mubr.bf16.mxu0 0
        %2737 = vmatmul.mubr.bf16.gmra.mrb[0].mxu0 %v2702
        %v2738 = vpop.f32.mrb[0].mxu0
        %v2739 = vadd.f32 %v1922, %v2738
        %v2740 = vpop.f32.mrb[0].mxu0
        %v2741 = vpop.f32.mrb[0].mxu0
        %v2742 = vpop.f32.mrb[0].mxu0
        %2743 = vdwg.mxu0
        %v2744 = vxor.u32 %v2739, 2147483648
        %v2745 = vmul.f32 %v2744, 1.442695
        %v2746 = vpow.pop %v2745
        %v2747 = vadd.f32 %v2746, 1.0
        %v2748 = vrcp.pop %v2747
        %v2749 = vmul.f32 1.0, %v2748
        %2751 = vrot.lane.b32.xlu0 %v2739, 32
        %v2752 = vpop.permute.xlu0 %2751
        %v2754 = vmul.f32 %v2749, %v2752
        %2756 = vrot.lane.b32.xlu0 %v2754, 64
        %v2757 = vpop.permute.xlu0 %2756
        %v2759 = vadd.f32 %v2739, %v2757
        %v2760 = vtanh.pop %v2759
        %v2761 = vsub.f32 1.0, %v2749
        %2763 = vrot.lane.b32.xlu0 %v2760, 96
        %v2764 = vpop.permute.xlu0 %2763
        %v2766 = vmul.f32 %v2761, %v2764
        %v2767 = vmul.f32 %v2749, %v2694
        %v2768 = vadd.f32 %v2766, %v2767
        %2770 = vrot.lane.b32.xlu0 %v2768, 96
        %v2771 = vpop.permute.xlu0 %2770
        %v2773 = vsel %vm1405, %v2771, %v2768
        %v2774 = vpack.c.bf16 %v2773, %v2773
        %v2776 = vsel %vm1681, %v2774, 0
        %2778 = vmatprep.subr.bf16.mxu0 0
        %2779 = vmatpush1.bf16.msra.mxu0 %v1939
        %2780 = vmatprep.subr.bf16.mxu0 0
        %2781 = vmatpush1.bf16.msra.mxu0 %v1940
        %2782 = vmatprep.subr.bf16.mxu0 0
        %2783 = vmatpush1.bf16.msra.mxu0 %v1941
        %2784 = vmatprep.subr.bf16.mxu0 0
        %2785 = vmatpush1.bf16.msra.mxu0 %v1942
        %2786 = vmatprep.subr.bf16.mxu0 0
        %2787 = vmatpush1.bf16.msra.mxu0 0
        %2788 = vmatprep.subr.bf16.mxu0 0
        %2789 = vmatpush1.bf16.msra.mxu0 0
        %2790 = vmatprep.subr.bf16.mxu0 0
        %2791 = vmatpush1.bf16.msra.mxu0 0
        %2792 = vmatprep.subr.bf16.mxu0 0
        %2793 = vmatpush1.bf16.msra.mxu0 0
        %2794 = vmatprep.subr.bf16.mxu0 0
        %2795 = vmatpush1.bf16.msra.mxu0 0
        %2796 = vmatprep.subr.bf16.mxu0 0
        %2797 = vmatpush1.bf16.msra.mxu0 0
        %2798 = vmatprep.subr.bf16.mxu0 0
        %2799 = vmatpush1.bf16.msra.mxu0 0
        %2800 = vmatprep.subr.bf16.mxu0 0
        %2801 = vmatpush1.bf16.msra.mxu0 0
        %2802 = vmatprep.subr.bf16.mxu0 0
        %2803 = vmatpush1.bf16.msra.mxu0 0
        %2804 = vmatprep.subr.bf16.mxu0 0
        %2805 = vmatpush1.bf16.msra.mxu0 0
        %2806 = vmatprep.subr.bf16.mxu0 0
        %2807 = vmatpush1.bf16.msra.mxu0 0
        %2808 = vmatprep.subr.bf16.mxu0 0
        %2809 = vmatpush1.bf16.msra.mxu0 0
        %2810 = vmatprep.mubr.bf16.mxu0 0
        %2811 = vmatmul.mubr.bf16.gmra.mrb[0].mxu0 %v2776
        %v2812 = vpop.f32.mrb[0].mxu0
        %v2813 = vadd.f32 %v1922, %v2812
        %v2814 = vpop.f32.mrb[0].mxu0
        %v2815 = vpop.f32.mrb[0].mxu0
        %v2816 = vpop.f32.mrb[0].mxu0
        %2817 = vdwg.mxu0
        %v2818 = vxor.u32 %v2813, 2147483648
        %v2819 = vmul.f32 %v2818, 1.442695
        %v2820 = vpow.pop %v2819
        %v2821 = vadd.f32 %v2820, 1.0
        %v2822 = vrcp.pop %v2821
        %v2823 = vmul.f32 1.0, %v2822
        %2825 = vrot.lane.b32.xlu0 %v2813, 32
        %v2826 = vpop.permute.xlu0 %2825
        %v2828 = vmul.f32 %v2823, %v2826
        %2830 = vrot.lane.b32.xlu0 %v2828, 64
        %v2831 = vpop.permute.xlu0 %2830
        %v2833 = vadd.f32 %v2813, %v2831
        %v2834 = vtanh.pop %v2833
        %v2835 = vsub.f32 1.0, %v2823
        %2837 = vrot.lane.b32.xlu0 %v2834, 96
        %v2838 = vpop.permute.xlu0 %2837
        %v2840 = vmul.f32 %v2835, %v2838
        %v2841 = vmul.f32 %v2823, %v2768
        %v2842 = vadd.f32 %v2840, %v2841
        %2844 = vrot.lane.b32.xlu0 %v2842, 96
        %v2845 = vpop.permute.xlu0 %2844
        %v2847 = vsel %vm1405, %v2845, %v2842
        %v2848 = vpack.c.bf16 %v2847, %v2847
        %v2850 = vsel %vm1681, %v2848, 0
        %2852 = vmatprep.subr.bf16.mxu0 0
        %2853 = vmatpush1.bf16.msra.mxu0 %v1939
        %2854 = vmatprep.subr.bf16.mxu0 0
        %2855 = vmatpush1.bf16.msra.mxu0 %v1940
        %2856 = vmatprep.subr.bf16.mxu0 0
        %2857 = vmatpush1.bf16.msra.mxu0 %v1941
        %2858 = vmatprep.subr.bf16.mxu0 0
        %2859 = vmatpush1.bf16.msra.mxu0 %v1942
        %2860 = vmatprep.subr.bf16.mxu0 0
        %2861 = vmatpush1.bf16.msra.mxu0 0
        %2862 = vmatprep.subr.bf16.mxu0 0
        %2863 = vmatpush1.bf16.msra.mxu0 0
        %2864 = vmatprep.subr.bf16.mxu0 0
        %2865 = vmatpush1.bf16.msra.mxu0 0
        %2866 = vmatprep.subr.bf16.mxu0 0
        %2867 = vmatpush1.bf16.msra.mxu0 0
        %2868 = vmatprep.subr.bf16.mxu0 0
        %2869 = vmatpush1.bf16.msra.mxu0 0
        %2870 = vmatprep.subr.bf16.mxu0 0
        %2871 = vmatpush1.bf16.msra.mxu0 0
        %2872 = vmatprep.subr.bf16.mxu0 0
        %2873 = vmatpush1.bf16.msra.mxu0 0
        %2874 = vmatprep.subr.bf16.mxu0 0
        %2875 = vmatpush1.bf16.msra.mxu0 0
        %2876 = vmatprep.subr.bf16.mxu0 0
        %2877 = vmatpush1.bf16.msra.mxu0 0
        %2878 = vmatprep.subr.bf16.mxu0 0
        %2879 = vmatpush1.bf16.msra.mxu0 0
        %2880 = vmatprep.subr.bf16.mxu0 0
        %2881 = vmatpush1.bf16.msra.mxu0 0
        %2882 = vmatprep.subr.bf16.mxu0 0
        %2883 = vmatpush1.bf16.msra.mxu0 0
        %2884 = vmatprep.mubr.bf16.mxu0 0
        %2885 = vmatmul.mubr.bf16.gmra.mrb[0].mxu0 %v2850
        %v2886 = vpop.f32.mrb[0].mxu0
        %v2887 = vadd.f32 %v1922, %v2886
        %v2888 = vpop.f32.mrb[0].mxu0
        %v2889 = vpop.f32.mrb[0].mxu0
        %v2890 = vpop.f32.mrb[0].mxu0
        %2891 = vdwg.mxu0
        %v2892 = vxor.u32 %v2887, 2147483648
        %v2893 = vmul.f32 %v2892, 1.442695
        %v2894 = vpow.pop %v2893
        %v2895 = vadd.f32 %v2894, 1.0
        %v2896 = vrcp.pop %v2895
        %v2897 = vmul.f32 1.0, %v2896
        %2899 = vrot.lane.b32.xlu0 %v2887, 32
        %v2900 = vpop.permute.xlu0 %2899
        %v2902 = vmul.f32 %v2897, %v2900
        %2904 = vrot.lane.b32.xlu0 %v2902, 64
        %v2905 = vpop.permute.xlu0 %2904
        %v2907 = vadd.f32 %v2887, %v2905
        %v2908 = vtanh.pop %v2907
        %v2909 = vsub.f32 1.0, %v2897
        %2911 = vrot.lane.b32.xlu0 %v2908, 96
        %v2912 = vpop.permute.xlu0 %2911
        %v2914 = vmul.f32 %v2909, %v2912
        %v2915 = vmul.f32 %v2897, %v2842
        %v2916 = vadd.f32 %v2914, %v2915
        %2918 = vrot.lane.b32.xlu0 %v2916, 96
        %v2919 = vpop.permute.xlu0 %2918
        %v2921 = vsel %vm1405, %v2919, %v2916
        %v2922 = vpack.c.bf16 %v2921, %v2921
        %v2924 = vsel %vm1681, %v2922, 0
        %2926 = vmatprep.subr.bf16.mxu0 0
        %2927 = vmatpush1.bf16.msra.mxu0 %v1939
        %2928 = vmatprep.subr.bf16.mxu0 0
        %2929 = vmatpush1.bf16.msra.mxu0 %v1940
        %2930 = vmatprep.subr.bf16.mxu0 0
        %2931 = vmatpush1.bf16.msra.mxu0 %v1941
        %2932 = vmatprep.subr.bf16.mxu0 0
        %2933 = vmatpush1.bf16.msra.mxu0 %v1942
        %2934 = vmatprep.subr.bf16.mxu0 0
        %2935 = vmatpush1.bf16.msra.mxu0 0
        %2936 = vmatprep.subr.bf16.mxu0 0
        %2937 = vmatpush1.bf16.msra.mxu0 0
        %2938 = vmatprep.subr.bf16.mxu0 0
        %2939 = vmatpush1.bf16.msra.mxu0 0
        %2940 = vmatprep.subr.bf16.mxu0 0
        %2941 = vmatpush1.bf16.msra.mxu0 0
        %2942 = vmatprep.subr.bf16.mxu0 0
        %2943 = vmatpush1.bf16.msra.mxu0 0
        %2944 = vmatprep.subr.bf16.mxu0 0
        %2945 = vmatpush1.bf16.msra.mxu0 0
        %2946 = vmatprep.subr.bf16.mxu0 0
        %2947 = vmatpush1.bf16.msra.mxu0 0
        %2948 = vmatprep.subr.bf16.mxu0 0
        %2949 = vmatpush1.bf16.msra.mxu0 0
        %2950 = vmatprep.subr.bf16.mxu0 0
        %2951 = vmatpush1.bf16.msra.mxu0 0
        %2952 = vmatprep.subr.bf16.mxu0 0
        %2953 = vmatpush1.bf16.msra.mxu0 0
        %2954 = vmatprep.subr.bf16.mxu0 0
        %2955 = vmatpush1.bf16.msra.mxu0 0
        %2956 = vmatprep.subr.bf16.mxu0 0
        %2957 = vmatpush1.bf16.msra.mxu0 0
        %2958 = vmatprep.mubr.bf16.mxu0 0
        %2959 = vmatmul.mubr.bf16.gmra.mrb[0].mxu0 %v2924
        %v2960 = vpop.f32.mrb[0].mxu0
        %v2961 = vadd.f32 %v1922, %v2960
        %v2962 = vpop.f32.mrb[0].mxu0
        %v2963 = vpop.f32.mrb[0].mxu0
        %v2964 = vpop.f32.mrb[0].mxu0
        %2965 = vdwg.mxu0
        %v2966 = vxor.u32 %v2961, 2147483648
        %v2967 = vmul.f32 %v2966, 1.442695
        %v2968 = vpow.pop %v2967
        %v2969 = vadd.f32 %v2968, 1.0
        %v2970 = vrcp.pop %v2969
        %v2971 = vmul.f32 1.0, %v2970
        %2973 = vrot.lane.b32.xlu0 %v2961, 32
        %v2974 = vpop.permute.xlu0 %2973
        %v2976 = vmul.f32 %v2971, %v2974
        %2978 = vrot.lane.b32.xlu0 %v2976, 64
        %v2979 = vpop.permute.xlu0 %2978
        %v2981 = vadd.f32 %v2961, %v2979
        %v2982 = vtanh.pop %v2981
        %v2983 = vsub.f32 1.0, %v2971
        %2985 = vrot.lane.b32.xlu0 %v2982, 96
        %v2986 = vpop.permute.xlu0 %2985
        %v2988 = vmul.f32 %v2983, %v2986
        %v2989 = vmul.f32 %v2971, %v2916
        %v2990 = vadd.f32 %v2988, %v2989
        %2992 = vrot.lane.b32.xlu0 %v2990, 96
        %v2993 = vpop.permute.xlu0 %2992
        %v2995 = vsel %vm1405, %v2993, %v2990
        %v2996 = vpack.c.bf16 %v2995, %v2995
        %v2998 = vsel %vm1681, %v2996, 0
        %3000 = vmatprep.subr.bf16.mxu0 0
        %3001 = vmatpush1.bf16.msra.mxu0 %v1939
        %3002 = vmatprep.subr.bf16.mxu0 0
        %3003 = vmatpush1.bf16.msra.mxu0 %v1940
        %3004 = vmatprep.subr.bf16.mxu0 0
        %3005 = vmatpush1.bf16.msra.mxu0 %v1941
        %3006 = vmatprep.subr.bf16.mxu0 0
        %3007 = vmatpush1.bf16.msra.mxu0 %v1942
        %3008 = vmatprep.subr.bf16.mxu0 0
        %3009 = vmatpush1.bf16.msra.mxu0 0
        %3010 = vmatprep.subr.bf16.mxu0 0
        %3011 = vmatpush1.bf16.msra.mxu0 0
        %3012 = vmatprep.subr.bf16.mxu0 0
        %3013 = vmatpush1.bf16.msra.mxu0 0
        %3014 = vmatprep.subr.bf16.mxu0 0
        %3015 = vmatpush1.bf16.msra.mxu0 0
        %3016 = vmatprep.subr.bf16.mxu0 0
        %3017 = vmatpush1.bf16.msra.mxu0 0
        %3018 = vmatprep.subr.bf16.mxu0 0
        %3019 = vmatpush1.bf16.msra.mxu0 0
        %3020 = vmatprep.subr.bf16.mxu0 0
        %3021 = vmatpush1.bf16.msra.mxu0 0
        %3022 = vmatprep.subr.bf16.mxu0 0
        %3023 = vmatpush1.bf16.msra.mxu0 0
        %3024 = vmatprep.subr.bf16.mxu0 0
        %3025 = vmatpush1.bf16.msra.mxu0 0
        %3026 = vmatprep.subr.bf16.mxu0 0
        %3027 = vmatpush1.bf16.msra.mxu0 0
        %3028 = vmatprep.subr.bf16.mxu0 0
        %3029 = vmatpush1.bf16.msra.mxu0 0
        %3030 = vmatprep.subr.bf16.mxu0 0
        %3031 = vmatpush1.bf16.msra.mxu0 0
        %3032 = vmatprep.mubr.bf16.mxu0 0
        %3033 = vmatmul.mubr.bf16.gmra.mrb[0].mxu0 %v2998
        %v3034 = vpop.f32.mrb[0].mxu0
        %v3035 = vadd.f32 %v1922, %v3034
        %v3036 = vpop.f32.mrb[0].mxu0
        %v3037 = vpop.f32.mrb[0].mxu0
        %v3038 = vpop.f32.mrb[0].mxu0
        %3039 = vdwg.mxu0
        %v3040 = vxor.u32 %v3035, 2147483648
        %v3041 = vmul.f32 %v3040, 1.442695
        %v3042 = vpow.pop %v3041
        %v3043 = vadd.f32 %v3042, 1.0
        %v3044 = vrcp.pop %v3043
        %v3045 = vmul.f32 1.0, %v3044
        %3047 = vrot.lane.b32.xlu0 %v3035, 32
        %v3048 = vpop.permute.xlu0 %3047
        %v3050 = vmul.f32 %v3045, %v3048
        %3052 = vrot.lane.b32.xlu0 %v3050, 64
        %v3053 = vpop.permute.xlu0 %3052
        %v3055 = vadd.f32 %v3035, %v3053
        %v3056 = vtanh.pop %v3055
        %v3057 = vsub.f32 1.0, %v3045
        %3059 = vrot.lane.b32.xlu0 %v3056, 96
        %v3060 = vpop.permute.xlu0 %3059
        %v3062 = vmul.f32 %v3057, %v3060
        %v3063 = vmul.f32 %v3045, %v2990
        %v3064 = vadd.f32 %v3062, %v3063
        %3066 = vrot.lane.b32.xlu0 %v3064, 96
        %v3067 = vpop.permute.xlu0 %3066
        %v3069 = vsel %vm1405, %v3067, %v3064
        %v3070 = vpack.c.bf16 %v3069, %v3069
        %v3072 = vsel %vm1681, %v3070, 0
        %3074 = vmatprep.subr.bf16.mxu0 0
        %3075 = vmatpush1.bf16.msra.mxu0 %v1939
        %3076 = vmatprep.subr.bf16.mxu0 0
        %3077 = vmatpush1.bf16.msra.mxu0 %v1940
        %3078 = vmatprep.subr.bf16.mxu0 0
        %3079 = vmatpush1.bf16.msra.mxu0 %v1941
        %3080 = vmatprep.subr.bf16.mxu0 0
        %3081 = vmatpush1.bf16.msra.mxu0 %v1942
        %3082 = vmatprep.subr.bf16.mxu0 0
        %3083 = vmatpush1.bf16.msra.mxu0 0
        %3084 = vmatprep.subr.bf16.mxu0 0
        %3085 = vmatpush1.bf16.msra.mxu0 0
        %3086 = vmatprep.subr.bf16.mxu0 0
        %3087 = vmatpush1.bf16.msra.mxu0 0
        %3088 = vmatprep.subr.bf16.mxu0 0
        %3089 = vmatpush1.bf16.msra.mxu0 0
        %3090 = vmatprep.subr.bf16.mxu0 0
        %3091 = vmatpush1.bf16.msra.mxu0 0
        %3092 = vmatprep.subr.bf16.mxu0 0
        %3093 = vmatpush1.bf16.msra.mxu0 0
        %3094 = vmatprep.subr.bf16.mxu0 0
        %3095 = vmatpush1.bf16.msra.mxu0 0
        %3096 = vmatprep.subr.bf16.mxu0 0
        %3097 = vmatpush1.bf16.msra.mxu0 0
        %3098 = vmatprep.subr.bf16.mxu0 0
        %3099 = vmatpush1.bf16.msra.mxu0 0
        %3100 = vmatprep.subr.bf16.mxu0 0
        %3101 = vmatpush1.bf16.msra.mxu0 0
        %3102 = vmatprep.subr.bf16.mxu0 0
        %3103 = vmatpush1.bf16.msra.mxu0 0
        %3104 = vmatprep.subr.bf16.mxu0 0
        %3105 = vmatpush1.bf16.msra.mxu0 0
        %3106 = vmatprep.mubr.bf16.mxu0 0
        %3107 = vmatmul.mubr.bf16.gmra.mrb[0].mxu0 %v3072
        %v3108 = vpop.f32.mrb[0].mxu0
        %v3109 = vadd.f32 %v1922, %v3108
        %v3110 = vpop.f32.mrb[0].mxu0
        %v3111 = vpop.f32.mrb[0].mxu0
        %v3112 = vpop.f32.mrb[0].mxu0
        %3113 = vdwg.mxu0
        %v3114 = vxor.u32 %v3109, 2147483648
        %v3115 = vmul.f32 %v3114, 1.442695
        %v3116 = vpow.pop %v3115
        %v3117 = vadd.f32 %v3116, 1.0
        %v3118 = vrcp.pop %v3117
        %v3119 = vmul.f32 1.0, %v3118
        %3121 = vrot.lane.b32.xlu0 %v3109, 32
        %v3122 = vpop.permute.xlu0 %3121
        %v3124 = vmul.f32 %v3119, %v3122
        %3126 = vrot.lane.b32.xlu0 %v3124, 64
        %v3127 = vpop.permute.xlu0 %3126
        %v3129 = vadd.f32 %v3109, %v3127
        %v3130 = vtanh.pop %v3129
        %v3131 = vsub.f32 1.0, %v3119
        %3133 = vrot.lane.b32.xlu0 %v3130, 96
        %v3134 = vpop.permute.xlu0 %3133
        %v3136 = vmul.f32 %v3131, %v3134
        %v3137 = vmul.f32 %v3119, %v3064
        %v3138 = vadd.f32 %v3136, %v3137
        %v3139 = vrot.slane %v2694, 7
        %v3141 = vrot.slane %v2768, 6
        %v3143 = vrot.slane %v2842, 5
        %v3145 = vrot.slane %v2916, 4
        %v3147 = vrot.slane %v2990, 3
        %v3149 = vrot.slane %v3064, 2
        %v3152 = vrot.slane %v3138, 1
        %vm3154 = vcmask 1040384
        %v3155 = vsel %vm3154, %v2620, %v3139
        %vm3156 = vcmask 1041408
        %v3157 = vsel %vm3156, %v3155, %v3141
        %vm3158 = vcmask 1042432
        %v3159 = vsel %vm3158, %v3157, %v3143
        %vm3160 = vcmask 1043456
        %v3161 = vsel %vm3160, %v3159, %v3145
        %vm3162 = vcmask 1044480
        %v3163 = vsel %vm3162, %v3161, %v3147
        %vm3164 = vcmask 1045504
        %v3165 = vsel %vm3164, %v3163, %v3149
        %vm3166 = vcmask 1046528
        %v3167 = vsel %vm3166, %v3165, %v3152
        %3169 = vrot.lane.b32.xlu0 %v3167, 96
        %v3170 = vpop.permute.xlu0 %3169
        %3172 = vst.msk [vmem:[%s595] sm:$0xff] %vm1405, %v3170
        %3173 = vrot.lane.b32.xlu0 %v3138, 96
        %v3174 = vpop.permute.xlu0 %3173
        %vm3176 = vcmask 253952
        %3177 = vst.msk [vmem:[%s574] sm:$0x1] %vm3176, %v3174
        %s3178 = sand.u32 %s300, 1
        %s3179 = scalar_lea.sflag [#allocation3], %s3178
        %s3180 = sand.u32 %s300, 1
        %s3181 = smul.addr %s3180, 512
        %s3182 = scalar_lea.vmem [#allocation2], %s3181
        %p3183 = scmp.lt.s32.totalorder %s35, 1
        %s3184 = scalar_select %p3183, %s35, 1
        %s3185 = smul.addr %s3184, 8
        %s3186 = scalar_lea.vmem %s13, %s3185
        %p3187 = scmp.lt.s32.totalorder %s35, 1
        %s3188 = scalar_select %p3187, %s35, 1
        %s3189 = scalar_lea.vmem %s14, %s3188
        %p3190 = scmp.lt.s32.totalorder %s35, 1
        %s3191 = scalar_select %p3190, %s35, 1
        %s3192 = scalar_lea.vmem %s15, %s3191
        %p3193 = scmp.lt.s32.totalorder %s35, 1
        %s3194 = scalar_select %p3193, %s35, 1
        %s3195 = smul.addr %s3194, 8
        %s3196 = scalar_lea.vmem %s16, %s3195
        %s3197 = sand.u32 %s430, 1
        %s3198 = scalar_lea.sflag [#allocation5], %s3197
        %s3199 = sand.u32 %s430, 1
        %s3200 = scalar_lea.vmem [#allocation4], %s3199
        // Predicated region
        $region69: #{_lambda_.1} parent=67 // pred_check
          %p3201 = pneg %p310
        $region70: #{_lambda_.1} parent=67 // pred_check_branch
          %3203 = sbr.rel (%p3201) target = $region72
        $region71: #{_lambda_.1} parent=67 // pred_region
          %s3204 = smul.u32 64, %s35
          %s3206 = ssub.s32 8192, 8192
          %3207 = vsyncadd %s3179, %s3206
          %s3208 = smul.addr %s3204, 128
          %s3209 = scalar_lea.hbm %s12, %s3208
          %s3210 = sshll.u32 %s3182, 4
          %s3211 = int_to_ptr.vmem [resolvable:$true] %s3210
          %3216 = dma.vmem_to_hbm [thread:$0]  %s3211, 8192, %s3209, %s3179, 128, 128, 8
        $region72: #{_lambda_.1} parent=67 // pred_fallthru
          _
        // Predicated region
        $region73: #{_lambda_.1} parent=67 // pred_check
          %p3217 = pneg %p336
        $region74: #{_lambda_.1} parent=67 // pred_check_branch
          %3219 = sbr.rel (%p3217) target = $region76
        $region75: #{_lambda_.1} parent=67 // pred_region
          _
        $region76: #{_lambda_.1} parent=67 // pred_fallthru
          _
        // Predicated region
        $region77: #{_lambda_.1} parent=67 // pred_check
          %p3220 = pneg %p362
        $region78: #{_lambda_.1} parent=67 // pred_check_branch
          %3222 = sbr.rel (%p3220) target = $region80
        $region79: #{_lambda_.1} parent=67 // pred_region
          _
        $region80: #{_lambda_.1} parent=67 // pred_fallthru
          _
        // Predicated region
        $region81: #{_lambda_.1} parent=67 // pred_check
          %p3223 = pneg %p388
        $region82: #{_lambda_.1} parent=67 // pred_check_branch
          %3225 = sbr.rel (%p3223) target = $region84
        $region83: #{_lambda_.1} parent=67 // pred_region
          _
        $region84: #{_lambda_.1} parent=67 // pred_fallthru
          _
        // Predicated region
        $region85: #{_lambda_.1} parent=67 // pred_check
          %p3226 = pneg %p414
        $region86: #{_lambda_.1} parent=67 // pred_check_branch
          %3228 = sbr.rel (%p3226) target = $region88
        $region87: #{_lambda_.1} parent=67 // pred_region
          _
        $region88: #{_lambda_.1} parent=67 // pred_fallthru
          _
        // Predicated region
        $region89: #{_lambda_.1} parent=67 // pred_check
          %p3229 = pneg %p440
        $region90: #{_lambda_.1} parent=67 // pred_check_branch
          %3231 = sbr.rel (%p3229) target = $region92
        $region91: #{_lambda_.1} parent=67 // pred_region
          %s3233 = ssub.s32 16, 16
          %3234 = vsyncadd %s3198, %s3233
          %s3235 = smul.addr %s35, 16
          %s3236 = scalar_lea.hbm %s17, %s3235
          %s3238 = sshll.u32 %s3200, 4
          %s3239 = int_to_ptr.vmem [resolvable:$true] %s3238
          %3241 = dma.vmem_to_hbm [thread:$0]  %s3239, 16, %s3236, %s3198
        $region92: #{_lambda_.1} parent=67 // pred_fallthru
          _
      $region68: #{_lambda_.1} parent=5 // pred_fallthru
        _
      %p3242 = scmp.le.s32.totalorder 2, %s30
      // Predicated region
      $region93: #{_lambda_.1} parent=5 // pred_check
        %p3243 = pneg %p3242
      $region94: #{_lambda_.1} parent=5 // pred_check_branch
        %3245 = sbr.rel (%p3243) target = $region96
      $region95: #{_lambda_.1} parent=5 // pred_region
        %s3246 = ssub.s32 %s30, 2
        // Predicated region
        $region97: #{_lambda_.1} parent=95 // pred_check
          %p3247 = pneg %p316
        $region98: #{_lambda_.1} parent=95 // pred_check_branch
          %3249 = sbr.rel (%p3247) target = $region100
        $region99: #{_lambda_.1} parent=95 // pred_region
          %s3250 = sand.u32 %s301, 1
          %s3251 = scalar_lea.sflag [#allocation3], %s3250
          %s3252 = sand.u32 %s301, 1
          %s3253 = smul.addr %s3252, 512
          %s3254 = scalar_lea.vmem [#allocation2], %s3253
          %3255 = dma.done %s3251, 8192
        $region100: #{_lambda_.1} parent=95 // pred_fallthru
          _
        // Predicated region
        $region101: #{_lambda_.1} parent=95 // pred_check
          %p3256 = pneg %p342
        $region102: #{_lambda_.1} parent=95 // pred_check_branch
          %3258 = sbr.rel (%p3256) target = $region104
        $region103: #{_lambda_.1} parent=95 // pred_region
          %p3259 = scmp.lt.s32.totalorder %s36, 1
          %s3260 = scalar_select %p3259, %s36, 1
          %s3261 = smul.addr %s3260, 8
          %s3262 = scalar_lea.vmem %s13, %s3261
        $region104: #{_lambda_.1} parent=95 // pred_fallthru
          _
        // Predicated region
        $region105: #{_lambda_.1} parent=95 // pred_check
          %p3263 = pneg %p368
        $region106: #{_lambda_.1} parent=95 // pred_check_branch
          %3265 = sbr.rel (%p3263) target = $region108
        $region107: #{_lambda_.1} parent=95 // pred_region
          %p3266 = scmp.lt.s32.totalorder %s36, 1
          %s3267 = scalar_select %p3266, %s36, 1
          %s3268 = scalar_lea.vmem %s14, %s3267
        $region108: #{_lambda_.1} parent=95 // pred_fallthru
          _
        // Predicated region
        $region109: #{_lambda_.1} parent=95 // pred_check
          %p3269 = pneg %p394
        $region110: #{_lambda_.1} parent=95 // pred_check_branch
          %3271 = sbr.rel (%p3269) target = $region112
        $region111: #{_lambda_.1} parent=95 // pred_region
          %p3272 = scmp.lt.s32.totalorder %s36, 1
          %s3273 = scalar_select %p3272, %s36, 1
          %s3274 = scalar_lea.vmem %s15, %s3273
        $region112: #{_lambda_.1} parent=95 // pred_fallthru
          _
        // Predicated region
        $region113: #{_lambda_.1} parent=95 // pred_check
          %p3275 = pneg %p420
        $region114: #{_lambda_.1} parent=95 // pred_check_branch
          %3277 = sbr.rel (%p3275) target = $region116
        $region115: #{_lambda_.1} parent=95 // pred_region
          %p3278 = scmp.lt.s32.totalorder %s36, 1
          %s3279 = scalar_select %p3278, %s36, 1
          %s3280 = smul.addr %s3279, 8
          %s3281 = scalar_lea.vmem %s16, %s3280
        $region116: #{_lambda_.1} parent=95 // pred_fallthru
          _
        // Predicated region
        $region117: #{_lambda_.1} parent=95 // pred_check
          %p3282 = pneg %p446
        $region118: #{_lambda_.1} parent=95 // pred_check_branch
          %3284 = sbr.rel (%p3282) target = $region120
        $region119: #{_lambda_.1} parent=95 // pred_region
          %s3285 = sand.u32 %s431, 1
          %s3286 = scalar_lea.sflag [#allocation5], %s3285
          %s3287 = sand.u32 %s431, 1
          %s3288 = scalar_lea.vmem [#allocation4], %s3287
          %3289 = dma.done %s3286, 16
        $region120: #{_lambda_.1} parent=95 // pred_fallthru
          _
      $region96: #{_lambda_.1} parent=5 // pred_fallthru
        _
    $region6: #{_lambda_.1} parent=1 // loop_footer
      %s34 = sadd.s32 1, %s30
    $region7: #{_lambda_.1} parent=1 // loop_footer_branch
      %29 = sbr.rel target = $region3
    $region8: #{_lambda_.1} parent=1 // loop_exit
      _
    %3290 = vsyncpa [#allocation3], 1
    %s3291 = scalar_lea.sflag [#allocation3], 1
    %3292 = vsyncpa %s3291, 1
    %3293 = vsyncpa [#allocation5], 1
    %s3294 = scalar_lea.sflag [#allocation5], 1
    %3295 = vsyncpa %s3294, 1

</llo_original>
